<compile_context>
chip_gen: v5e
topology: v5e:2x2
jax: 0.10.0
libtpu: 0.0.40
codegen_flags: <defaults>
</compile_context>

<pallas_src>
import functools

import numpy as np
import jax
import jax.numpy as jnp
from jax import lax
from jax.experimental import pallas as pl
from jax.experimental.pallas import tpu as pltpu


# ----------------------------------------------------------------------------
# Structural (data-independent) gather / scatter matrices, built with numpy at
# trace time.  Each column has at most one 1; right-multiplying a [C, M_in]
# activation by it performs the spatial part of the conv / deconv (including
# zero padding) as a single MXU matmul.
# ----------------------------------------------------------------------------
@functools.lru_cache(maxsize=None)
def _conv_gather(B, Hi, Wi, k, stride, pad):
    Ho = (Hi + 2 * pad - k) // stride + 1
    Wo = (Wi + 2 * pad - k) // stride + 1
    g = np.zeros((k * k, B * Hi * Wi, B * Ho * Wo), dtype=np.float32)
    for kh in range(k):
        for kw in range(k):
            t = kh * k + kw
            for b in range(B):
                for ho in range(Ho):
                    h = stride * ho + kh - pad
                    if h < 0 or h >= Hi:
                        continue
                    for wo in range(Wo):
                        w = stride * wo + kw - pad
                        if w < 0 or w >= Wi:
                            continue
                        g[t, (b * Hi + h) * Wi + w, (b * Ho + ho) * Wo + wo] = 1.0
    return g, Ho, Wo


@functools.lru_cache(maxsize=None)
def _deconv_scatter(B, Hi, Wi, k, stride):
    Ho, Wo = Hi * stride, Wi * stride            # kernel == stride, no padding
    d = np.zeros((k * k, B * Hi * Wi, B * Ho * Wo), dtype=np.float32)
    for dh in range(k):
        for dw in range(k):
            t = dh * k + dw
            for b in range(B):
                for h in range(Hi):
                    for w in range(Wi):
                        d[t, (b * Hi + h) * Wi + w,
                          (b * Ho + stride * h + dh) * Wo + (stride * w + dw)] = 1.0
    return d, Ho, Wo


# ----------------------------------------------------------------------------
# Fused whole-network kernel (single invocation, everything resident in VMEM).
# ----------------------------------------------------------------------------
def _simple_fused_kernel(images_ref, segs_ref,
                         w1_ref, b1_ref, g1_ref,
                         w2_ref, b2_ref, g2_ref,
                         w3_ref, b3_ref, d1_ref,
                         w4_ref, b4_ref, d2_ref,
                         out_ref, x_scratch):
    B = images_ref.shape[0]
    HW = images_ref.shape[2]

    # concat(images, segs) on the channel axis, channels-on-rows layout:
    # x[ci, b*HW + h*W + w]
    for b in range(B):
        x_scratch[0:3, b * HW:(b + 1) * HW] = images_ref[b]
        x_scratch[3:4, b * HW:(b + 1) * HW] = segs_ref[b]
    x = x_scratch[...]                                        # [4, B*H*W]

    def conv(a, w_ref, b_ref, g_ref):
        # a: [Cin, Mi]; w_ref: [9, Cout, Cin]; g_ref: [9, Mi, Mo]; b_ref: [Cout, 1]
        acc = None
        for t in range(g_ref.shape[0]):
            gathered = jnp.dot(a, g_ref[t], preferred_element_type=jnp.float32)
            term = jnp.dot(w_ref[t], gathered, preferred_element_type=jnp.float32)
            acc = term if acc is None else acc + term
        return jnp.maximum(acc + b_ref[...], 0.0)

    def deconv(a, w_ref, b_ref, d_ref):
        # a: [Cin, Mi]; w_ref: [4, Cout, Cin]; d_ref: [4, Mi, Mo]; b_ref: [Cout, 1]
        acc = None
        for t in range(d_ref.shape[0]):
            mixed = jnp.dot(w_ref[t], a, preferred_element_type=jnp.float32)
            term = jnp.dot(mixed, d_ref[t], preferred_element_type=jnp.float32)
            acc = term if acc is None else acc + term
        return jnp.maximum(acc + b_ref[...], 0.0)

    h = conv(x, w1_ref, b1_ref, g1_ref)        # [4,  B*(H/2)*(W/2)]
    h = conv(h, w2_ref, b2_ref, g2_ref)        # [8,  B*(H/4)*(W/4)]
    h = deconv(h, w3_ref, b3_ref, d1_ref)      # [4,  B*(H/2)*(W/2)]
    h = deconv(h, w4_ref, b4_ref, d2_ref)      # [75, B*H*W]

    HWo = out_ref.shape[2]
    for b in range(B):
        out_ref[b] = h[:, b * HWo:(b + 1) * HWo]


# ----------------------------------------------------------------------------
# Wrapper: only free reshapes and tiny weight re-orderings outside the kernel.
# ----------------------------------------------------------------------------
@jax.jit
def simple_forward(params, images, segs):
    B, C_img, H, W = images.shape
    assert C_img == 3 and segs.shape == (B, 1, H, W)

    g1, ho1, wo1 = _conv_gather(B, H, W, 3, 2, 1)
    g2, ho2, wo2 = _conv_gather(B, ho1, wo1, 3, 2, 1)
    d1, ho3, wo3 = _deconv_scatter(B, ho2, wo2, 2, 2)
    d2, ho4, wo4 = _deconv_scatter(B, ho3, wo3, 2, 2)

    w1, w2 = params["enc1_w"], params["enc2_w"]      # [Cout, Cin, 3, 3]
    w3, w4 = params["dec1_w"], params["dec2_w"]      # [Cin, Cout, 2, 2]
    c1, c2 = w1.shape[0], w2.shape[0]
    c3, c4 = w3.shape[1], w4.shape[1]

    # Per-tap [Cout, Cin] slices; tap index = kh*k + kw (matches the builders).
    w1m = w1.transpose(2, 3, 0, 1).reshape(9, c1, w1.shape[1])
    w2m = w2.transpose(2, 3, 0, 1).reshape(9, c2, w2.shape[1])
    w3m = w3.transpose(2, 3, 1, 0).reshape(4, c3, w3.shape[0])
    w4m = w4.transpose(2, 3, 1, 0).reshape(4, c4, w4.shape[0])

    out = pl.pallas_call(
        _simple_fused_kernel,
        out_shape=jax.ShapeDtypeStruct((B, c4, ho4 * wo4), jnp.float32),
        scratch_shapes=[pltpu.VMEM((4, B * H * W), jnp.float32)],
    )(
        images.reshape(B, 3, H * W),
        segs.reshape(B, 1, H * W),
        w1m, params["enc1_b"].reshape(c1, 1), jnp.asarray(g1),
        w2m, params["enc2_b"].reshape(c2, 1), jnp.asarray(g2),
        w3m, params["dec1_b"].reshape(c3, 1), jnp.asarray(d1),
        w4m, params["dec2_b"].reshape(c4, 1), jnp.asarray(d2),
    )
    return out.reshape(B, c4, ho4, wo4)


# ----------------------------------------------------------------------------
# Pure-JAX reference (correctness check only)
# ----------------------------------------------------------------------------
def _ref_forward(params, images, segs):
    x = jnp.concatenate([images, segs], axis=1)

    def conv(x, w, b):
        y = lax.conv_general_dilated(
            x, w, window_strides=(2, 2), padding=((1, 1), (1, 1)),
            dimension_numbers=("NCHW", "OIHW", "NCHW"))
        return jnp.maximum(y + b.reshape(1, -1, 1, 1), 0.0)

    def deconv(x, w, b):
        B, Cin, H, W = x.shape
        Cout = w.shape[1]
        y = jnp.einsum("bchw,cokl->bohkwl", x, w).reshape(B, Cout, 2 * H, 2 * W)
        return jnp.maximum(y + b.reshape(1, -1, 1, 1), 0.0)

    x = conv(x, params["enc1_w"], params["enc1_b"])
    x = conv(x, params["enc2_w"], params["enc2_b"])
    x = deconv(x, params["dec1_w"], params["dec1_b"])
    x = deconv(x, params["dec2_w"], params["dec2_b"])
    return x


def init_params(key):
    ks = jax.random.split(key, 8)
    mk = lambda k, shape, scale: (scale * jax.random.normal(k, shape)).astype(jnp.float32)
    return {
        "enc1_w": mk(ks[0], (4, 4, 3, 3), 0.1),   "enc1_b": mk(ks[1], (4,), 0.1),
        "enc2_w": mk(ks[2], (8, 4, 3, 3), 0.1),   "enc2_b": mk(ks[3], (8,), 0.1),
        "dec1_w": mk(ks[4], (8, 4, 2, 2), 0.1),   "dec1_b": mk(ks[5], (4,), 0.1),
        "dec2_w": mk(ks[6], (4, 75, 2, 2), 0.1),  "dec2_b": mk(ks[7], (75,), 0.1),
    }


if __name__ == "__main__":
    key = jax.random.PRNGKey(0)
    kp, ki, ks = jax.random.split(key, 3)
    params = init_params(kp)

    B, H, W = 2, 16, 16
    images = jax.random.normal(ki, (B, 3, H, W), dtype=jnp.float32)
    segs = jax.random.normal(ks, (B, 1, H, W), dtype=jnp.float32)

    out = simple_forward(params, images, segs)
    out = jax.block_until_ready(out)
    assert out.shape == (B, 75, H, W), out.shape

    ref = _ref_forward(params, images, segs)
    assert jnp.allclose(out, ref, atol=1e-4, rtol=1e-4), float(
        jnp.max(jnp.abs(out - ref)))

    print("KERNEL_OK")
</pallas_src>

<mosaic_0001>
module attributes {stable_mosaic.version = 11 : i64} {
  func.func @_simple_fused_kernel(%arg0: memref<2x3x256xf32, #tpu.memory_space<vmem>>, %arg1: memref<2x1x256xf32, #tpu.memory_space<vmem>>, %arg2: memref<9x4x4xf32, #tpu.memory_space<vmem>>, %arg3: memref<4x1xf32, #tpu.memory_space<vmem>>, %arg4: memref<9x512x128xf32, #tpu.memory_space<vmem>>, %arg5: memref<9x8x4xf32, #tpu.memory_space<vmem>>, %arg6: memref<8x1xf32, #tpu.memory_space<vmem>>, %arg7: memref<9x128x32xf32, #tpu.memory_space<vmem>>, %arg8: memref<4x4x8xf32, #tpu.memory_space<vmem>>, %arg9: memref<4x1xf32, #tpu.memory_space<vmem>>, %arg10: memref<4x32x128xf32, #tpu.memory_space<vmem>>, %arg11: memref<4x75x4xf32, #tpu.memory_space<vmem>>, %arg12: memref<75x1xf32, #tpu.memory_space<vmem>>, %arg13: memref<4x128x512xf32, #tpu.memory_space<vmem>>, %arg14: memref<2x75x256xf32, #tpu.memory_space<vmem>>, %arg15: memref<4x512xf32, #tpu.memory_space<vmem>>) attributes {dimension_semantics = [], scalar_prefetch = 0 : i64, scratch_operands = 1 : i64, tpu.core_type = #tpu.core_type<tc>} {
    %c0 = arith.constant 0 : index
    %c0_0 = arith.constant 0 : index
    %c0_1 = arith.constant 0 : index
    %0 = vector.load %arg0[%c0, %c0_0, %c0_1] : memref<2x3x256xf32, #tpu.memory_space<vmem>>, vector<1x3x256xf32>
    %1 = vector.shape_cast %0 : vector<1x3x256xf32> to vector<3x256xf32>
    %c0_2 = arith.constant 0 : index
    %c0_3 = arith.constant 0 : index
    %2 = vector.load %arg15[%c0_2, %c0_3] : memref<4x512xf32, #tpu.memory_space<vmem>>, vector<3x256xf32>
    tpu.vector_store %arg15[%c0_2, %c0_3], %1 {strides = array<i32>} : memref<4x512xf32, #tpu.memory_space<vmem>>, vector<3x256xf32>,
    %c0_4 = arith.constant 0 : index
    %c0_5 = arith.constant 0 : index
    %c0_6 = arith.constant 0 : index
    %3 = vector.load %arg1[%c0_4, %c0_5, %c0_6] : memref<2x1x256xf32, #tpu.memory_space<vmem>>, vector<1x1x256xf32>
    %4 = vector.shape_cast %3 : vector<1x1x256xf32> to vector<1x256xf32>
    %c3 = arith.constant 3 : index
    %c0_7 = arith.constant 0 : index
    %5 = vector.load %arg15[%c3, %c0_7] : memref<4x512xf32, #tpu.memory_space<vmem>>, vector<1x256xf32>
    tpu.vector_store %arg15[%c3, %c0_7], %4 {strides = array<i32>} : memref<4x512xf32, #tpu.memory_space<vmem>>, vector<1x256xf32>,
    %c1 = arith.constant 1 : index
    %c0_8 = arith.constant 0 : index
    %c0_9 = arith.constant 0 : index
    %6 = vector.load %arg0[%c1, %c0_8, %c0_9] : memref<2x3x256xf32, #tpu.memory_space<vmem>>, vector<1x3x256xf32>
    %7 = vector.shape_cast %6 : vector<1x3x256xf32> to vector<3x256xf32>
    %c0_10 = arith.constant 0 : index
    %c256 = arith.constant 256 : index
    %8 = vector.load %arg15[%c0_10, %c256] : memref<4x512xf32, #tpu.memory_space<vmem>>, vector<3x256xf32>
    tpu.vector_store %arg15[%c0_10, %c256], %7 {strides = array<i32>} : memref<4x512xf32, #tpu.memory_space<vmem>>, vector<3x256xf32>,
    %c1_11 = arith.constant 1 : index
    %c0_12 = arith.constant 0 : index
    %c0_13 = arith.constant 0 : index
    %9 = vector.load %arg1[%c1_11, %c0_12, %c0_13] : memref<2x1x256xf32, #tpu.memory_space<vmem>>, vector<1x1x256xf32>
    %10 = vector.shape_cast %9 : vector<1x1x256xf32> to vector<1x256xf32>
    %c3_14 = arith.constant 3 : index
    %c256_15 = arith.constant 256 : index
    %11 = vector.load %arg15[%c3_14, %c256_15] : memref<4x512xf32, #tpu.memory_space<vmem>>, vector<1x256xf32>
    tpu.vector_store %arg15[%c3_14, %c256_15], %10 {strides = array<i32>} : memref<4x512xf32, #tpu.memory_space<vmem>>, vector<1x256xf32>,
    %c0_16 = arith.constant 0 : index
    %c0_17 = arith.constant 0 : index
    %12 = vector.load %arg15[%c0_16, %c0_17] : memref<4x512xf32, #tpu.memory_space<vmem>>, vector<4x512xf32>
    %c0_18 = arith.constant 0 : index
    %c0_19 = arith.constant 0 : index
    %c0_20 = arith.constant 0 : index
    %13 = vector.load %arg4[%c0_18, %c0_19, %c0_20] : memref<9x512x128xf32, #tpu.memory_space<vmem>>, vector<1x512x128xf32>
    %14 = vector.shape_cast %13 : vector<1x512x128xf32> to vector<512x128xf32>
    %cst = arith.constant dense<0.000000e+00> : vector<4x128xf32>
    %15 = tpu.matmul %12, %14, %cst {dimension_numbers = #tpu.dot_dimension_numbers<[1], [0], [0], [1], [0, 0, 1, 1], [], []>} : vector<4x512xf32>, vector<512x128xf32>, vector<4x128xf32> -> vector<4x128xf32>
    %c0_21 = arith.constant 0 : index
    %c0_22 = arith.constant 0 : index
    %c0_23 = arith.constant 0 : index
    %16 = vector.load %arg2[%c0_21, %c0_22, %c0_23] : memref<9x4x4xf32, #tpu.memory_space<vmem>>, vector<1x4x4xf32>
    %17 = vector.shape_cast %16 : vector<1x4x4xf32> to vector<4x4xf32>
    %cst_24 = arith.constant dense<0.000000e+00> : vector<4x128xf32>
    %18 = tpu.matmul %17, %15, %cst_24 {dimension_numbers = #tpu.dot_dimension_numbers<[1], [0], [0], [1], [0, 0, 1, 1], [], []>} : vector<4x4xf32>, vector<4x128xf32>, vector<4x128xf32> -> vector<4x128xf32>
    %c1_25 = arith.constant 1 : index
    %c0_26 = arith.constant 0 : index
    %c0_27 = arith.constant 0 : index
    %19 = vector.load %arg4[%c1_25, %c0_26, %c0_27] : memref<9x512x128xf32, #tpu.memory_space<vmem>>, vector<1x512x128xf32>
    %20 = vector.shape_cast %19 : vector<1x512x128xf32> to vector<512x128xf32>
    %cst_28 = arith.constant dense<0.000000e+00> : vector<4x128xf32>
    %21 = tpu.matmul %12, %20, %cst_28 {dimension_numbers = #tpu.dot_dimension_numbers<[1], [0], [0], [1], [0, 0, 1, 1], [], []>} : vector<4x512xf32>, vector<512x128xf32>, vector<4x128xf32> -> vector<4x128xf32>
    %c1_29 = arith.constant 1 : index
    %c0_30 = arith.constant 0 : index
    %c0_31 = arith.constant 0 : index
    %22 = vector.load %arg2[%c1_29, %c0_30, %c0_31] : memref<9x4x4xf32, #tpu.memory_space<vmem>>, vector<1x4x4xf32>
    %23 = vector.shape_cast %22 : vector<1x4x4xf32> to vector<4x4xf32>
    %cst_32 = arith.constant dense<0.000000e+00> : vector<4x128xf32>
    %24 = tpu.matmul %23, %21, %cst_32 {dimension_numbers = #tpu.dot_dimension_numbers<[1], [0], [0], [1], [0, 0, 1, 1], [], []>} : vector<4x4xf32>, vector<4x128xf32>, vector<4x128xf32> -> vector<4x128xf32>
    %25 = arith.addf %18, %24 : vector<4x128xf32>
    %c2 = arith.constant 2 : index
    %c0_33 = arith.constant 0 : index
    %c0_34 = arith.constant 0 : index
    %26 = vector.load %arg4[%c2, %c0_33, %c0_34] : memref<9x512x128xf32, #tpu.memory_space<vmem>>, vector<1x512x128xf32>
    %27 = vector.shape_cast %26 : vector<1x512x128xf32> to vector<512x128xf32>
    %cst_35 = arith.constant dense<0.000000e+00> : vector<4x128xf32>
    %28 = tpu.matmul %12, %27, %cst_35 {dimension_numbers = #tpu.dot_dimension_numbers<[1], [0], [0], [1], [0, 0, 1, 1], [], []>} : vector<4x512xf32>, vector<512x128xf32>, vector<4x128xf32> -> vector<4x128xf32>
    %c2_36 = arith.constant 2 : index
    %c0_37 = arith.constant 0 : index
    %c0_38 = arith.constant 0 : index
    %29 = vector.load %arg2[%c2_36, %c0_37, %c0_38] : memref<9x4x4xf32, #tpu.memory_space<vmem>>, vector<1x4x4xf32>
    %30 = vector.shape_cast %29 : vector<1x4x4xf32> to vector<4x4xf32>
    %cst_39 = arith.constant dense<0.000000e+00> : vector<4x128xf32>
    %31 = tpu.matmul %30, %28, %cst_39 {dimension_numbers = #tpu.dot_dimension_numbers<[1], [0], [0], [1], [0, 0, 1, 1], [], []>} : vector<4x4xf32>, vector<4x128xf32>, vector<4x128xf32> -> vector<4x128xf32>
    %32 = arith.addf %25, %31 : vector<4x128xf32>
    %c3_40 = arith.constant 3 : index
    %c0_41 = arith.constant 0 : index
    %c0_42 = arith.constant 0 : index
    %33 = vector.load %arg4[%c3_40, %c0_41, %c0_42] : memref<9x512x128xf32, #tpu.memory_space<vmem>>, vector<1x512x128xf32>
    %34 = vector.shape_cast %33 : vector<1x512x128xf32> to vector<512x128xf32>
    %cst_43 = arith.constant dense<0.000000e+00> : vector<4x128xf32>
    %35 = tpu.matmul %12, %34, %cst_43 {dimension_numbers = #tpu.dot_dimension_numbers<[1], [0], [0], [1], [0, 0, 1, 1], [], []>} : vector<4x512xf32>, vector<512x128xf32>, vector<4x128xf32> -> vector<4x128xf32>
    %c3_44 = arith.constant 3 : index
    %c0_45 = arith.constant 0 : index
    %c0_46 = arith.constant 0 : index
    %36 = vector.load %arg2[%c3_44, %c0_45, %c0_46] : memref<9x4x4xf32, #tpu.memory_space<vmem>>, vector<1x4x4xf32>
    %37 = vector.shape_cast %36 : vector<1x4x4xf32> to vector<4x4xf32>
    %cst_47 = arith.constant dense<0.000000e+00> : vector<4x128xf32>
    %38 = tpu.matmul %37, %35, %cst_47 {dimension_numbers = #tpu.dot_dimension_numbers<[1], [0], [0], [1], [0, 0, 1, 1], [], []>} : vector<4x4xf32>, vector<4x128xf32>, vector<4x128xf32> -> vector<4x128xf32>
    %39 = arith.addf %32, %38 : vector<4x128xf32>
    %c4 = arith.constant 4 : index
    %c0_48 = arith.constant 0 : index
    %c0_49 = arith.constant 0 : index
    %40 = vector.load %arg4[%c4, %c0_48, %c0_49] : memref<9x512x128xf32, #tpu.memory_space<vmem>>, vector<1x512x128xf32>
    %41 = vector.shape_cast %40 : vector<1x512x128xf32> to vector<512x128xf32>
    %cst_50 = arith.constant dense<0.000000e+00> : vector<4x128xf32>
    %42 = tpu.matmul %12, %41, %cst_50 {dimension_numbers = #tpu.dot_dimension_numbers<[1], [0], [0], [1], [0, 0, 1, 1], [], []>} : vector<4x512xf32>, vector<512x128xf32>, vector<4x128xf32> -> vector<4x128xf32>
    %c4_51 = arith.constant 4 : index
    %c0_52 = arith.constant 0 : index
    %c0_53 = arith.constant 0 : index
    %43 = vector.load %arg2[%c4_51, %c0_52, %c0_53] : memref<9x4x4xf32, #tpu.memory_space<vmem>>, vector<1x4x4xf32>
    %44 = vector.shape_cast %43 : vector<1x4x4xf32> to vector<4x4xf32>
    %cst_54 = arith.constant dense<0.000000e+00> : vector<4x128xf32>
    %45 = tpu.matmul %44, %42, %cst_54 {dimension_numbers = #tpu.dot_dimension_numbers<[1], [0], [0], [1], [0, 0, 1, 1], [], []>} : vector<4x4xf32>, vector<4x128xf32>, vector<4x128xf32> -> vector<4x128xf32>
    %46 = arith.addf %39, %45 : vector<4x128xf32>
    %c5 = arith.constant 5 : index
    %c0_55 = arith.constant 0 : index
    %c0_56 = arith.constant 0 : index
    %47 = vector.load %arg4[%c5, %c0_55, %c0_56] : memref<9x512x128xf32, #tpu.memory_space<vmem>>, vector<1x512x128xf32>
    %48 = vector.shape_cast %47 : vector<1x512x128xf32> to vector<512x128xf32>
    %cst_57 = arith.constant dense<0.000000e+00> : vector<4x128xf32>
    %49 = tpu.matmul %12, %48, %cst_57 {dimension_numbers = #tpu.dot_dimension_numbers<[1], [0], [0], [1], [0, 0, 1, 1], [], []>} : vector<4x512xf32>, vector<512x128xf32>, vector<4x128xf32> -> vector<4x128xf32>
    %c5_58 = arith.constant 5 : index
    %c0_59 = arith.constant 0 : index
    %c0_60 = arith.constant 0 : index
    %50 = vector.load %arg2[%c5_58, %c0_59, %c0_60] : memref<9x4x4xf32, #tpu.memory_space<vmem>>, vector<1x4x4xf32>
    %51 = vector.shape_cast %50 : vector<1x4x4xf32> to vector<4x4xf32>
    %cst_61 = arith.constant dense<0.000000e+00> : vector<4x128xf32>
    %52 = tpu.matmul %51, %49, %cst_61 {dimension_numbers = #tpu.dot_dimension_numbers<[1], [0], [0], [1], [0, 0, 1, 1], [], []>} : vector<4x4xf32>, vector<4x128xf32>, vector<4x128xf32> -> vector<4x128xf32>
    %53 = arith.addf %46, %52 : vector<4x128xf32>
    %c6 = arith.constant 6 : index
    %c0_62 = arith.constant 0 : index
    %c0_63 = arith.constant 0 : index
    %54 = vector.load %arg4[%c6, %c0_62, %c0_63] : memref<9x512x128xf32, #tpu.memory_space<vmem>>, vector<1x512x128xf32>
    %55 = vector.shape_cast %54 : vector<1x512x128xf32> to vector<512x128xf32>
    %cst_64 = arith.constant dense<0.000000e+00> : vector<4x128xf32>
    %56 = tpu.matmul %12, %55, %cst_64 {dimension_numbers = #tpu.dot_dimension_numbers<[1], [0], [0], [1], [0, 0, 1, 1], [], []>} : vector<4x512xf32>, vector<512x128xf32>, vector<4x128xf32> -> vector<4x128xf32>
    %c6_65 = arith.constant 6 : index
    %c0_66 = arith.constant 0 : index
    %c0_67 = arith.constant 0 : index
    %57 = vector.load %arg2[%c6_65, %c0_66, %c0_67] : memref<9x4x4xf32, #tpu.memory_space<vmem>>, vector<1x4x4xf32>
    %58 = vector.shape_cast %57 : vector<1x4x4xf32> to vector<4x4xf32>
    %cst_68 = arith.constant dense<0.000000e+00> : vector<4x128xf32>
    %59 = tpu.matmul %58, %56, %cst_68 {dimension_numbers = #tpu.dot_dimension_numbers<[1], [0], [0], [1], [0, 0, 1, 1], [], []>} : vector<4x4xf32>, vector<4x128xf32>, vector<4x128xf32> -> vector<4x128xf32>
    %60 = arith.addf %53, %59 : vector<4x128xf32>
    %c7 = arith.constant 7 : index
    %c0_69 = arith.constant 0 : index
    %c0_70 = arith.constant 0 : index
    %61 = vector.load %arg4[%c7, %c0_69, %c0_70] : memref<9x512x128xf32, #tpu.memory_space<vmem>>, vector<1x512x128xf32>
    %62 = vector.shape_cast %61 : vector<1x512x128xf32> to vector<512x128xf32>
    %cst_71 = arith.constant dense<0.000000e+00> : vector<4x128xf32>
    %63 = tpu.matmul %12, %62, %cst_71 {dimension_numbers = #tpu.dot_dimension_numbers<[1], [0], [0], [1], [0, 0, 1, 1], [], []>} : vector<4x512xf32>, vector<512x128xf32>, vector<4x128xf32> -> vector<4x128xf32>
    %c7_72 = arith.constant 7 : index
    %c0_73 = arith.constant 0 : index
    %c0_74 = arith.constant 0 : index
    %64 = vector.load %arg2[%c7_72, %c0_73, %c0_74] : memref<9x4x4xf32, #tpu.memory_space<vmem>>, vector<1x4x4xf32>
    %65 = vector.shape_cast %64 : vector<1x4x4xf32> to vector<4x4xf32>
    %cst_75 = arith.constant dense<0.000000e+00> : vector<4x128xf32>
    %66 = tpu.matmul %65, %63, %cst_75 {dimension_numbers = #tpu.dot_dimension_numbers<[1], [0], [0], [1], [0, 0, 1, 1], [], []>} : vector<4x4xf32>, vector<4x128xf32>, vector<4x128xf32> -> vector<4x128xf32>
    %67 = arith.addf %60, %66 : vector<4x128xf32>
    %c8 = arith.constant 8 : index
    %c0_76 = arith.constant 0 : index
    %c0_77 = arith.constant 0 : index
    %68 = vector.load %arg4[%c8, %c0_76, %c0_77] : memref<9x512x128xf32, #tpu.memory_space<vmem>>, vector<1x512x128xf32>
    %69 = vector.shape_cast %68 : vector<1x512x128xf32> to vector<512x128xf32>
    %cst_78 = arith.constant dense<0.000000e+00> : vector<4x128xf32>
    %70 = tpu.matmul %12, %69, %cst_78 {dimension_numbers = #tpu.dot_dimension_numbers<[1], [0], [0], [1], [0, 0, 1, 1], [], []>} : vector<4x512xf32>, vector<512x128xf32>, vector<4x128xf32> -> vector<4x128xf32>
    %c8_79 = arith.constant 8 : index
    %c0_80 = arith.constant 0 : index
    %c0_81 = arith.constant 0 : index
    %71 = vector.load %arg2[%c8_79, %c0_80, %c0_81] : memref<9x4x4xf32, #tpu.memory_space<vmem>>, vector<1x4x4xf32>
    %72 = vector.shape_cast %71 : vector<1x4x4xf32> to vector<4x4xf32>
    %cst_82 = arith.constant dense<0.000000e+00> : vector<4x128xf32>
    %73 = tpu.matmul %72, %70, %cst_82 {dimension_numbers = #tpu.dot_dimension_numbers<[1], [0], [0], [1], [0, 0, 1, 1], [], []>} : vector<4x4xf32>, vector<4x128xf32>, vector<4x128xf32> -> vector<4x128xf32>
    %74 = arith.addf %67, %73 : vector<4x128xf32>
    %c0_83 = arith.constant 0 : index
    %c0_84 = arith.constant 0 : index
    %75 = vector.load %arg3[%c0_83, %c0_84] : memref<4x1xf32, #tpu.memory_space<vmem>>, vector<4x1xf32>
    %76 = vector.broadcast %75 : vector<4x1xf32> to vector<4x128xf32>
    %77 = arith.addf %74, %76 : vector<4x128xf32>
    %cst_85 = arith.constant 0.000000e+00 : f32
    %78 = vector.broadcast %cst_85 : f32 to vector<4x128xf32>
    %79 = arith.maximumf %77, %78 : vector<4x128xf32>
    %c0_86 = arith.constant 0 : index
    %c0_87 = arith.constant 0 : index
    %c0_88 = arith.constant 0 : index
    %80 = vector.load %arg7[%c0_86, %c0_87, %c0_88] : memref<9x128x32xf32, #tpu.memory_space<vmem>>, vector<1x128x32xf32>
    %81 = vector.shape_cast %80 : vector<1x128x32xf32> to vector<128x32xf32>
    %cst_89 = arith.constant dense<0.000000e+00> : vector<4x32xf32>
    %82 = tpu.matmul %79, %81, %cst_89 {dimension_numbers = #tpu.dot_dimension_numbers<[1], [0], [0], [1], [0, 0, 1, 1], [], []>} : vector<4x128xf32>, vector<128x32xf32>, vector<4x32xf32> -> vector<4x32xf32>
    %c0_90 = arith.constant 0 : index
    %c0_91 = arith.constant 0 : index
    %c0_92 = arith.constant 0 : index
    %83 = vector.load %arg5[%c0_90, %c0_91, %c0_92] : memref<9x8x4xf32, #tpu.memory_space<vmem>>, vector<1x8x4xf32>
    %84 = vector.shape_cast %83 : vector<1x8x4xf32> to vector<8x4xf32>
    %cst_93 = arith.constant dense<0.000000e+00> : vector<8x32xf32>
    %85 = tpu.matmul %84, %82, %cst_93 {dimension_numbers = #tpu.dot_dimension_numbers<[1], [0], [0], [1], [0, 0, 1, 1], [], []>} : vector<8x4xf32>, vector<4x32xf32>, vector<8x32xf32> -> vector<8x32xf32>
    %c1_94 = arith.constant 1 : index
    %c0_95 = arith.constant 0 : index
    %c0_96 = arith.constant 0 : index
    %86 = vector.load %arg7[%c1_94, %c0_95, %c0_96] : memref<9x128x32xf32, #tpu.memory_space<vmem>>, vector<1x128x32xf32>
    %87 = vector.shape_cast %86 : vector<1x128x32xf32> to vector<128x32xf32>
    %cst_97 = arith.constant dense<0.000000e+00> : vector<4x32xf32>
    %88 = tpu.matmul %79, %87, %cst_97 {dimension_numbers = #tpu.dot_dimension_numbers<[1], [0], [0], [1], [0, 0, 1, 1], [], []>} : vector<4x128xf32>, vector<128x32xf32>, vector<4x32xf32> -> vector<4x32xf32>
    %c1_98 = arith.constant 1 : index
    %c0_99 = arith.constant 0 : index
    %c0_100 = arith.constant 0 : index
    %89 = vector.load %arg5[%c1_98, %c0_99, %c0_100] : memref<9x8x4xf32, #tpu.memory_space<vmem>>, vector<1x8x4xf32>
    %90 = vector.shape_cast %89 : vector<1x8x4xf32> to vector<8x4xf32>
    %cst_101 = arith.constant dense<0.000000e+00> : vector<8x32xf32>
    %91 = tpu.matmul %90, %88, %cst_101 {dimension_numbers = #tpu.dot_dimension_numbers<[1], [0], [0], [1], [0, 0, 1, 1], [], []>} : vector<8x4xf32>, vector<4x32xf32>, vector<8x32xf32> -> vector<8x32xf32>
    %92 = arith.addf %85, %91 : vector<8x32xf32>
    %c2_102 = arith.constant 2 : index
    %c0_103 = arith.constant 0 : index
    %c0_104 = arith.constant 0 : index
    %93 = vector.load %arg7[%c2_102, %c0_103, %c0_104] : memref<9x128x32xf32, #tpu.memory_space<vmem>>, vector<1x128x32xf32>
    %94 = vector.shape_cast %93 : vector<1x128x32xf32> to vector<128x32xf32>
    %cst_105 = arith.constant dense<0.000000e+00> : vector<4x32xf32>
    %95 = tpu.matmul %79, %94, %cst_105 {dimension_numbers = #tpu.dot_dimension_numbers<[1], [0], [0], [1], [0, 0, 1, 1], [], []>} : vector<4x128xf32>, vector<128x32xf32>, vector<4x32xf32> -> vector<4x32xf32>
    %c2_106 = arith.constant 2 : index
    %c0_107 = arith.constant 0 : index
    %c0_108 = arith.constant 0 : index
    %96 = vector.load %arg5[%c2_106, %c0_107, %c0_108] : memref<9x8x4xf32, #tpu.memory_space<vmem>>, vector<1x8x4xf32>
    %97 = vector.shape_cast %96 : vector<1x8x4xf32> to vector<8x4xf32>
    %cst_109 = arith.constant dense<0.000000e+00> : vector<8x32xf32>
    %98 = tpu.matmul %97, %95, %cst_109 {dimension_numbers = #tpu.dot_dimension_numbers<[1], [0], [0], [1], [0, 0, 1, 1], [], []>} : vector<8x4xf32>, vector<4x32xf32>, vector<8x32xf32> -> vector<8x32xf32>
    %99 = arith.addf %92, %98 : vector<8x32xf32>
    %c3_110 = arith.constant 3 : index
    %c0_111 = arith.constant 0 : index
    %c0_112 = arith.constant 0 : index
    %100 = vector.load %arg7[%c3_110, %c0_111, %c0_112] : memref<9x128x32xf32, #tpu.memory_space<vmem>>, vector<1x128x32xf32>
    %101 = vector.shape_cast %100 : vector<1x128x32xf32> to vector<128x32xf32>
    %cst_113 = arith.constant dense<0.000000e+00> : vector<4x32xf32>
    %102 = tpu.matmul %79, %101, %cst_113 {dimension_numbers = #tpu.dot_dimension_numbers<[1], [0], [0], [1], [0, 0, 1, 1], [], []>} : vector<4x128xf32>, vector<128x32xf32>, vector<4x32xf32> -> vector<4x32xf32>
    %c3_114 = arith.constant 3 : index
    %c0_115 = arith.constant 0 : index
    %c0_116 = arith.constant 0 : index
    %103 = vector.load %arg5[%c3_114, %c0_115, %c0_116] : memref<9x8x4xf32, #tpu.memory_space<vmem>>, vector<1x8x4xf32>
    %104 = vector.shape_cast %103 : vector<1x8x4xf32> to vector<8x4xf32>
    %cst_117 = arith.constant dense<0.000000e+00> : vector<8x32xf32>
    %105 = tpu.matmul %104, %102, %cst_117 {dimension_numbers = #tpu.dot_dimension_numbers<[1], [0], [0], [1], [0, 0, 1, 1], [], []>} : vector<8x4xf32>, vector<4x32xf32>, vector<8x32xf32> -> vector<8x32xf32>
    %106 = arith.addf %99, %105 : vector<8x32xf32>
    %c4_118 = arith.constant 4 : index
    %c0_119 = arith.constant 0 : index
    %c0_120 = arith.constant 0 : index
    %107 = vector.load %arg7[%c4_118, %c0_119, %c0_120] : memref<9x128x32xf32, #tpu.memory_space<vmem>>, vector<1x128x32xf32>
    %108 = vector.shape_cast %107 : vector<1x128x32xf32> to vector<128x32xf32>
    %cst_121 = arith.constant dense<0.000000e+00> : vector<4x32xf32>
    %109 = tpu.matmul %79, %108, %cst_121 {dimension_numbers = #tpu.dot_dimension_numbers<[1], [0], [0], [1], [0, 0, 1, 1], [], []>} : vector<4x128xf32>, vector<128x32xf32>, vector<4x32xf32> -> vector<4x32xf32>
    %c4_122 = arith.constant 4 : index
    %c0_123 = arith.constant 0 : index
    %c0_124 = arith.constant 0 : index
    %110 = vector.load %arg5[%c4_122, %c0_123, %c0_124] : memref<9x8x4xf32, #tpu.memory_space<vmem>>, vector<1x8x4xf32>
    %111 = vector.shape_cast %110 : vector<1x8x4xf32> to vector<8x4xf32>
    %cst_125 = arith.constant dense<0.000000e+00> : vector<8x32xf32>
    %112 = tpu.matmul %111, %109, %cst_125 {dimension_numbers = #tpu.dot_dimension_numbers<[1], [0], [0], [1], [0, 0, 1, 1], [], []>} : vector<8x4xf32>, vector<4x32xf32>, vector<8x32xf32> -> vector<8x32xf32>
    %113 = arith.addf %106, %112 : vector<8x32xf32>
    %c5_126 = arith.constant 5 : index
    %c0_127 = arith.constant 0 : index
    %c0_128 = arith.constant 0 : index
    %114 = vector.load %arg7[%c5_126, %c0_127, %c0_128] : memref<9x128x32xf32, #tpu.memory_space<vmem>>, vector<1x128x32xf32>
    %115 = vector.shape_cast %114 : vector<1x128x32xf32> to vector<128x32xf32>
    %cst_129 = arith.constant dense<0.000000e+00> : vector<4x32xf32>
    %116 = tpu.matmul %79, %115, %cst_129 {dimension_numbers = #tpu.dot_dimension_numbers<[1], [0], [0], [1], [0, 0, 1, 1], [], []>} : vector<4x128xf32>, vector<128x32xf32>, vector<4x32xf32> -> vector<4x32xf32>
    %c5_130 = arith.constant 5 : index
    %c0_131 = arith.constant 0 : index
    %c0_132 = arith.constant 0 : index
    %117 = vector.load %arg5[%c5_130, %c0_131, %c0_132] : memref<9x8x4xf32, #tpu.memory_space<vmem>>, vector<1x8x4xf32>
    %118 = vector.shape_cast %117 : vector<1x8x4xf32> to vector<8x4xf32>
    %cst_133 = arith.constant dense<0.000000e+00> : vector<8x32xf32>
    %119 = tpu.matmul %118, %116, %cst_133 {dimension_numbers = #tpu.dot_dimension_numbers<[1], [0], [0], [1], [0, 0, 1, 1], [], []>} : vector<8x4xf32>, vector<4x32xf32>, vector<8x32xf32> -> vector<8x32xf32>
    %120 = arith.addf %113, %119 : vector<8x32xf32>
    %c6_134 = arith.constant 6 : index
    %c0_135 = arith.constant 0 : index
    %c0_136 = arith.constant 0 : index
    %121 = vector.load %arg7[%c6_134, %c0_135, %c0_136] : memref<9x128x32xf32, #tpu.memory_space<vmem>>, vector<1x128x32xf32>
    %122 = vector.shape_cast %121 : vector<1x128x32xf32> to vector<128x32xf32>
    %cst_137 = arith.constant dense<0.000000e+00> : vector<4x32xf32>
    %123 = tpu.matmul %79, %122, %cst_137 {dimension_numbers = #tpu.dot_dimension_numbers<[1], [0], [0], [1], [0, 0, 1, 1], [], []>} : vector<4x128xf32>, vector<128x32xf32>, vector<4x32xf32> -> vector<4x32xf32>
    %c6_138 = arith.constant 6 : index
    %c0_139 = arith.constant 0 : index
    %c0_140 = arith.constant 0 : index
    %124 = vector.load %arg5[%c6_138, %c0_139, %c0_140] : memref<9x8x4xf32, #tpu.memory_space<vmem>>, vector<1x8x4xf32>
    %125 = vector.shape_cast %124 : vector<1x8x4xf32> to vector<8x4xf32>
    %cst_141 = arith.constant dense<0.000000e+00> : vector<8x32xf32>
    %126 = tpu.matmul %125, %123, %cst_141 {dimension_numbers = #tpu.dot_dimension_numbers<[1], [0], [0], [1], [0, 0, 1, 1], [], []>} : vector<8x4xf32>, vector<4x32xf32>, vector<8x32xf32> -> vector<8x32xf32>
    %127 = arith.addf %120, %126 : vector<8x32xf32>
    %c7_142 = arith.constant 7 : index
    %c0_143 = arith.constant 0 : index
    %c0_144 = arith.constant 0 : index
    %128 = vector.load %arg7[%c7_142, %c0_143, %c0_144] : memref<9x128x32xf32, #tpu.memory_space<vmem>>, vector<1x128x32xf32>
    %129 = vector.shape_cast %128 : vector<1x128x32xf32> to vector<128x32xf32>
    %cst_145 = arith.constant dense<0.000000e+00> : vector<4x32xf32>
    %130 = tpu.matmul %79, %129, %cst_145 {dimension_numbers = #tpu.dot_dimension_numbers<[1], [0], [0], [1], [0, 0, 1, 1], [], []>} : vector<4x128xf32>, vector<128x32xf32>, vector<4x32xf32> -> vector<4x32xf32>
    %c7_146 = arith.constant 7 : index
    %c0_147 = arith.constant 0 : index
    %c0_148 = arith.constant 0 : index
    %131 = vector.load %arg5[%c7_146, %c0_147, %c0_148] : memref<9x8x4xf32, #tpu.memory_space<vmem>>, vector<1x8x4xf32>
    %132 = vector.shape_cast %131 : vector<1x8x4xf32> to vector<8x4xf32>
    %cst_149 = arith.constant dense<0.000000e+00> : vector<8x32xf32>
    %133 = tpu.matmul %132, %130, %cst_149 {dimension_numbers = #tpu.dot_dimension_numbers<[1], [0], [0], [1], [0, 0, 1, 1], [], []>} : vector<8x4xf32>, vector<4x32xf32>, vector<8x32xf32> -> vector<8x32xf32>
    %134 = arith.addf %127, %133 : vector<8x32xf32>
    %c8_150 = arith.constant 8 : index
    %c0_151 = arith.constant 0 : index
    %c0_152 = arith.constant 0 : index
    %135 = vector.load %arg7[%c8_150, %c0_151, %c0_152] : memref<9x128x32xf32, #tpu.memory_space<vmem>>, vector<1x128x32xf32>
    %136 = vector.shape_cast %135 : vector<1x128x32xf32> to vector<128x32xf32>
    %cst_153 = arith.constant dense<0.000000e+00> : vector<4x32xf32>
    %137 = tpu.matmul %79, %136, %cst_153 {dimension_numbers = #tpu.dot_dimension_numbers<[1], [0], [0], [1], [0, 0, 1, 1], [], []>} : vector<4x128xf32>, vector<128x32xf32>, vector<4x32xf32> -> vector<4x32xf32>
    %c8_154 = arith.constant 8 : index
    %c0_155 = arith.constant 0 : index
    %c0_156 = arith.constant 0 : index
    %138 = vector.load %arg5[%c8_154, %c0_155, %c0_156] : memref<9x8x4xf32, #tpu.memory_space<vmem>>, vector<1x8x4xf32>
    %139 = vector.shape_cast %138 : vector<1x8x4xf32> to vector<8x4xf32>
    %cst_157 = arith.constant dense<0.000000e+00> : vector<8x32xf32>
    %140 = tpu.matmul %139, %137, %cst_157 {dimension_numbers = #tpu.dot_dimension_numbers<[1], [0], [0], [1], [0, 0, 1, 1], [], []>} : vector<8x4xf32>, vector<4x32xf32>, vector<8x32xf32> -> vector<8x32xf32>
    %141 = arith.addf %134, %140 : vector<8x32xf32>
    %c0_158 = arith.constant 0 : index
    %c0_159 = arith.constant 0 : index
    %142 = vector.load %arg6[%c0_158, %c0_159] : memref<8x1xf32, #tpu.memory_space<vmem>>, vector<8x1xf32>
    %143 = vector.broadcast %142 : vector<8x1xf32> to vector<8x32xf32>
    %144 = arith.addf %141, %143 : vector<8x32xf32>
    %cst_160 = arith.constant 0.000000e+00 : f32
    %145 = vector.broadcast %cst_160 : f32 to vector<8x32xf32>
    %146 = arith.maximumf %144, %145 : vector<8x32xf32>
    %c0_161 = arith.constant 0 : index
    %c0_162 = arith.constant 0 : index
    %c0_163 = arith.constant 0 : index
    %147 = vector.load %arg8[%c0_161, %c0_162, %c0_163] : memref<4x4x8xf32, #tpu.memory_space<vmem>>, vector<1x4x8xf32>
    %148 = vector.shape_cast %147 : vector<1x4x8xf32> to vector<4x8xf32>
    %cst_164 = arith.constant dense<0.000000e+00> : vector<4x32xf32>
    %149 = tpu.matmul %148, %146, %cst_164 {dimension_numbers = #tpu.dot_dimension_numbers<[1], [0], [0], [1], [0, 0, 1, 1], [], []>} : vector<4x8xf32>, vector<8x32xf32>, vector<4x32xf32> -> vector<4x32xf32>
    %c0_165 = arith.constant 0 : index
    %c0_166 = arith.constant 0 : index
    %c0_167 = arith.constant 0 : index
    %150 = vector.load %arg10[%c0_165, %c0_166, %c0_167] : memref<4x32x128xf32, #tpu.memory_space<vmem>>, vector<1x32x128xf32>
    %151 = vector.shape_cast %150 : vector<1x32x128xf32> to vector<32x128xf32>
    %cst_168 = arith.constant dense<0.000000e+00> : vector<4x128xf32>
    %152 = tpu.matmul %149, %151, %cst_168 {dimension_numbers = #tpu.dot_dimension_numbers<[1], [0], [0], [1], [0, 0, 1, 1], [], []>} : vector<4x32xf32>, vector<32x128xf32>, vector<4x128xf32> -> vector<4x128xf32>
    %c1_169 = arith.constant 1 : index
    %c0_170 = arith.constant 0 : index
    %c0_171 = arith.constant 0 : index
    %153 = vector.load %arg8[%c1_169, %c0_170, %c0_171] : memref<4x4x8xf32, #tpu.memory_space<vmem>>, vector<1x4x8xf32>
    %154 = vector.shape_cast %153 : vector<1x4x8xf32> to vector<4x8xf32>
    %cst_172 = arith.constant dense<0.000000e+00> : vector<4x32xf32>
    %155 = tpu.matmul %154, %146, %cst_172 {dimension_numbers = #tpu.dot_dimension_numbers<[1], [0], [0], [1], [0, 0, 1, 1], [], []>} : vector<4x8xf32>, vector<8x32xf32>, vector<4x32xf32> -> vector<4x32xf32>
    %c1_173 = arith.constant 1 : index
    %c0_174 = arith.constant 0 : index
    %c0_175 = arith.constant 0 : index
    %156 = vector.load %arg10[%c1_173, %c0_174, %c0_175] : memref<4x32x128xf32, #tpu.memory_space<vmem>>, vector<1x32x128xf32>
    %157 = vector.shape_cast %156 : vector<1x32x128xf32> to vector<32x128xf32>
    %cst_176 = arith.constant dense<0.000000e+00> : vector<4x128xf32>
    %158 = tpu.matmul %155, %157, %cst_176 {dimension_numbers = #tpu.dot_dimension_numbers<[1], [0], [0], [1], [0, 0, 1, 1], [], []>} : vector<4x32xf32>, vector<32x128xf32>, vector<4x128xf32> -> vector<4x128xf32>
    %159 = arith.addf %152, %158 : vector<4x128xf32>
    %c2_177 = arith.constant 2 : index
    %c0_178 = arith.constant 0 : index
    %c0_179 = arith.constant 0 : index
    %160 = vector.load %arg8[%c2_177, %c0_178, %c0_179] : memref<4x4x8xf32, #tpu.memory_space<vmem>>, vector<1x4x8xf32>
    %161 = vector.shape_cast %160 : vector<1x4x8xf32> to vector<4x8xf32>
    %cst_180 = arith.constant dense<0.000000e+00> : vector<4x32xf32>
    %162 = tpu.matmul %161, %146, %cst_180 {dimension_numbers = #tpu.dot_dimension_numbers<[1], [0], [0], [1], [0, 0, 1, 1], [], []>} : vector<4x8xf32>, vector<8x32xf32>, vector<4x32xf32> -> vector<4x32xf32>
    %c2_181 = arith.constant 2 : index
    %c0_182 = arith.constant 0 : index
    %c0_183 = arith.constant 0 : index
    %163 = vector.load %arg10[%c2_181, %c0_182, %c0_183] : memref<4x32x128xf32, #tpu.memory_space<vmem>>, vector<1x32x128xf32>
    %164 = vector.shape_cast %163 : vector<1x32x128xf32> to vector<32x128xf32>
    %cst_184 = arith.constant dense<0.000000e+00> : vector<4x128xf32>
    %165 = tpu.matmul %162, %164, %cst_184 {dimension_numbers = #tpu.dot_dimension_numbers<[1], [0], [0], [1], [0, 0, 1, 1], [], []>} : vector<4x32xf32>, vector<32x128xf32>, vector<4x128xf32> -> vector<4x128xf32>
    %166 = arith.addf %159, %165 : vector<4x128xf32>
    %c3_185 = arith.constant 3 : index
    %c0_186 = arith.constant 0 : index
    %c0_187 = arith.constant 0 : index
    %167 = vector.load %arg8[%c3_185, %c0_186, %c0_187] : memref<4x4x8xf32, #tpu.memory_space<vmem>>, vector<1x4x8xf32>
    %168 = vector.shape_cast %167 : vector<1x4x8xf32> to vector<4x8xf32>
    %cst_188 = arith.constant dense<0.000000e+00> : vector<4x32xf32>
    %169 = tpu.matmul %168, %146, %cst_188 {dimension_numbers = #tpu.dot_dimension_numbers<[1], [0], [0], [1], [0, 0, 1, 1], [], []>} : vector<4x8xf32>, vector<8x32xf32>, vector<4x32xf32> -> vector<4x32xf32>
    %c3_189 = arith.constant 3 : index
    %c0_190 = arith.constant 0 : index
    %c0_191 = arith.constant 0 : index
    %170 = vector.load %arg10[%c3_189, %c0_190, %c0_191] : memref<4x32x128xf32, #tpu.memory_space<vmem>>, vector<1x32x128xf32>
    %171 = vector.shape_cast %170 : vector<1x32x128xf32> to vector<32x128xf32>
    %cst_192 = arith.constant dense<0.000000e+00> : vector<4x128xf32>
    %172 = tpu.matmul %169, %171, %cst_192 {dimension_numbers = #tpu.dot_dimension_numbers<[1], [0], [0], [1], [0, 0, 1, 1], [], []>} : vector<4x32xf32>, vector<32x128xf32>, vector<4x128xf32> -> vector<4x128xf32>
    %173 = arith.addf %166, %172 : vector<4x128xf32>
    %c0_193 = arith.constant 0 : index
    %c0_194 = arith.constant 0 : index
    %174 = vector.load %arg9[%c0_193, %c0_194] : memref<4x1xf32, #tpu.memory_space<vmem>>, vector<4x1xf32>
    %175 = vector.broadcast %174 : vector<4x1xf32> to vector<4x128xf32>
    %176 = arith.addf %173, %175 : vector<4x128xf32>
    %cst_195 = arith.constant 0.000000e+00 : f32
    %177 = vector.broadcast %cst_195 : f32 to vector<4x128xf32>
    %178 = arith.maximumf %176, %177 : vector<4x128xf32>
    %c0_196 = arith.constant 0 : index
    %c0_197 = arith.constant 0 : index
    %c0_198 = arith.constant 0 : index
    %179 = vector.load %arg11[%c0_196, %c0_197, %c0_198] : memref<4x75x4xf32, #tpu.memory_space<vmem>>, vector<1x75x4xf32>
    %180 = vector.shape_cast %179 : vector<1x75x4xf32> to vector<75x4xf32>
    %cst_199 = arith.constant dense<0.000000e+00> : vector<75x128xf32>
    %181 = tpu.matmul %180, %178, %cst_199 {dimension_numbers = #tpu.dot_dimension_numbers<[1], [0], [0], [1], [0, 0, 1, 1], [], []>} : vector<75x4xf32>, vector<4x128xf32>, vector<75x128xf32> -> vector<75x128xf32>
    %c0_200 = arith.constant 0 : index
    %c0_201 = arith.constant 0 : index
    %c0_202 = arith.constant 0 : index
    %182 = vector.load %arg13[%c0_200, %c0_201, %c0_202] : memref<4x128x512xf32, #tpu.memory_space<vmem>>, vector<1x128x512xf32>
    %183 = vector.shape_cast %182 : vector<1x128x512xf32> to vector<128x512xf32>
    %cst_203 = arith.constant dense<0.000000e+00> : vector<75x512xf32>
    %184 = tpu.matmul %181, %183, %cst_203 {dimension_numbers = #tpu.dot_dimension_numbers<[1], [0], [0], [1], [0, 0, 1, 1], [], []>} : vector<75x128xf32>, vector<128x512xf32>, vector<75x512xf32> -> vector<75x512xf32>
    %c1_204 = arith.constant 1 : index
    %c0_205 = arith.constant 0 : index
    %c0_206 = arith.constant 0 : index
    %185 = vector.load %arg11[%c1_204, %c0_205, %c0_206] : memref<4x75x4xf32, #tpu.memory_space<vmem>>, vector<1x75x4xf32>
    %186 = vector.shape_cast %185 : vector<1x75x4xf32> to vector<75x4xf32>
    %cst_207 = arith.constant dense<0.000000e+00> : vector<75x128xf32>
    %187 = tpu.matmul %186, %178, %cst_207 {dimension_numbers = #tpu.dot_dimension_numbers<[1], [0], [0], [1], [0, 0, 1, 1], [], []>} : vector<75x4xf32>, vector<4x128xf32>, vector<75x128xf32> -> vector<75x128xf32>
    %c1_208 = arith.constant 1 : index
    %c0_209 = arith.constant 0 : index
    %c0_210 = arith.constant 0 : index
    %188 = vector.load %arg13[%c1_208, %c0_209, %c0_210] : memref<4x128x512xf32, #tpu.memory_space<vmem>>, vector<1x128x512xf32>
    %189 = vector.shape_cast %188 : vector<1x128x512xf32> to vector<128x512xf32>
    %cst_211 = arith.constant dense<0.000000e+00> : vector<75x512xf32>
    %190 = tpu.matmul %187, %189, %cst_211 {dimension_numbers = #tpu.dot_dimension_numbers<[1], [0], [0], [1], [0, 0, 1, 1], [], []>} : vector<75x128xf32>, vector<128x512xf32>, vector<75x512xf32> -> vector<75x512xf32>
    %191 = arith.addf %184, %190 : vector<75x512xf32>
    %c2_212 = arith.constant 2 : index
    %c0_213 = arith.constant 0 : index
    %c0_214 = arith.constant 0 : index
    %192 = vector.load %arg11[%c2_212, %c0_213, %c0_214] : memref<4x75x4xf32, #tpu.memory_space<vmem>>, vector<1x75x4xf32>
    %193 = vector.shape_cast %192 : vector<1x75x4xf32> to vector<75x4xf32>
    %cst_215 = arith.constant dense<0.000000e+00> : vector<75x128xf32>
    %194 = tpu.matmul %193, %178, %cst_215 {dimension_numbers = #tpu.dot_dimension_numbers<[1], [0], [0], [1], [0, 0, 1, 1], [], []>} : vector<75x4xf32>, vector<4x128xf32>, vector<75x128xf32> -> vector<75x128xf32>
    %c2_216 = arith.constant 2 : index
    %c0_217 = arith.constant 0 : index
    %c0_218 = arith.constant 0 : index
    %195 = vector.load %arg13[%c2_216, %c0_217, %c0_218] : memref<4x128x512xf32, #tpu.memory_space<vmem>>, vector<1x128x512xf32>
    %196 = vector.shape_cast %195 : vector<1x128x512xf32> to vector<128x512xf32>
    %cst_219 = arith.constant dense<0.000000e+00> : vector<75x512xf32>
    %197 = tpu.matmul %194, %196, %cst_219 {dimension_numbers = #tpu.dot_dimension_numbers<[1], [0], [0], [1], [0, 0, 1, 1], [], []>} : vector<75x128xf32>, vector<128x512xf32>, vector<75x512xf32> -> vector<75x512xf32>
    %198 = arith.addf %191, %197 : vector<75x512xf32>
    %c3_220 = arith.constant 3 : index
    %c0_221 = arith.constant 0 : index
    %c0_222 = arith.constant 0 : index
    %199 = vector.load %arg11[%c3_220, %c0_221, %c0_222] : memref<4x75x4xf32, #tpu.memory_space<vmem>>, vector<1x75x4xf32>
    %200 = vector.shape_cast %199 : vector<1x75x4xf32> to vector<75x4xf32>
    %cst_223 = arith.constant dense<0.000000e+00> : vector<75x128xf32>
    %201 = tpu.matmul %200, %178, %cst_223 {dimension_numbers = #tpu.dot_dimension_numbers<[1], [0], [0], [1], [0, 0, 1, 1], [], []>} : vector<75x4xf32>, vector<4x128xf32>, vector<75x128xf32> -> vector<75x128xf32>
    %c3_224 = arith.constant 3 : index
    %c0_225 = arith.constant 0 : index
    %c0_226 = arith.constant 0 : index
    %202 = vector.load %arg13[%c3_224, %c0_225, %c0_226] : memref<4x128x512xf32, #tpu.memory_space<vmem>>, vector<1x128x512xf32>
    %203 = vector.shape_cast %202 : vector<1x128x512xf32> to vector<128x512xf32>
    %cst_227 = arith.constant dense<0.000000e+00> : vector<75x512xf32>
    %204 = tpu.matmul %201, %203, %cst_227 {dimension_numbers = #tpu.dot_dimension_numbers<[1], [0], [0], [1], [0, 0, 1, 1], [], []>} : vector<75x128xf32>, vector<128x512xf32>, vector<75x512xf32> -> vector<75x512xf32>
    %205 = arith.addf %198, %204 : vector<75x512xf32>
    %c0_228 = arith.constant 0 : index
    %c0_229 = arith.constant 0 : index
    %206 = vector.load %arg12[%c0_228, %c0_229] : memref<75x1xf32, #tpu.memory_space<vmem>>, vector<75x1xf32>
    %207 = vector.broadcast %206 : vector<75x1xf32> to vector<75x512xf32>
    %208 = arith.addf %205, %207 : vector<75x512xf32>
    %cst_230 = arith.constant 0.000000e+00 : f32
    %209 = vector.broadcast %cst_230 : f32 to vector<75x512xf32>
    %210 = arith.maximumf %208, %209 : vector<75x512xf32>
    %211 = vector.extract_strided_slice %210 {offsets = [0, 0], sizes = [75, 256], strides = [1, 1]} : vector<75x512xf32> to vector<75x256xf32>
    %c0_231 = arith.constant 0 : index
    %c0_232 = arith.constant 0 : index
    %c0_233 = arith.constant 0 : index
    %212 = vector.load %arg14[%c0_231, %c0_232, %c0_233] : memref<2x75x256xf32, #tpu.memory_space<vmem>>, vector<1x75x256xf32>
    %213 = vector.shape_cast %212 : vector<1x75x256xf32> to vector<75x256xf32>
    %214 = vector.shape_cast %211 : vector<75x256xf32> to vector<1x75x256xf32>
    tpu.vector_store %arg14[%c0_231, %c0_232, %c0_233], %214 {strides = array<i32>} : memref<2x75x256xf32, #tpu.memory_space<vmem>>, vector<1x75x256xf32>,
    %215 = vector.extract_strided_slice %210 {offsets = [0, 256], sizes = [75, 256], strides = [1, 1]} : vector<75x512xf32> to vector<75x256xf32>
    %c1_234 = arith.constant 1 : index
    %c0_235 = arith.constant 0 : index
    %c0_236 = arith.constant 0 : index
    %216 = vector.load %arg14[%c1_234, %c0_235, %c0_236] : memref<2x75x256xf32, #tpu.memory_space<vmem>>, vector<1x75x256xf32>
    %217 = vector.shape_cast %216 : vector<1x75x256xf32> to vector<75x256xf32>
    %218 = vector.shape_cast %215 : vector<75x256xf32> to vector<1x75x256xf32>
    tpu.vector_store %arg14[%c1_234, %c0_235, %c0_236], %218 {strides = array<i32>} : memref<2x75x256xf32, #tpu.memory_space<vmem>>, vector<1x75x256xf32>,
    return
  }
}

</mosaic_0001>

<llo_original>
// kernel: simple_forward.1
$region0: #{simple_forward.1}
  #allocation0 [shape = 'u32[]', space=smem, size = 0x4, offset = 0x4, fixed_abs, tag = 'smem constant byte address 0x4 - core index']
  #allocation1 [shape = 'u32[72,128]{1,0:T(1,128)}', space=vmem, size = 0x9000, scoped, tag = 'internal scratch']
  #allocation2 [shape = 'f32[4,512]{1,0:T(4,128)}', space=vmem, size = 0x2000, scoped, tag = 'scratch operand']
  %s0 = inlined_call_operand.vmem [shape: f32[2,3,256], index: 0, kind: input, shape index: {}]
  %s1 = inlined_call_operand.vmem [shape: f32[2,1,256], index: 1, kind: input, shape index: {}]
  %s2 = inlined_call_operand.hbm [shape: f32[9,4,4], index: 2, kind: input, shape index: {}]
  %s3 = inlined_call_operand.vmem [shape: f32[4,1], index: 3, kind: input, shape index: {}]
  %s4 = inlined_call_operand.hbm [shape: f32[9,512,128], index: 4, kind: input, shape index: {}]
  %s5 = inlined_call_operand.vmem [shape: f32[9,8,4], index: 5, kind: input, shape index: {}]
  %s6 = inlined_call_operand.vmem [shape: f32[8,1], index: 6, kind: input, shape index: {}]
  %s7 = inlined_call_operand.hbm [shape: f32[9,128,32], index: 7, kind: input, shape index: {}]
  %s8 = inlined_call_operand.vmem [shape: f32[4,4,8], index: 8, kind: input, shape index: {}]
  %s9 = inlined_call_operand.vmem [shape: f32[4,1], index: 9, kind: input, shape index: {}]
  %s10 = inlined_call_operand.hbm [shape: f32[4,32,128], index: 10, kind: input, shape index: {}]
  %s11 = inlined_call_operand.vmem [shape: f32[4,75,4], index: 11, kind: input, shape index: {}]
  %s12 = inlined_call_operand.vmem [shape: f32[75,1], index: 12, kind: input, shape index: {}]
  %s13 = inlined_call_operand.hbm [shape: f32[4,128,512], index: 13, kind: input, shape index: {}]
  %s14 = inlined_call_operand.vmem [shape: f32[2,75,256], index: 14, kind: output, shape index: {}]
  %s15 = sld [smem:[#allocation0]]
  $region86: #{simple_forward.1} parent=0
    _
  %s17 = ssub.s32 1, %s15
  %s18 = scalar_select 0, %s17, %s15
  $region1: #{simple_forward.1} parent=0
    #allocation3 [shape = 'u8[18432]{0}', space=vmem, size = 0x4800, scoped, tag = 'input window, operand 2, single buffered']
    #allocation4 [shape = 's32[1]{0}', space=sflag, size = 0x4, scoped, tag = 'scoped memory for simple_forward.1']
    #allocation5 [shape = 'u8[2359296]{0}', space=vmem, size = 0x240000, scoped, tag = 'input window, operand 4, single buffered']
    #allocation6 [shape = 's32[1]{0}', space=sflag, size = 0x4, scoped, tag = 'scoped memory for simple_forward.1']
    #allocation7 [shape = 'u8[589824]{0}', space=vmem, size = 0x90000, scoped, tag = 'input window, operand 7, single buffered']
    #allocation8 [shape = 'u8[65536]{0}', space=vmem, size = 0x10000, scoped, tag = 'input window, operand 10, single buffered']
    #allocation9 [shape = 's32[1]{0}', space=sflag, size = 0x4, scoped, tag = 'scoped memory for simple_forward.1']
    #allocation10 [shape = 'u8[1048576]{0}', space=vmem, size = 0x100000, scoped, tag = 'input window, operand 13, single buffered']
    %19 = vsyncpa [#allocation4], 0
    %20 = vsyncpa [#allocation6], 0
    %21 = vsyncpa [#allocation9], 0
    // Predicated region
    $region2: #{simple_forward.1} parent=1 // pred_check
      _
    $region3: #{simple_forward.1} parent=1 // pred_check_branch
      %23 = sbr.rel (0) target = $region5
    $region4: #{simple_forward.1} parent=1 // pred_region
      _
    $region5: #{simple_forward.1} parent=1 // pred_fallthru
      _
    // Predicated region
    $region6: #{simple_forward.1} parent=1 // pred_check
      _
    $region7: #{simple_forward.1} parent=1 // pred_check_branch
      %25 = sbr.rel (0) target = $region9
    $region8: #{simple_forward.1} parent=1 // pred_region
      _
    $region9: #{simple_forward.1} parent=1 // pred_fallthru
      _
    // Predicated region
    $region10: #{simple_forward.1} parent=1 // pred_check
      _
    $region11: #{simple_forward.1} parent=1 // pred_check_branch
      %27 = sbr.rel (0) target = $region13
    $region12: #{simple_forward.1} parent=1 // pred_region
      %29 = vsyncadd [#allocation4], 0
      %s30 = sshll.u32 %s2, 4
      %s31 = int_to_ptr.hbm [resolvable:$true] %s30
      %s32 = sshll.u32 [#allocation3], 4
      %s33 = int_to_ptr.vmem [resolvable:$true] %s32
      %38 = dma.hbm_to_vmem [thread:$0]  %s31, 576, %s33, [#allocation4], 64, 64, 4
    $region13: #{simple_forward.1} parent=1 // pred_fallthru
      _
    // Predicated region
    $region14: #{simple_forward.1} parent=1 // pred_check
      _
    $region15: #{simple_forward.1} parent=1 // pred_check_branch
      %40 = sbr.rel (0) target = $region17
    $region16: #{simple_forward.1} parent=1 // pred_region
      _
    $region17: #{simple_forward.1} parent=1 // pred_fallthru
      _
    // Predicated region
    $region18: #{simple_forward.1} parent=1 // pred_check
      _
    $region19: #{simple_forward.1} parent=1 // pred_check_branch
      %42 = sbr.rel (0) target = $region21
    $region20: #{simple_forward.1} parent=1 // pred_region
      %44 = vsyncadd [#allocation6], 0
      %s45 = sshll.u32 %s4, 4
      %s46 = int_to_ptr.hbm [resolvable:$true] %s45
      %s47 = sshll.u32 [#allocation5], 4
      %s48 = int_to_ptr.vmem [resolvable:$true] %s47
      %53 = dma.hbm_to_vmem [thread:$0]  %s46, 73728, %s48, [#allocation6], 128, 128, 8
    $region21: #{simple_forward.1} parent=1 // pred_fallthru
      _
    // Predicated region
    $region22: #{simple_forward.1} parent=1 // pred_check
      _
    $region23: #{simple_forward.1} parent=1 // pred_check_branch
      %55 = sbr.rel (0) target = $region25
    $region24: #{simple_forward.1} parent=1 // pred_region
      _
    $region25: #{simple_forward.1} parent=1 // pred_fallthru
      _
    // Predicated region
    $region26: #{simple_forward.1} parent=1 // pred_check
      _
    $region27: #{simple_forward.1} parent=1 // pred_check_branch
      %57 = sbr.rel (0) target = $region29
    $region28: #{simple_forward.1} parent=1 // pred_region
      _
    $region29: #{simple_forward.1} parent=1 // pred_fallthru
      _
    // Predicated region
    $region30: #{simple_forward.1} parent=1 // pred_check
      _
    $region31: #{simple_forward.1} parent=1 // pred_check_branch
      %59 = sbr.rel (0) target = $region33
    $region32: #{simple_forward.1} parent=1 // pred_region
      %61 = vsyncadd [#allocation6], 0
      %s62 = sshll.u32 %s7, 4
      %s63 = int_to_ptr.hbm [resolvable:$true] %s62
      %s64 = sshll.u32 [#allocation7], 4
      %s65 = int_to_ptr.vmem [resolvable:$true] %s64
      %70 = dma.hbm_to_vmem [thread:$0]  %s63, 18432, %s65, [#allocation6], 128, 128, 8
    $region33: #{simple_forward.1} parent=1 // pred_fallthru
      _
    // Predicated region
    $region34: #{simple_forward.1} parent=1 // pred_check
      _
    $region35: #{simple_forward.1} parent=1 // pred_check_branch
      %72 = sbr.rel (0) target = $region37
    $region36: #{simple_forward.1} parent=1 // pred_region
      _
    $region37: #{simple_forward.1} parent=1 // pred_fallthru
      _
    // Predicated region
    $region38: #{simple_forward.1} parent=1 // pred_check
      _
    $region39: #{simple_forward.1} parent=1 // pred_check_branch
      %74 = sbr.rel (0) target = $region41
    $region40: #{simple_forward.1} parent=1 // pred_region
      _
    $region41: #{simple_forward.1} parent=1 // pred_fallthru
      _
    // Predicated region
    $region42: #{simple_forward.1} parent=1 // pred_check
      _
    $region43: #{simple_forward.1} parent=1 // pred_check_branch
      %76 = sbr.rel (0) target = $region45
    $region44: #{simple_forward.1} parent=1 // pred_region
      %78 = vsyncadd [#allocation9], 0
      %s79 = sshll.u32 %s10, 4
      %s80 = int_to_ptr.hbm [resolvable:$true] %s79
      %s81 = sshll.u32 [#allocation8], 4
      %s82 = int_to_ptr.vmem [resolvable:$true] %s81
      %87 = dma.hbm_to_vmem [thread:$0]  %s80, 2048, %s82, [#allocation9], 128, 128, 8
    $region45: #{simple_forward.1} parent=1 // pred_fallthru
      _
    // Predicated region
    $region46: #{simple_forward.1} parent=1 // pred_check
      _
    $region47: #{simple_forward.1} parent=1 // pred_check_branch
      %89 = sbr.rel (0) target = $region49
    $region48: #{simple_forward.1} parent=1 // pred_region
      _
    $region49: #{simple_forward.1} parent=1 // pred_fallthru
      _
    // Predicated region
    $region50: #{simple_forward.1} parent=1 // pred_check
      _
    $region51: #{simple_forward.1} parent=1 // pred_check_branch
      %91 = sbr.rel (0) target = $region53
    $region52: #{simple_forward.1} parent=1 // pred_region
      _
    $region53: #{simple_forward.1} parent=1 // pred_fallthru
      _
    // Predicated region
    $region54: #{simple_forward.1} parent=1 // pred_check
      _
    $region55: #{simple_forward.1} parent=1 // pred_check_branch
      %93 = sbr.rel (0) target = $region57
    $region56: #{simple_forward.1} parent=1 // pred_region
      %95 = vsyncadd [#allocation9], 0
      %s96 = sshll.u32 %s13, 4
      %s97 = int_to_ptr.hbm [resolvable:$true] %s96
      %s98 = sshll.u32 [#allocation10], 4
      %s99 = int_to_ptr.vmem [resolvable:$true] %s98
      %104 = dma.hbm_to_vmem [thread:$0]  %s97, 32768, %s99, [#allocation9], 512, 512, 32
    $region57: #{simple_forward.1} parent=1 // pred_fallthru
      _
    // Predicated region
    $region58: #{simple_forward.1} parent=1 // pred_check
      _
    $region59: #{simple_forward.1} parent=1 // pred_check_branch
      %106 = sbr.rel (0) target = $region61
    $region60: #{simple_forward.1} parent=1 // pred_region
      %108 = dma.done [#allocation4], 576
    $region61: #{simple_forward.1} parent=1 // pred_fallthru
      _
    // Predicated region
    $region62: #{simple_forward.1} parent=1 // pred_check
      _
    $region63: #{simple_forward.1} parent=1 // pred_check_branch
      %110 = sbr.rel (0) target = $region65
    $region64: #{simple_forward.1} parent=1 // pred_region
      %112 = dma.done [#allocation6], 73728
    $region65: #{simple_forward.1} parent=1 // pred_fallthru
      _
    // Predicated region
    $region66: #{simple_forward.1} parent=1 // pred_check
      _
    $region67: #{simple_forward.1} parent=1 // pred_check_branch
      %114 = sbr.rel (0) target = $region69
    $region68: #{simple_forward.1} parent=1 // pred_region
      %116 = dma.done [#allocation6], 18432
    $region69: #{simple_forward.1} parent=1 // pred_fallthru
      _
    // Predicated region
    $region70: #{simple_forward.1} parent=1 // pred_check
      _
    $region71: #{simple_forward.1} parent=1 // pred_check_branch
      %118 = sbr.rel (0) target = $region73
    $region72: #{simple_forward.1} parent=1 // pred_region
      %120 = dma.done [#allocation9], 2048
    $region73: #{simple_forward.1} parent=1 // pred_fallthru
      _
    // Predicated region
    $region74: #{simple_forward.1} parent=1 // pred_check
      _
    $region75: #{simple_forward.1} parent=1 // pred_check_branch
      %122 = sbr.rel (0) target = $region77
    $region76: #{simple_forward.1} parent=1 // pred_region
      %124 = dma.done [#allocation9], 32768
    $region77: #{simple_forward.1} parent=1 // pred_fallthru
      _
    %v125 = vld [vmem:[%s0] sm:$0x77]
    %126 = vst [vmem:[#allocation2] sm:$0x77] %v125
    %v127 = vld [vmem:[%s1] sm:$0x3]
    %v128 = vlaneseq
    %vm129 = vcmp.ge.s32.totalorder %v128, 0
    %vm130 = vcmp.lt.s32.totalorder %v128, 256
    %vm131 = vmand %vm129, %vm130
    %s132 = scalar_lea.vmem [#allocation2], 3
    %133 = vst.msk [vmem:[%s132] ss:$4 sm:$0x3] %vm131, %v127
    %s134 = scalar_lea.vmem %s0, 8
    %v135 = vld [vmem:[%s134] sm:$0x77]
    %136 = vst [vmem:[#allocation2 + $0x8] sm:$0x77] %v135
    %s137 = scalar_lea.vmem %s1, 2
    %v138 = vld [vmem:[%s137] sm:$0x3]
    %s139 = scalar_lea.vmem [#allocation2], 11
    %140 = vst.msk [vmem:[%s139] ss:$4 sm:$0x3] %vm131, %v138
    %v141 = vld [vmem:[#allocation2] sm:$0xff]
    %v142 = vld [vmem:[#allocation2 + $0x8] sm:$0xff]
    %v143 = vld [vmem:[#allocation5] sm:$0xff]
    %v144 = vld [vmem:[#allocation5 + $0x8] sm:$0xff]
    %v145 = vld [vmem:[#allocation5 + $0x10] sm:$0xff]
    %v146 = vld [vmem:[#allocation5 + $0x18] sm:$0xff]
    %v147 = vld [vmem:[#allocation5 + $0x20] sm:$0xff]
    %v148 = vld [vmem:[#allocation5 + $0x28] sm:$0xff]
    %v149 = vld [vmem:[#allocation5 + $0x30] sm:$0xff]
    %v150 = vld [vmem:[#allocation5 + $0x38] sm:$0xff]
    %v151 = vld [vmem:[#allocation5 + $0x40] sm:$0xff]
    %v152 = vld [vmem:[#allocation5 + $0x48] sm:$0xff]
    %v153 = vld [vmem:[#allocation5 + $0x50] sm:$0xff]
    %v154 = vld [vmem:[#allocation5 + $0x58] sm:$0xff]
    %v155 = vld [vmem:[#allocation5 + $0x60] sm:$0xff]
    %v156 = vld [vmem:[#allocation5 + $0x68] sm:$0xff]
    %v157 = vld [vmem:[#allocation5 + $0x70] sm:$0xff]
    %v158 = vld [vmem:[#allocation5 + $0x78] sm:$0xff]
    %v159 = vld [vmem:[#allocation5 + $0x80] sm:$0xff]
    %v160 = vld [vmem:[#allocation5 + $0x88] sm:$0xff]
    %v161 = vld [vmem:[#allocation5 + $0x90] sm:$0xff]
    %v162 = vld [vmem:[#allocation5 + $0x98] sm:$0xff]
    %v163 = vld [vmem:[#allocation5 + $0xa0] sm:$0xff]
    %v164 = vld [vmem:[#allocation5 + $0xa8] sm:$0xff]
    %v165 = vld [vmem:[#allocation5 + $0xb0] sm:$0xff]
    %v166 = vld [vmem:[#allocation5 + $0xb8] sm:$0xff]
    %v167 = vld [vmem:[#allocation5 + $0xc0] sm:$0xff]
    %v168 = vld [vmem:[#allocation5 + $0xc8] sm:$0xff]
    %v169 = vld [vmem:[#allocation5 + $0xd0] sm:$0xff]
    %v170 = vld [vmem:[#allocation5 + $0xd8] sm:$0xff]
    %v171 = vld [vmem:[#allocation5 + $0xe0] sm:$0xff]
    %v172 = vld [vmem:[#allocation5 + $0xe8] sm:$0xff]
    %v173 = vld [vmem:[#allocation5 + $0xf0] sm:$0xff]
    %v174 = vld [vmem:[#allocation5 + $0xf8] sm:$0xff]
    %v175 = vld [vmem:[#allocation5 + $0x100] sm:$0xff]
    %v176 = vld [vmem:[#allocation5 + $0x108] sm:$0xff]
    %v177 = vld [vmem:[#allocation5 + $0x110] sm:$0xff]
    %v178 = vld [vmem:[#allocation5 + $0x118] sm:$0xff]
    %v179 = vld [vmem:[#allocation5 + $0x120] sm:$0xff]
    %v180 = vld [vmem:[#allocation5 + $0x128] sm:$0xff]
    %v181 = vld [vmem:[#allocation5 + $0x130] sm:$0xff]
    %v182 = vld [vmem:[#allocation5 + $0x138] sm:$0xff]
    %v183 = vld [vmem:[#allocation5 + $0x140] sm:$0xff]
    %v184 = vld [vmem:[#allocation5 + $0x148] sm:$0xff]
    %v185 = vld [vmem:[#allocation5 + $0x150] sm:$0xff]
    %v186 = vld [vmem:[#allocation5 + $0x158] sm:$0xff]
    %v187 = vld [vmem:[#allocation5 + $0x160] sm:$0xff]
    %v188 = vld [vmem:[#allocation5 + $0x168] sm:$0xff]
    %v189 = vld [vmem:[#allocation5 + $0x170] sm:$0xff]
    %v190 = vld [vmem:[#allocation5 + $0x178] sm:$0xff]
    %v191 = vld [vmem:[#allocation5 + $0x180] sm:$0xff]
    %v192 = vld [vmem:[#allocation5 + $0x188] sm:$0xff]
    %v193 = vld [vmem:[#allocation5 + $0x190] sm:$0xff]
    %v194 = vld [vmem:[#allocation5 + $0x198] sm:$0xff]
    %v195 = vld [vmem:[#allocation5 + $0x1a0] sm:$0xff]
    %v196 = vld [vmem:[#allocation5 + $0x1a8] sm:$0xff]
    %v197 = vld [vmem:[#allocation5 + $0x1b0] sm:$0xff]
    %v198 = vld [vmem:[#allocation5 + $0x1b8] sm:$0xff]
    %v199 = vld [vmem:[#allocation5 + $0x1c0] sm:$0xff]
    %v200 = vld [vmem:[#allocation5 + $0x1c8] sm:$0xff]
    %v201 = vld [vmem:[#allocation5 + $0x1d0] sm:$0xff]
    %v202 = vld [vmem:[#allocation5 + $0x1d8] sm:$0xff]
    %v203 = vld [vmem:[#allocation5 + $0x1e0] sm:$0xff]
    %v204 = vld [vmem:[#allocation5 + $0x1e8] sm:$0xff]
    %v205 = vld [vmem:[#allocation5 + $0x1f0] sm:$0xff]
    %v206 = vld [vmem:[#allocation5 + $0x1f8] sm:$0xff]
    %209 = vst [vmem:[#allocation1] ss:$2 sm:$0xff] %v141
    %s210 = scalar_lea.vmem [#allocation1], 16
    %211 = vst [vmem:[%s210] ss:$2 sm:$0xff] %v142
    %v212 = vld.sshfl [vmem:[#allocation1] sm:$0xff pattern:$0x75316420]
    %v213 = vld.sshfl [vmem:[#allocation1 + $0x8] sm:$0xff pattern:$0x75316420]
    %v214 = vld.sshfl [vmem:[#allocation1 + $0x10] sm:$0xff pattern:$0x75316420]
    %v215 = vld.sshfl [vmem:[#allocation1 + $0x18] sm:$0xff pattern:$0x75316420]
    %220 = vmatpush.msra.mxu0 %v158
    %221 = vmatpush.msra.mxu0 %v157
    %222 = vmatpush.msra.mxu0 %v156
    %223 = vmatpush.msra.mxu0 %v155
    %224 = vmatpush.msra.mxu0 %v154
    %225 = vmatpush.msra.mxu0 %v153
    %226 = vmatpush.msra.mxu0 %v152
    %227 = vmatpush.msra.mxu0 %v151
    %228 = vmatpush.msra.mxu0 %v150
    %229 = vmatpush.msra.mxu0 %v149
    %230 = vmatpush.msra.mxu0 %v148
    %231 = vmatpush.msra.mxu0 %v147
    %232 = vmatpush.msra.mxu0 %v146
    %233 = vmatpush.msra.mxu0 %v145
    %234 = vmatpush.msra.mxu0 %v144
    %235 = vmatpush.msra.mxu0 %v143
    %236 = vmatmul.f32.gmra.mxu0 %v212
    %v237 = vpop.f32.mrf.mxu0
    %v238 = vadd.f32 0.0, %v237
    %239 = vdwg.mxu0
    %240 = vmatpush.msra.mxu0 %v174
    %241 = vmatpush.msra.mxu0 %v173
    %242 = vmatpush.msra.mxu0 %v172
    %243 = vmatpush.msra.mxu0 %v171
    %244 = vmatpush.msra.mxu0 %v170
    %245 = vmatpush.msra.mxu0 %v169
    %246 = vmatpush.msra.mxu0 %v168
    %247 = vmatpush.msra.mxu0 %v167
    %248 = vmatpush.msra.mxu0 %v166
    %249 = vmatpush.msra.mxu0 %v165
    %250 = vmatpush.msra.mxu0 %v164
    %251 = vmatpush.msra.mxu0 %v163
    %252 = vmatpush.msra.mxu0 %v162
    %253 = vmatpush.msra.mxu0 %v161
    %254 = vmatpush.msra.mxu0 %v160
    %255 = vmatpush.msra.mxu0 %v159
    %256 = vmatmul.f32.gmra.mxu0 %v213
    %v257 = vpop.f32.mrf.mxu0
    %v258 = vadd.f32 %v238, %v257
    %259 = vdwg.mxu0
    %260 = vmatpush.msra.mxu0 %v190
    %261 = vmatpush.msra.mxu0 %v189
    %262 = vmatpush.msra.mxu0 %v188
    %263 = vmatpush.msra.mxu0 %v187
    %264 = vmatpush.msra.mxu0 %v186
    %265 = vmatpush.msra.mxu0 %v185
    %266 = vmatpush.msra.mxu0 %v184
    %267 = vmatpush.msra.mxu0 %v183
    %268 = vmatpush.msra.mxu0 %v182
    %269 = vmatpush.msra.mxu0 %v181
    %270 = vmatpush.msra.mxu0 %v180
    %271 = vmatpush.msra.mxu0 %v179
    %272 = vmatpush.msra.mxu0 %v178
    %273 = vmatpush.msra.mxu0 %v177
    %274 = vmatpush.msra.mxu0 %v176
    %275 = vmatpush.msra.mxu0 %v175
    %276 = vmatmul.f32.gmra.mxu0 %v214
    %v277 = vpop.f32.mrf.mxu0
    %v278 = vadd.f32 %v258, %v277
    %279 = vdwg.mxu0
    %280 = vmatpush.msra.mxu0 %v206
    %281 = vmatpush.msra.mxu0 %v205
    %282 = vmatpush.msra.mxu0 %v204
    %283 = vmatpush.msra.mxu0 %v203
    %284 = vmatpush.msra.mxu0 %v202
    %285 = vmatpush.msra.mxu0 %v201
    %286 = vmatpush.msra.mxu0 %v200
    %287 = vmatpush.msra.mxu0 %v199
    %288 = vmatpush.msra.mxu0 %v198
    %289 = vmatpush.msra.mxu0 %v197
    %290 = vmatpush.msra.mxu0 %v196
    %291 = vmatpush.msra.mxu0 %v195
    %292 = vmatpush.msra.mxu0 %v194
    %293 = vmatpush.msra.mxu0 %v193
    %294 = vmatpush.msra.mxu0 %v192
    %295 = vmatpush.msra.mxu0 %v191
    %296 = vmatmul.f32.gmra.mxu0 %v215
    %v297 = vpop.f32.mrf.mxu0
    %v298 = vadd.f32 %v278, %v297
    %299 = vdwg.mxu0
    %v300 = vld [vmem:[#allocation3] sm:$0xf]
    %s301 = scalar_lea.vmem [#allocation5], 512
    %v302 = vld [vmem:[%s301] sm:$0xff]
    %v303 = vld [vmem:[%s301 + $0x8] sm:$0xff]
    %v304 = vld [vmem:[%s301 + $0x10] sm:$0xff]
    %v305 = vld [vmem:[%s301 + $0x18] sm:$0xff]
    %v306 = vld [vmem:[%s301 + $0x20] sm:$0xff]
    %v307 = vld [vmem:[%s301 + $0x28] sm:$0xff]
    %v308 = vld [vmem:[%s301 + $0x30] sm:$0xff]
    %v309 = vld [vmem:[%s301 + $0x38] sm:$0xff]
    %v310 = vld [vmem:[%s301 + $0x40] sm:$0xff]
    %v311 = vld [vmem:[%s301 + $0x48] sm:$0xff]
    %v312 = vld [vmem:[%s301 + $0x50] sm:$0xff]
    %v313 = vld [vmem:[%s301 + $0x58] sm:$0xff]
    %v314 = vld [vmem:[%s301 + $0x60] sm:$0xff]
    %v315 = vld [vmem:[%s301 + $0x68] sm:$0xff]
    %v316 = vld [vmem:[%s301 + $0x70] sm:$0xff]
    %v317 = vld [vmem:[%s301 + $0x78] sm:$0xff]
    %v318 = vld [vmem:[%s301 + $0x80] sm:$0xff]
    %v319 = vld [vmem:[%s301 + $0x88] sm:$0xff]
    %v320 = vld [vmem:[%s301 + $0x90] sm:$0xff]
    %v321 = vld [vmem:[%s301 + $0x98] sm:$0xff]
    %v322 = vld [vmem:[%s301 + $0xa0] sm:$0xff]
    %v323 = vld [vmem:[%s301 + $0xa8] sm:$0xff]
    %v324 = vld [vmem:[%s301 + $0xb0] sm:$0xff]
    %v325 = vld [vmem:[%s301 + $0xb8] sm:$0xff]
    %v326 = vld [vmem:[%s301 + $0xc0] sm:$0xff]
    %v327 = vld [vmem:[%s301 + $0xc8] sm:$0xff]
    %v328 = vld [vmem:[%s301 + $0xd0] sm:$0xff]
    %v329 = vld [vmem:[%s301 + $0xd8] sm:$0xff]
    %v330 = vld [vmem:[%s301 + $0xe0] sm:$0xff]
    %v331 = vld [vmem:[%s301 + $0xe8] sm:$0xff]
    %v332 = vld [vmem:[%s301 + $0xf0] sm:$0xff]
    %v333 = vld [vmem:[%s301 + $0xf8] sm:$0xff]
    %v334 = vld [vmem:[%s301 + $0x100] sm:$0xff]
    %v335 = vld [vmem:[%s301 + $0x108] sm:$0xff]
    %v336 = vld [vmem:[%s301 + $0x110] sm:$0xff]
    %v337 = vld [vmem:[%s301 + $0x118] sm:$0xff]
    %v338 = vld [vmem:[%s301 + $0x120] sm:$0xff]
    %v339 = vld [vmem:[%s301 + $0x128] sm:$0xff]
    %v340 = vld [vmem:[%s301 + $0x130] sm:$0xff]
    %v341 = vld [vmem:[%s301 + $0x138] sm:$0xff]
    %v342 = vld [vmem:[%s301 + $0x140] sm:$0xff]
    %v343 = vld [vmem:[%s301 + $0x148] sm:$0xff]
    %v344 = vld [vmem:[%s301 + $0x150] sm:$0xff]
    %v345 = vld [vmem:[%s301 + $0x158] sm:$0xff]
    %v346 = vld [vmem:[%s301 + $0x160] sm:$0xff]
    %v347 = vld [vmem:[%s301 + $0x168] sm:$0xff]
    %v348 = vld [vmem:[%s301 + $0x170] sm:$0xff]
    %v349 = vld [vmem:[%s301 + $0x178] sm:$0xff]
    %v350 = vld [vmem:[%s301 + $0x180] sm:$0xff]
    %v351 = vld [vmem:[%s301 + $0x188] sm:$0xff]
    %v352 = vld [vmem:[%s301 + $0x190] sm:$0xff]
    %v353 = vld [vmem:[%s301 + $0x198] sm:$0xff]
    %v354 = vld [vmem:[%s301 + $0x1a0] sm:$0xff]
    %v355 = vld [vmem:[%s301 + $0x1a8] sm:$0xff]
    %v356 = vld [vmem:[%s301 + $0x1b0] sm:$0xff]
    %v357 = vld [vmem:[%s301 + $0x1b8] sm:$0xff]
    %v358 = vld [vmem:[%s301 + $0x1c0] sm:$0xff]
    %v359 = vld [vmem:[%s301 + $0x1c8] sm:$0xff]
    %v360 = vld [vmem:[%s301 + $0x1d0] sm:$0xff]
    %v361 = vld [vmem:[%s301 + $0x1d8] sm:$0xff]
    %v362 = vld [vmem:[%s301 + $0x1e0] sm:$0xff]
    %v363 = vld [vmem:[%s301 + $0x1e8] sm:$0xff]
    %v364 = vld [vmem:[%s301 + $0x1f0] sm:$0xff]
    %v365 = vld [vmem:[%s301 + $0x1f8] sm:$0xff]
    %366 = vst [vmem:[#allocation1] ss:$2 sm:$0xff] %v141
    %s367 = scalar_lea.vmem [#allocation1], 16
    %368 = vst [vmem:[%s367] ss:$2 sm:$0xff] %v142
    %v369 = vld.sshfl [vmem:[#allocation1] sm:$0xff pattern:$0x75316420]
    %v370 = vld.sshfl [vmem:[#allocation1 + $0x8] sm:$0xff pattern:$0x75316420]
    %v371 = vld.sshfl [vmem:[#allocation1 + $0x10] sm:$0xff pattern:$0x75316420]
    %v372 = vld.sshfl [vmem:[#allocation1 + $0x18] sm:$0xff pattern:$0x75316420]
    %377 = vmatpush.msra.mxu0 %v317
    %378 = vmatpush.msra.mxu0 %v316
    %379 = vmatpush.msra.mxu0 %v315
    %380 = vmatpush.msra.mxu0 %v314
    %381 = vmatpush.msra.mxu0 %v313
    %382 = vmatpush.msra.mxu0 %v312
    %383 = vmatpush.msra.mxu0 %v311
    %384 = vmatpush.msra.mxu0 %v310
    %385 = vmatpush.msra.mxu0 %v309
    %386 = vmatpush.msra.mxu0 %v308
    %387 = vmatpush.msra.mxu0 %v307
    %388 = vmatpush.msra.mxu0 %v306
    %389 = vmatpush.msra.mxu0 %v305
    %390 = vmatpush.msra.mxu0 %v304
    %391 = vmatpush.msra.mxu0 %v303
    %392 = vmatpush.msra.mxu0 %v302
    %393 = vmatmul.f32.gmra.mxu0 %v369
    %v394 = vpop.f32.mrf.mxu0
    %v395 = vadd.f32 0.0, %v394
    %396 = vdwg.mxu0
    %397 = vmatpush.msra.mxu0 %v333
    %398 = vmatpush.msra.mxu0 %v332
    %399 = vmatpush.msra.mxu0 %v331
    %400 = vmatpush.msra.mxu0 %v330
    %401 = vmatpush.msra.mxu0 %v329
    %402 = vmatpush.msra.mxu0 %v328
    %403 = vmatpush.msra.mxu0 %v327
    %404 = vmatpush.msra.mxu0 %v326
    %405 = vmatpush.msra.mxu0 %v325
    %406 = vmatpush.msra.mxu0 %v324
    %407 = vmatpush.msra.mxu0 %v323
    %408 = vmatpush.msra.mxu0 %v322
    %409 = vmatpush.msra.mxu0 %v321
    %410 = vmatpush.msra.mxu0 %v320
    %411 = vmatpush.msra.mxu0 %v319
    %412 = vmatpush.msra.mxu0 %v318
    %413 = vmatmul.f32.gmra.mxu0 %v370
    %v414 = vpop.f32.mrf.mxu0
    %v415 = vadd.f32 %v395, %v414
    %416 = vdwg.mxu0
    %417 = vmatpush.msra.mxu0 %v349
    %418 = vmatpush.msra.mxu0 %v348
    %419 = vmatpush.msra.mxu0 %v347
    %420 = vmatpush.msra.mxu0 %v346
    %421 = vmatpush.msra.mxu0 %v345
    %422 = vmatpush.msra.mxu0 %v344
    %423 = vmatpush.msra.mxu0 %v343
    %424 = vmatpush.msra.mxu0 %v342
    %425 = vmatpush.msra.mxu0 %v341
    %426 = vmatpush.msra.mxu0 %v340
    %427 = vmatpush.msra.mxu0 %v339
    %428 = vmatpush.msra.mxu0 %v338
    %429 = vmatpush.msra.mxu0 %v337
    %430 = vmatpush.msra.mxu0 %v336
    %431 = vmatpush.msra.mxu0 %v335
    %432 = vmatpush.msra.mxu0 %v334
    %433 = vmatmul.f32.gmra.mxu0 %v371
    %v434 = vpop.f32.mrf.mxu0
    %v435 = vadd.f32 %v415, %v434
    %436 = vdwg.mxu0
    %437 = vmatpush.msra.mxu0 %v365
    %438 = vmatpush.msra.mxu0 %v364
    %439 = vmatpush.msra.mxu0 %v363
    %440 = vmatpush.msra.mxu0 %v362
    %441 = vmatpush.msra.mxu0 %v361
    %442 = vmatpush.msra.mxu0 %v360
    %443 = vmatpush.msra.mxu0 %v359
    %444 = vmatpush.msra.mxu0 %v358
    %445 = vmatpush.msra.mxu0 %v357
    %446 = vmatpush.msra.mxu0 %v356
    %447 = vmatpush.msra.mxu0 %v355
    %448 = vmatpush.msra.mxu0 %v354
    %449 = vmatpush.msra.mxu0 %v353
    %450 = vmatpush.msra.mxu0 %v352
    %451 = vmatpush.msra.mxu0 %v351
    %452 = vmatpush.msra.mxu0 %v350
    %453 = vmatmul.f32.gmra.mxu0 %v372
    %v454 = vpop.f32.mrf.mxu0
    %v455 = vadd.f32 %v435, %v454
    %456 = vdwg.mxu0
    %s457 = scalar_lea.vmem [#allocation3], 4
    %v458 = vld [vmem:[%s457] sm:$0xf]
    %vm459 = vcmask 31744
    %v461 = vsel %vm459, %v458, 0
    %vm463 = vcmask 1043456
    %v465 = vsel %vm463, %v455, 0
    %467 = vmatpush.msra.mxu0 0.0
    %468 = vmatpush.msra.mxu0 0.0
    %469 = vmatpush.msra.mxu0 0.0
    %470 = vmatpush.msra.mxu0 0.0
    %471 = vmatpush.msra.mxu0 0.0
    %472 = vmatpush.msra.mxu0 0.0
    %473 = vmatpush.msra.mxu0 0.0
    %474 = vmatpush.msra.mxu0 0.0
    %475 = vmatpush.msra.mxu0 0.0
    %476 = vmatpush.msra.mxu0 0.0
    %477 = vmatpush.msra.mxu0 0.0
    %478 = vmatpush.msra.mxu0 0.0
    %479 = vmatpush.msra.mxu0 0.0
    %480 = vmatpush.msra.mxu0 0.0
    %481 = vmatpush.msra.mxu0 0.0
    %482 = vmatpush.msra.mxu0 %v465
    %483 = vmatmul.f32.gmra.mxu0 %v461
    %v484 = vpop.f32.mrf.mxu0
    %v485 = vadd.f32 0.0, %v484
    %486 = vdwg.mxu0
    %v488 = vsel %vm459, %v300, 0
    %v491 = vsel %vm463, %v298, 0
    %493 = vmatpush.msra.mxu0 0.0
    %494 = vmatpush.msra.mxu0 0.0
    %495 = vmatpush.msra.mxu0 0.0
    %496 = vmatpush.msra.mxu0 0.0
    %497 = vmatpush.msra.mxu0 0.0
    %498 = vmatpush.msra.mxu0 0.0
    %499 = vmatpush.msra.mxu0 0.0
    %500 = vmatpush.msra.mxu0 0.0
    %501 = vmatpush.msra.mxu0 0.0
    %502 = vmatpush.msra.mxu0 0.0
    %503 = vmatpush.msra.mxu0 0.0
    %504 = vmatpush.msra.mxu0 0.0
    %505 = vmatpush.msra.mxu0 0.0
    %506 = vmatpush.msra.mxu0 0.0
    %507 = vmatpush.msra.mxu0 0.0
    %508 = vmatpush.msra.mxu0 %v491
    %509 = vmatmul.f32.gmra.mxu0 %v488
    %v510 = vpop.f32.mrf.mxu0
    %v511 = vadd.f32 %v485, %v510
    %512 = vdwg.mxu0
    %s513 = scalar_lea.vmem [#allocation5], 1024
    %v514 = vld [vmem:[%s513] sm:$0xff]
    %v515 = vld [vmem:[%s513 + $0x8] sm:$0xff]
    %v516 = vld [vmem:[%s513 + $0x10] sm:$0xff]
    %v517 = vld [vmem:[%s513 + $0x18] sm:$0xff]
    %v518 = vld [vmem:[%s513 + $0x20] sm:$0xff]
    %v519 = vld [vmem:[%s513 + $0x28] sm:$0xff]
    %v520 = vld [vmem:[%s513 + $0x30] sm:$0xff]
    %v521 = vld [vmem:[%s513 + $0x38] sm:$0xff]
    %v522 = vld [vmem:[%s513 + $0x40] sm:$0xff]
    %v523 = vld [vmem:[%s513 + $0x48] sm:$0xff]
    %v524 = vld [vmem:[%s513 + $0x50] sm:$0xff]
    %v525 = vld [vmem:[%s513 + $0x58] sm:$0xff]
    %v526 = vld [vmem:[%s513 + $0x60] sm:$0xff]
    %v527 = vld [vmem:[%s513 + $0x68] sm:$0xff]
    %v528 = vld [vmem:[%s513 + $0x70] sm:$0xff]
    %v529 = vld [vmem:[%s513 + $0x78] sm:$0xff]
    %v530 = vld [vmem:[%s513 + $0x80] sm:$0xff]
    %v531 = vld [vmem:[%s513 + $0x88] sm:$0xff]
    %v532 = vld [vmem:[%s513 + $0x90] sm:$0xff]
    %v533 = vld [vmem:[%s513 + $0x98] sm:$0xff]
    %v534 = vld [vmem:[%s513 + $0xa0] sm:$0xff]
    %v535 = vld [vmem:[%s513 + $0xa8] sm:$0xff]
    %v536 = vld [vmem:[%s513 + $0xb0] sm:$0xff]
    %v537 = vld [vmem:[%s513 + $0xb8] sm:$0xff]
    %v538 = vld [vmem:[%s513 + $0xc0] sm:$0xff]
    %v539 = vld [vmem:[%s513 + $0xc8] sm:$0xff]
    %v540 = vld [vmem:[%s513 + $0xd0] sm:$0xff]
    %v541 = vld [vmem:[%s513 + $0xd8] sm:$0xff]
    %v542 = vld [vmem:[%s513 + $0xe0] sm:$0xff]
    %v543 = vld [vmem:[%s513 + $0xe8] sm:$0xff]
    %v544 = vld [vmem:[%s513 + $0xf0] sm:$0xff]
    %v545 = vld [vmem:[%s513 + $0xf8] sm:$0xff]
    %v546 = vld [vmem:[%s513 + $0x100] sm:$0xff]
    %v547 = vld [vmem:[%s513 + $0x108] sm:$0xff]
    %v548 = vld [vmem:[%s513 + $0x110] sm:$0xff]
    %v549 = vld [vmem:[%s513 + $0x118] sm:$0xff]
    %v550 = vld [vmem:[%s513 + $0x120] sm:$0xff]
    %v551 = vld [vmem:[%s513 + $0x128] sm:$0xff]
    %v552 = vld [vmem:[%s513 + $0x130] sm:$0xff]
    %v553 = vld [vmem:[%s513 + $0x138] sm:$0xff]
    %v554 = vld [vmem:[%s513 + $0x140] sm:$0xff]
    %v555 = vld [vmem:[%s513 + $0x148] sm:$0xff]
    %v556 = vld [vmem:[%s513 + $0x150] sm:$0xff]
    %v557 = vld [vmem:[%s513 + $0x158] sm:$0xff]
    %v558 = vld [vmem:[%s513 + $0x160] sm:$0xff]
    %v559 = vld [vmem:[%s513 + $0x168] sm:$0xff]
    %v560 = vld [vmem:[%s513 + $0x170] sm:$0xff]
    %v561 = vld [vmem:[%s513 + $0x178] sm:$0xff]
    %v562 = vld [vmem:[%s513 + $0x180] sm:$0xff]
    %v563 = vld [vmem:[%s513 + $0x188] sm:$0xff]
    %v564 = vld [vmem:[%s513 + $0x190] sm:$0xff]
    %v565 = vld [vmem:[%s513 + $0x198] sm:$0xff]
    %v566 = vld [vmem:[%s513 + $0x1a0] sm:$0xff]
    %v567 = vld [vmem:[%s513 + $0x1a8] sm:$0xff]
    %v568 = vld [vmem:[%s513 + $0x1b0] sm:$0xff]
    %v569 = vld [vmem:[%s513 + $0x1b8] sm:$0xff]
    %v570 = vld [vmem:[%s513 + $0x1c0] sm:$0xff]
    %v571 = vld [vmem:[%s513 + $0x1c8] sm:$0xff]
    %v572 = vld [vmem:[%s513 + $0x1d0] sm:$0xff]
    %v573 = vld [vmem:[%s513 + $0x1d8] sm:$0xff]
    %v574 = vld [vmem:[%s513 + $0x1e0] sm:$0xff]
    %v575 = vld [vmem:[%s513 + $0x1e8] sm:$0xff]
    %v576 = vld [vmem:[%s513 + $0x1f0] sm:$0xff]
    %v577 = vld [vmem:[%s513 + $0x1f8] sm:$0xff]
    %578 = vst [vmem:[#allocation1] ss:$2 sm:$0xff] %v141
    %s579 = scalar_lea.vmem [#allocation1], 16
    %580 = vst [vmem:[%s579] ss:$2 sm:$0xff] %v142
    %v581 = vld.sshfl [vmem:[#allocation1] sm:$0xff pattern:$0x75316420]
    %v582 = vld.sshfl [vmem:[#allocation1 + $0x8] sm:$0xff pattern:$0x75316420]
    %v583 = vld.sshfl [vmem:[#allocation1 + $0x10] sm:$0xff pattern:$0x75316420]
    %v584 = vld.sshfl [vmem:[#allocation1 + $0x18] sm:$0xff pattern:$0x75316420]
    %589 = vmatpush.msra.mxu0 %v529
    %590 = vmatpush.msra.mxu0 %v528
    %591 = vmatpush.msra.mxu0 %v527
    %592 = vmatpush.msra.mxu0 %v526
    %593 = vmatpush.msra.mxu0 %v525
    %594 = vmatpush.msra.mxu0 %v524
    %595 = vmatpush.msra.mxu0 %v523
    %596 = vmatpush.msra.mxu0 %v522
    %597 = vmatpush.msra.mxu0 %v521
    %598 = vmatpush.msra.mxu0 %v520
    %599 = vmatpush.msra.mxu0 %v519
    %600 = vmatpush.msra.mxu0 %v518
    %601 = vmatpush.msra.mxu0 %v517
    %602 = vmatpush.msra.mxu0 %v516
    %603 = vmatpush.msra.mxu0 %v515
    %604 = vmatpush.msra.mxu0 %v514
    %605 = vmatmul.f32.gmra.mxu0 %v581
    %v606 = vpop.f32.mrf.mxu0
    %v607 = vadd.f32 0.0, %v606
    %608 = vdwg.mxu0
    %609 = vmatpush.msra.mxu0 %v545
    %610 = vmatpush.msra.mxu0 %v544
    %611 = vmatpush.msra.mxu0 %v543
    %612 = vmatpush.msra.mxu0 %v542
    %613 = vmatpush.msra.mxu0 %v541
    %614 = vmatpush.msra.mxu0 %v540
    %615 = vmatpush.msra.mxu0 %v539
    %616 = vmatpush.msra.mxu0 %v538
    %617 = vmatpush.msra.mxu0 %v537
    %618 = vmatpush.msra.mxu0 %v536
    %619 = vmatpush.msra.mxu0 %v535
    %620 = vmatpush.msra.mxu0 %v534
    %621 = vmatpush.msra.mxu0 %v533
    %622 = vmatpush.msra.mxu0 %v532
    %623 = vmatpush.msra.mxu0 %v531
    %624 = vmatpush.msra.mxu0 %v530
    %625 = vmatmul.f32.gmra.mxu0 %v582
    %v626 = vpop.f32.mrf.mxu0
    %v627 = vadd.f32 %v607, %v626
    %628 = vdwg.mxu0
    %629 = vmatpush.msra.mxu0 %v561
    %630 = vmatpush.msra.mxu0 %v560
    %631 = vmatpush.msra.mxu0 %v559
    %632 = vmatpush.msra.mxu0 %v558
    %633 = vmatpush.msra.mxu0 %v557
    %634 = vmatpush.msra.mxu0 %v556
    %635 = vmatpush.msra.mxu0 %v555
    %636 = vmatpush.msra.mxu0 %v554
    %637 = vmatpush.msra.mxu0 %v553
    %638 = vmatpush.msra.mxu0 %v552
    %639 = vmatpush.msra.mxu0 %v551
    %640 = vmatpush.msra.mxu0 %v550
    %641 = vmatpush.msra.mxu0 %v549
    %642 = vmatpush.msra.mxu0 %v548
    %643 = vmatpush.msra.mxu0 %v547
    %644 = vmatpush.msra.mxu0 %v546
    %645 = vmatmul.f32.gmra.mxu0 %v583
    %v646 = vpop.f32.mrf.mxu0
    %v647 = vadd.f32 %v627, %v646
    %648 = vdwg.mxu0
    %649 = vmatpush.msra.mxu0 %v577
    %650 = vmatpush.msra.mxu0 %v576
    %651 = vmatpush.msra.mxu0 %v575
    %652 = vmatpush.msra.mxu0 %v574
    %653 = vmatpush.msra.mxu0 %v573
    %654 = vmatpush.msra.mxu0 %v572
    %655 = vmatpush.msra.mxu0 %v571
    %656 = vmatpush.msra.mxu0 %v570
    %657 = vmatpush.msra.mxu0 %v569
    %658 = vmatpush.msra.mxu0 %v568
    %659 = vmatpush.msra.mxu0 %v567
    %660 = vmatpush.msra.mxu0 %v566
    %661 = vmatpush.msra.mxu0 %v565
    %662 = vmatpush.msra.mxu0 %v564
    %663 = vmatpush.msra.mxu0 %v563
    %664 = vmatpush.msra.mxu0 %v562
    %665 = vmatmul.f32.gmra.mxu0 %v584
    %v666 = vpop.f32.mrf.mxu0
    %v667 = vadd.f32 %v647, %v666
    %668 = vdwg.mxu0
    %s669 = scalar_lea.vmem [#allocation3], 8
    %v670 = vld [vmem:[%s669] sm:$0xf]
    %v672 = vsel %vm459, %v670, 0
    %v675 = vsel %vm463, %v667, 0
    %677 = vmatpush.msra.mxu0 0.0
    %678 = vmatpush.msra.mxu0 0.0
    %679 = vmatpush.msra.mxu0 0.0
    %680 = vmatpush.msra.mxu0 0.0
    %681 = vmatpush.msra.mxu0 0.0
    %682 = vmatpush.msra.mxu0 0.0
    %683 = vmatpush.msra.mxu0 0.0
    %684 = vmatpush.msra.mxu0 0.0
    %685 = vmatpush.msra.mxu0 0.0
    %686 = vmatpush.msra.mxu0 0.0
    %687 = vmatpush.msra.mxu0 0.0
    %688 = vmatpush.msra.mxu0 0.0
    %689 = vmatpush.msra.mxu0 0.0
    %690 = vmatpush.msra.mxu0 0.0
    %691 = vmatpush.msra.mxu0 0.0
    %692 = vmatpush.msra.mxu0 %v675
    %693 = vmatmul.f32.gmra.mxu0 %v672
    %v694 = vpop.f32.mrf.mxu0
    %v695 = vadd.f32 0.0, %v694
    %696 = vdwg.mxu0
    %v697 = vadd.f32 %v511, %v695
    %s698 = scalar_lea.vmem [#allocation5], 1536
    %v699 = vld [vmem:[%s698] sm:$0xff]
    %v700 = vld [vmem:[%s698 + $0x8] sm:$0xff]
    %v701 = vld [vmem:[%s698 + $0x10] sm:$0xff]
    %v702 = vld [vmem:[%s698 + $0x18] sm:$0xff]
    %v703 = vld [vmem:[%s698 + $0x20] sm:$0xff]
    %v704 = vld [vmem:[%s698 + $0x28] sm:$0xff]
    %v705 = vld [vmem:[%s698 + $0x30] sm:$0xff]
    %v706 = vld [vmem:[%s698 + $0x38] sm:$0xff]
    %v707 = vld [vmem:[%s698 + $0x40] sm:$0xff]
    %v708 = vld [vmem:[%s698 + $0x48] sm:$0xff]
    %v709 = vld [vmem:[%s698 + $0x50] sm:$0xff]
    %v710 = vld [vmem:[%s698 + $0x58] sm:$0xff]
    %v711 = vld [vmem:[%s698 + $0x60] sm:$0xff]
    %v712 = vld [vmem:[%s698 + $0x68] sm:$0xff]
    %v713 = vld [vmem:[%s698 + $0x70] sm:$0xff]
    %v714 = vld [vmem:[%s698 + $0x78] sm:$0xff]
    %v715 = vld [vmem:[%s698 + $0x80] sm:$0xff]
    %v716 = vld [vmem:[%s698 + $0x88] sm:$0xff]
    %v717 = vld [vmem:[%s698 + $0x90] sm:$0xff]
    %v718 = vld [vmem:[%s698 + $0x98] sm:$0xff]
    %v719 = vld [vmem:[%s698 + $0xa0] sm:$0xff]
    %v720 = vld [vmem:[%s698 + $0xa8] sm:$0xff]
    %v721 = vld [vmem:[%s698 + $0xb0] sm:$0xff]
    %v722 = vld [vmem:[%s698 + $0xb8] sm:$0xff]
    %v723 = vld [vmem:[%s698 + $0xc0] sm:$0xff]
    %v724 = vld [vmem:[%s698 + $0xc8] sm:$0xff]
    %v725 = vld [vmem:[%s698 + $0xd0] sm:$0xff]
    %v726 = vld [vmem:[%s698 + $0xd8] sm:$0xff]
    %v727 = vld [vmem:[%s698 + $0xe0] sm:$0xff]
    %v728 = vld [vmem:[%s698 + $0xe8] sm:$0xff]
    %v729 = vld [vmem:[%s698 + $0xf0] sm:$0xff]
    %v730 = vld [vmem:[%s698 + $0xf8] sm:$0xff]
    %v731 = vld [vmem:[%s698 + $0x100] sm:$0xff]
    %v732 = vld [vmem:[%s698 + $0x108] sm:$0xff]
    %v733 = vld [vmem:[%s698 + $0x110] sm:$0xff]
    %v734 = vld [vmem:[%s698 + $0x118] sm:$0xff]
    %v735 = vld [vmem:[%s698 + $0x120] sm:$0xff]
    %v736 = vld [vmem:[%s698 + $0x128] sm:$0xff]
    %v737 = vld [vmem:[%s698 + $0x130] sm:$0xff]
    %v738 = vld [vmem:[%s698 + $0x138] sm:$0xff]
    %v739 = vld [vmem:[%s698 + $0x140] sm:$0xff]
    %v740 = vld [vmem:[%s698 + $0x148] sm:$0xff]
    %v741 = vld [vmem:[%s698 + $0x150] sm:$0xff]
    %v742 = vld [vmem:[%s698 + $0x158] sm:$0xff]
    %v743 = vld [vmem:[%s698 + $0x160] sm:$0xff]
    %v744 = vld [vmem:[%s698 + $0x168] sm:$0xff]
    %v745 = vld [vmem:[%s698 + $0x170] sm:$0xff]
    %v746 = vld [vmem:[%s698 + $0x178] sm:$0xff]
    %v747 = vld [vmem:[%s698 + $0x180] sm:$0xff]
    %v748 = vld [vmem:[%s698 + $0x188] sm:$0xff]
    %v749 = vld [vmem:[%s698 + $0x190] sm:$0xff]
    %v750 = vld [vmem:[%s698 + $0x198] sm:$0xff]
    %v751 = vld [vmem:[%s698 + $0x1a0] sm:$0xff]
    %v752 = vld [vmem:[%s698 + $0x1a8] sm:$0xff]
    %v753 = vld [vmem:[%s698 + $0x1b0] sm:$0xff]
    %v754 = vld [vmem:[%s698 + $0x1b8] sm:$0xff]
    %v755 = vld [vmem:[%s698 + $0x1c0] sm:$0xff]
    %v756 = vld [vmem:[%s698 + $0x1c8] sm:$0xff]
    %v757 = vld [vmem:[%s698 + $0x1d0] sm:$0xff]
    %v758 = vld [vmem:[%s698 + $0x1d8] sm:$0xff]
    %v759 = vld [vmem:[%s698 + $0x1e0] sm:$0xff]
    %v760 = vld [vmem:[%s698 + $0x1e8] sm:$0xff]
    %v761 = vld [vmem:[%s698 + $0x1f0] sm:$0xff]
    %v762 = vld [vmem:[%s698 + $0x1f8] sm:$0xff]
    %763 = vst [vmem:[#allocation1] ss:$2 sm:$0xff] %v141
    %s764 = scalar_lea.vmem [#allocation1], 16
    %765 = vst [vmem:[%s764] ss:$2 sm:$0xff] %v142
    %v766 = vld.sshfl [vmem:[#allocation1] sm:$0xff pattern:$0x75316420]
    %v767 = vld.sshfl [vmem:[#allocation1 + $0x8] sm:$0xff pattern:$0x75316420]
    %v768 = vld.sshfl [vmem:[#allocation1 + $0x10] sm:$0xff pattern:$0x75316420]
    %v769 = vld.sshfl [vmem:[#allocation1 + $0x18] sm:$0xff pattern:$0x75316420]
    %774 = vmatpush.msra.mxu0 %v714
    %775 = vmatpush.msra.mxu0 %v713
    %776 = vmatpush.msra.mxu0 %v712
    %777 = vmatpush.msra.mxu0 %v711
    %778 = vmatpush.msra.mxu0 %v710
    %779 = vmatpush.msra.mxu0 %v709
    %780 = vmatpush.msra.mxu0 %v708
    %781 = vmatpush.msra.mxu0 %v707
    %782 = vmatpush.msra.mxu0 %v706
    %783 = vmatpush.msra.mxu0 %v705
    %784 = vmatpush.msra.mxu0 %v704
    %785 = vmatpush.msra.mxu0 %v703
    %786 = vmatpush.msra.mxu0 %v702
    %787 = vmatpush.msra.mxu0 %v701
    %788 = vmatpush.msra.mxu0 %v700
    %789 = vmatpush.msra.mxu0 %v699
    %790 = vmatmul.f32.gmra.mxu0 %v766
    %v791 = vpop.f32.mrf.mxu0
    %v792 = vadd.f32 0.0, %v791
    %793 = vdwg.mxu0
    %794 = vmatpush.msra.mxu0 %v730
    %795 = vmatpush.msra.mxu0 %v729
    %796 = vmatpush.msra.mxu0 %v728
    %797 = vmatpush.msra.mxu0 %v727
    %798 = vmatpush.msra.mxu0 %v726
    %799 = vmatpush.msra.mxu0 %v725
    %800 = vmatpush.msra.mxu0 %v724
    %801 = vmatpush.msra.mxu0 %v723
    %802 = vmatpush.msra.mxu0 %v722
    %803 = vmatpush.msra.mxu0 %v721
    %804 = vmatpush.msra.mxu0 %v720
    %805 = vmatpush.msra.mxu0 %v719
    %806 = vmatpush.msra.mxu0 %v718
    %807 = vmatpush.msra.mxu0 %v717
    %808 = vmatpush.msra.mxu0 %v716
    %809 = vmatpush.msra.mxu0 %v715
    %810 = vmatmul.f32.gmra.mxu0 %v767
    %v811 = vpop.f32.mrf.mxu0
    %v812 = vadd.f32 %v792, %v811
    %813 = vdwg.mxu0
    %814 = vmatpush.msra.mxu0 %v746
    %815 = vmatpush.msra.mxu0 %v745
    %816 = vmatpush.msra.mxu0 %v744
    %817 = vmatpush.msra.mxu0 %v743
    %818 = vmatpush.msra.mxu0 %v742
    %819 = vmatpush.msra.mxu0 %v741
    %820 = vmatpush.msra.mxu0 %v740
    %821 = vmatpush.msra.mxu0 %v739
    %822 = vmatpush.msra.mxu0 %v738
    %823 = vmatpush.msra.mxu0 %v737
    %824 = vmatpush.msra.mxu0 %v736
    %825 = vmatpush.msra.mxu0 %v735
    %826 = vmatpush.msra.mxu0 %v734
    %827 = vmatpush.msra.mxu0 %v733
    %828 = vmatpush.msra.mxu0 %v732
    %829 = vmatpush.msra.mxu0 %v731
    %830 = vmatmul.f32.gmra.mxu0 %v768
    %v831 = vpop.f32.mrf.mxu0
    %v832 = vadd.f32 %v812, %v831
    %833 = vdwg.mxu0
    %834 = vmatpush.msra.mxu0 %v762
    %835 = vmatpush.msra.mxu0 %v761
    %836 = vmatpush.msra.mxu0 %v760
    %837 = vmatpush.msra.mxu0 %v759
    %838 = vmatpush.msra.mxu0 %v758
    %839 = vmatpush.msra.mxu0 %v757
    %840 = vmatpush.msra.mxu0 %v756
    %841 = vmatpush.msra.mxu0 %v755
    %842 = vmatpush.msra.mxu0 %v754
    %843 = vmatpush.msra.mxu0 %v753
    %844 = vmatpush.msra.mxu0 %v752
    %845 = vmatpush.msra.mxu0 %v751
    %846 = vmatpush.msra.mxu0 %v750
    %847 = vmatpush.msra.mxu0 %v749
    %848 = vmatpush.msra.mxu0 %v748
    %849 = vmatpush.msra.mxu0 %v747
    %850 = vmatmul.f32.gmra.mxu0 %v769
    %v851 = vpop.f32.mrf.mxu0
    %v852 = vadd.f32 %v832, %v851
    %853 = vdwg.mxu0
    %s854 = scalar_lea.vmem [#allocation3], 12
    %v855 = vld [vmem:[%s854] sm:$0xf]
    %v857 = vsel %vm459, %v855, 0
    %v860 = vsel %vm463, %v852, 0
    %862 = vmatpush.msra.mxu0 0.0
    %863 = vmatpush.msra.mxu0 0.0
    %864 = vmatpush.msra.mxu0 0.0
    %865 = vmatpush.msra.mxu0 0.0
    %866 = vmatpush.msra.mxu0 0.0
    %867 = vmatpush.msra.mxu0 0.0
    %868 = vmatpush.msra.mxu0 0.0
    %869 = vmatpush.msra.mxu0 0.0
    %870 = vmatpush.msra.mxu0 0.0
    %871 = vmatpush.msra.mxu0 0.0
    %872 = vmatpush.msra.mxu0 0.0
    %873 = vmatpush.msra.mxu0 0.0
    %874 = vmatpush.msra.mxu0 0.0
    %875 = vmatpush.msra.mxu0 0.0
    %876 = vmatpush.msra.mxu0 0.0
    %877 = vmatpush.msra.mxu0 %v860
    %878 = vmatmul.f32.gmra.mxu0 %v857
    %v879 = vpop.f32.mrf.mxu0
    %v880 = vadd.f32 0.0, %v879
    %881 = vdwg.mxu0
    %v882 = vadd.f32 %v697, %v880
    %s883 = scalar_lea.vmem [#allocation5], 2048
    %v884 = vld [vmem:[%s883] sm:$0xff]
    %v885 = vld [vmem:[%s883 + $0x8] sm:$0xff]
    %v886 = vld [vmem:[%s883 + $0x10] sm:$0xff]
    %v887 = vld [vmem:[%s883 + $0x18] sm:$0xff]
    %v888 = vld [vmem:[%s883 + $0x20] sm:$0xff]
    %v889 = vld [vmem:[%s883 + $0x28] sm:$0xff]
    %v890 = vld [vmem:[%s883 + $0x30] sm:$0xff]
    %v891 = vld [vmem:[%s883 + $0x38] sm:$0xff]
    %v892 = vld [vmem:[%s883 + $0x40] sm:$0xff]
    %v893 = vld [vmem:[%s883 + $0x48] sm:$0xff]
    %v894 = vld [vmem:[%s883 + $0x50] sm:$0xff]
    %v895 = vld [vmem:[%s883 + $0x58] sm:$0xff]
    %v896 = vld [vmem:[%s883 + $0x60] sm:$0xff]
    %v897 = vld [vmem:[%s883 + $0x68] sm:$0xff]
    %v898 = vld [vmem:[%s883 + $0x70] sm:$0xff]
    %v899 = vld [vmem:[%s883 + $0x78] sm:$0xff]
    %v900 = vld [vmem:[%s883 + $0x80] sm:$0xff]
    %v901 = vld [vmem:[%s883 + $0x88] sm:$0xff]
    %v902 = vld [vmem:[%s883 + $0x90] sm:$0xff]
    %v903 = vld [vmem:[%s883 + $0x98] sm:$0xff]
    %v904 = vld [vmem:[%s883 + $0xa0] sm:$0xff]
    %v905 = vld [vmem:[%s883 + $0xa8] sm:$0xff]
    %v906 = vld [vmem:[%s883 + $0xb0] sm:$0xff]
    %v907 = vld [vmem:[%s883 + $0xb8] sm:$0xff]
    %v908 = vld [vmem:[%s883 + $0xc0] sm:$0xff]
    %v909 = vld [vmem:[%s883 + $0xc8] sm:$0xff]
    %v910 = vld [vmem:[%s883 + $0xd0] sm:$0xff]
    %v911 = vld [vmem:[%s883 + $0xd8] sm:$0xff]
    %v912 = vld [vmem:[%s883 + $0xe0] sm:$0xff]
    %v913 = vld [vmem:[%s883 + $0xe8] sm:$0xff]
    %v914 = vld [vmem:[%s883 + $0xf0] sm:$0xff]
    %v915 = vld [vmem:[%s883 + $0xf8] sm:$0xff]
    %v916 = vld [vmem:[%s883 + $0x100] sm:$0xff]
    %v917 = vld [vmem:[%s883 + $0x108] sm:$0xff]
    %v918 = vld [vmem:[%s883 + $0x110] sm:$0xff]
    %v919 = vld [vmem:[%s883 + $0x118] sm:$0xff]
    %v920 = vld [vmem:[%s883 + $0x120] sm:$0xff]
    %v921 = vld [vmem:[%s883 + $0x128] sm:$0xff]
    %v922 = vld [vmem:[%s883 + $0x130] sm:$0xff]
    %v923 = vld [vmem:[%s883 + $0x138] sm:$0xff]
    %v924 = vld [vmem:[%s883 + $0x140] sm:$0xff]
    %v925 = vld [vmem:[%s883 + $0x148] sm:$0xff]
    %v926 = vld [vmem:[%s883 + $0x150] sm:$0xff]
    %v927 = vld [vmem:[%s883 + $0x158] sm:$0xff]
    %v928 = vld [vmem:[%s883 + $0x160] sm:$0xff]
    %v929 = vld [vmem:[%s883 + $0x168] sm:$0xff]
    %v930 = vld [vmem:[%s883 + $0x170] sm:$0xff]
    %v931 = vld [vmem:[%s883 + $0x178] sm:$0xff]
    %v932 = vld [vmem:[%s883 + $0x180] sm:$0xff]
    %v933 = vld [vmem:[%s883 + $0x188] sm:$0xff]
    %v934 = vld [vmem:[%s883 + $0x190] sm:$0xff]
    %v935 = vld [vmem:[%s883 + $0x198] sm:$0xff]
    %v936 = vld [vmem:[%s883 + $0x1a0] sm:$0xff]
    %v937 = vld [vmem:[%s883 + $0x1a8] sm:$0xff]
    %v938 = vld [vmem:[%s883 + $0x1b0] sm:$0xff]
    %v939 = vld [vmem:[%s883 + $0x1b8] sm:$0xff]
    %v940 = vld [vmem:[%s883 + $0x1c0] sm:$0xff]
    %v941 = vld [vmem:[%s883 + $0x1c8] sm:$0xff]
    %v942 = vld [vmem:[%s883 + $0x1d0] sm:$0xff]
    %v943 = vld [vmem:[%s883 + $0x1d8] sm:$0xff]
    %v944 = vld [vmem:[%s883 + $0x1e0] sm:$0xff]
    %v945 = vld [vmem:[%s883 + $0x1e8] sm:$0xff]
    %v946 = vld [vmem:[%s883 + $0x1f0] sm:$0xff]
    %v947 = vld [vmem:[%s883 + $0x1f8] sm:$0xff]
    %948 = vst [vmem:[#allocation1] ss:$2 sm:$0xff] %v141
    %s949 = scalar_lea.vmem [#allocation1], 16
    %950 = vst [vmem:[%s949] ss:$2 sm:$0xff] %v142
    %v951 = vld.sshfl [vmem:[#allocation1] sm:$0xff pattern:$0x75316420]
    %v952 = vld.sshfl [vmem:[#allocation1 + $0x8] sm:$0xff pattern:$0x75316420]
    %v953 = vld.sshfl [vmem:[#allocation1 + $0x10] sm:$0xff pattern:$0x75316420]
    %v954 = vld.sshfl [vmem:[#allocation1 + $0x18] sm:$0xff pattern:$0x75316420]
    %959 = vmatpush.msra.mxu0 %v899
    %960 = vmatpush.msra.mxu0 %v898
    %961 = vmatpush.msra.mxu0 %v897
    %962 = vmatpush.msra.mxu0 %v896
    %963 = vmatpush.msra.mxu0 %v895
    %964 = vmatpush.msra.mxu0 %v894
    %965 = vmatpush.msra.mxu0 %v893
    %966 = vmatpush.msra.mxu0 %v892
    %967 = vmatpush.msra.mxu0 %v891
    %968 = vmatpush.msra.mxu0 %v890
    %969 = vmatpush.msra.mxu0 %v889
    %970 = vmatpush.msra.mxu0 %v888
    %971 = vmatpush.msra.mxu0 %v887
    %972 = vmatpush.msra.mxu0 %v886
    %973 = vmatpush.msra.mxu0 %v885
    %974 = vmatpush.msra.mxu0 %v884
    %975 = vmatmul.f32.gmra.mxu0 %v951
    %v976 = vpop.f32.mrf.mxu0
    %v977 = vadd.f32 0.0, %v976
    %978 = vdwg.mxu0
    %979 = vmatpush.msra.mxu0 %v915
    %980 = vmatpush.msra.mxu0 %v914
    %981 = vmatpush.msra.mxu0 %v913
    %982 = vmatpush.msra.mxu0 %v912
    %983 = vmatpush.msra.mxu0 %v911
    %984 = vmatpush.msra.mxu0 %v910
    %985 = vmatpush.msra.mxu0 %v909
    %986 = vmatpush.msra.mxu0 %v908
    %987 = vmatpush.msra.mxu0 %v907
    %988 = vmatpush.msra.mxu0 %v906
    %989 = vmatpush.msra.mxu0 %v905
    %990 = vmatpush.msra.mxu0 %v904
    %991 = vmatpush.msra.mxu0 %v903
    %992 = vmatpush.msra.mxu0 %v902
    %993 = vmatpush.msra.mxu0 %v901
    %994 = vmatpush.msra.mxu0 %v900
    %995 = vmatmul.f32.gmra.mxu0 %v952
    %v996 = vpop.f32.mrf.mxu0
    %v997 = vadd.f32 %v977, %v996
    %998 = vdwg.mxu0
    %999 = vmatpush.msra.mxu0 %v931
    %1000 = vmatpush.msra.mxu0 %v930
    %1001 = vmatpush.msra.mxu0 %v929
    %1002 = vmatpush.msra.mxu0 %v928
    %1003 = vmatpush.msra.mxu0 %v927
    %1004 = vmatpush.msra.mxu0 %v926
    %1005 = vmatpush.msra.mxu0 %v925
    %1006 = vmatpush.msra.mxu0 %v924
    %1007 = vmatpush.msra.mxu0 %v923
    %1008 = vmatpush.msra.mxu0 %v922
    %1009 = vmatpush.msra.mxu0 %v921
    %1010 = vmatpush.msra.mxu0 %v920
    %1011 = vmatpush.msra.mxu0 %v919
    %1012 = vmatpush.msra.mxu0 %v918
    %1013 = vmatpush.msra.mxu0 %v917
    %1014 = vmatpush.msra.mxu0 %v916
    %1015 = vmatmul.f32.gmra.mxu0 %v953
    %v1016 = vpop.f32.mrf.mxu0
    %v1017 = vadd.f32 %v997, %v1016
    %1018 = vdwg.mxu0
    %1019 = vmatpush.msra.mxu0 %v947
    %1020 = vmatpush.msra.mxu0 %v946
    %1021 = vmatpush.msra.mxu0 %v945
    %1022 = vmatpush.msra.mxu0 %v944
    %1023 = vmatpush.msra.mxu0 %v943
    %1024 = vmatpush.msra.mxu0 %v942
    %1025 = vmatpush.msra.mxu0 %v941
    %1026 = vmatpush.msra.mxu0 %v940
    %1027 = vmatpush.msra.mxu0 %v939
    %1028 = vmatpush.msra.mxu0 %v938
    %1029 = vmatpush.msra.mxu0 %v937
    %1030 = vmatpush.msra.mxu0 %v936
    %1031 = vmatpush.msra.mxu0 %v935
    %1032 = vmatpush.msra.mxu0 %v934
    %1033 = vmatpush.msra.mxu0 %v933
    %1034 = vmatpush.msra.mxu0 %v932
    %1035 = vmatmul.f32.gmra.mxu0 %v954
    %v1036 = vpop.f32.mrf.mxu0
    %v1037 = vadd.f32 %v1017, %v1036
    %1038 = vdwg.mxu0
    %s1039 = scalar_lea.vmem [#allocation3], 16
    %v1040 = vld [vmem:[%s1039] sm:$0xf]
    %v1042 = vsel %vm459, %v1040, 0
    %v1045 = vsel %vm463, %v1037, 0
    %1047 = vmatpush.msra.mxu0 0.0
    %1048 = vmatpush.msra.mxu0 0.0
    %1049 = vmatpush.msra.mxu0 0.0
    %1050 = vmatpush.msra.mxu0 0.0
    %1051 = vmatpush.msra.mxu0 0.0
    %1052 = vmatpush.msra.mxu0 0.0
    %1053 = vmatpush.msra.mxu0 0.0
    %1054 = vmatpush.msra.mxu0 0.0
    %1055 = vmatpush.msra.mxu0 0.0
    %1056 = vmatpush.msra.mxu0 0.0
    %1057 = vmatpush.msra.mxu0 0.0
    %1058 = vmatpush.msra.mxu0 0.0
    %1059 = vmatpush.msra.mxu0 0.0
    %1060 = vmatpush.msra.mxu0 0.0
    %1061 = vmatpush.msra.mxu0 0.0
    %1062 = vmatpush.msra.mxu0 %v1045
    %1063 = vmatmul.f32.gmra.mxu0 %v1042
    %v1064 = vpop.f32.mrf.mxu0
    %v1065 = vadd.f32 0.0, %v1064
    %1066 = vdwg.mxu0
    %v1067 = vadd.f32 %v882, %v1065
    %s1068 = scalar_lea.vmem [#allocation5], 2560
    %v1069 = vld [vmem:[%s1068] sm:$0xff]
    %v1070 = vld [vmem:[%s1068 + $0x8] sm:$0xff]
    %v1071 = vld [vmem:[%s1068 + $0x10] sm:$0xff]
    %v1072 = vld [vmem:[%s1068 + $0x18] sm:$0xff]
    %v1073 = vld [vmem:[%s1068 + $0x20] sm:$0xff]
    %v1074 = vld [vmem:[%s1068 + $0x28] sm:$0xff]
    %v1075 = vld [vmem:[%s1068 + $0x30] sm:$0xff]
    %v1076 = vld [vmem:[%s1068 + $0x38] sm:$0xff]
    %v1077 = vld [vmem:[%s1068 + $0x40] sm:$0xff]
    %v1078 = vld [vmem:[%s1068 + $0x48] sm:$0xff]
    %v1079 = vld [vmem:[%s1068 + $0x50] sm:$0xff]
    %v1080 = vld [vmem:[%s1068 + $0x58] sm:$0xff]
    %v1081 = vld [vmem:[%s1068 + $0x60] sm:$0xff]
    %v1082 = vld [vmem:[%s1068 + $0x68] sm:$0xff]
    %v1083 = vld [vmem:[%s1068 + $0x70] sm:$0xff]
    %v1084 = vld [vmem:[%s1068 + $0x78] sm:$0xff]
    %v1085 = vld [vmem:[%s1068 + $0x80] sm:$0xff]
    %v1086 = vld [vmem:[%s1068 + $0x88] sm:$0xff]
    %v1087 = vld [vmem:[%s1068 + $0x90] sm:$0xff]
    %v1088 = vld [vmem:[%s1068 + $0x98] sm:$0xff]
    %v1089 = vld [vmem:[%s1068 + $0xa0] sm:$0xff]
    %v1090 = vld [vmem:[%s1068 + $0xa8] sm:$0xff]
    %v1091 = vld [vmem:[%s1068 + $0xb0] sm:$0xff]
    %v1092 = vld [vmem:[%s1068 + $0xb8] sm:$0xff]
    %v1093 = vld [vmem:[%s1068 + $0xc0] sm:$0xff]
    %v1094 = vld [vmem:[%s1068 + $0xc8] sm:$0xff]
    %v1095 = vld [vmem:[%s1068 + $0xd0] sm:$0xff]
    %v1096 = vld [vmem:[%s1068 + $0xd8] sm:$0xff]
    %v1097 = vld [vmem:[%s1068 + $0xe0] sm:$0xff]
    %v1098 = vld [vmem:[%s1068 + $0xe8] sm:$0xff]
    %v1099 = vld [vmem:[%s1068 + $0xf0] sm:$0xff]
    %v1100 = vld [vmem:[%s1068 + $0xf8] sm:$0xff]
    %v1101 = vld [vmem:[%s1068 + $0x100] sm:$0xff]
    %v1102 = vld [vmem:[%s1068 + $0x108] sm:$0xff]
    %v1103 = vld [vmem:[%s1068 + $0x110] sm:$0xff]
    %v1104 = vld [vmem:[%s1068 + $0x118] sm:$0xff]
    %v1105 = vld [vmem:[%s1068 + $0x120] sm:$0xff]
    %v1106 = vld [vmem:[%s1068 + $0x128] sm:$0xff]
    %v1107 = vld [vmem:[%s1068 + $0x130] sm:$0xff]
    %v1108 = vld [vmem:[%s1068 + $0x138] sm:$0xff]
    %v1109 = vld [vmem:[%s1068 + $0x140] sm:$0xff]
    %v1110 = vld [vmem:[%s1068 + $0x148] sm:$0xff]
    %v1111 = vld [vmem:[%s1068 + $0x150] sm:$0xff]
    %v1112 = vld [vmem:[%s1068 + $0x158] sm:$0xff]
    %v1113 = vld [vmem:[%s1068 + $0x160] sm:$0xff]
    %v1114 = vld [vmem:[%s1068 + $0x168] sm:$0xff]
    %v1115 = vld [vmem:[%s1068 + $0x170] sm:$0xff]
    %v1116 = vld [vmem:[%s1068 + $0x178] sm:$0xff]
    %v1117 = vld [vmem:[%s1068 + $0x180] sm:$0xff]
    %v1118 = vld [vmem:[%s1068 + $0x188] sm:$0xff]
    %v1119 = vld [vmem:[%s1068 + $0x190] sm:$0xff]
    %v1120 = vld [vmem:[%s1068 + $0x198] sm:$0xff]
    %v1121 = vld [vmem:[%s1068 + $0x1a0] sm:$0xff]
    %v1122 = vld [vmem:[%s1068 + $0x1a8] sm:$0xff]
    %v1123 = vld [vmem:[%s1068 + $0x1b0] sm:$0xff]
    %v1124 = vld [vmem:[%s1068 + $0x1b8] sm:$0xff]
    %v1125 = vld [vmem:[%s1068 + $0x1c0] sm:$0xff]
    %v1126 = vld [vmem:[%s1068 + $0x1c8] sm:$0xff]
    %v1127 = vld [vmem:[%s1068 + $0x1d0] sm:$0xff]
    %v1128 = vld [vmem:[%s1068 + $0x1d8] sm:$0xff]
    %v1129 = vld [vmem:[%s1068 + $0x1e0] sm:$0xff]
    %v1130 = vld [vmem:[%s1068 + $0x1e8] sm:$0xff]
    %v1131 = vld [vmem:[%s1068 + $0x1f0] sm:$0xff]
    %v1132 = vld [vmem:[%s1068 + $0x1f8] sm:$0xff]
    %1133 = vst [vmem:[#allocation1] ss:$2 sm:$0xff] %v141
    %s1134 = scalar_lea.vmem [#allocation1], 16
    %1135 = vst [vmem:[%s1134] ss:$2 sm:$0xff] %v142
    %v1136 = vld.sshfl [vmem:[#allocation1] sm:$0xff pattern:$0x75316420]
    %v1137 = vld.sshfl [vmem:[#allocation1 + $0x8] sm:$0xff pattern:$0x75316420]
    %v1138 = vld.sshfl [vmem:[#allocation1 + $0x10] sm:$0xff pattern:$0x75316420]
    %v1139 = vld.sshfl [vmem:[#allocation1 + $0x18] sm:$0xff pattern:$0x75316420]
    %1144 = vmatpush.msra.mxu0 %v1084
    %1145 = vmatpush.msra.mxu0 %v1083
    %1146 = vmatpush.msra.mxu0 %v1082
    %1147 = vmatpush.msra.mxu0 %v1081
    %1148 = vmatpush.msra.mxu0 %v1080
    %1149 = vmatpush.msra.mxu0 %v1079
    %1150 = vmatpush.msra.mxu0 %v1078
    %1151 = vmatpush.msra.mxu0 %v1077
    %1152 = vmatpush.msra.mxu0 %v1076
    %1153 = vmatpush.msra.mxu0 %v1075
    %1154 = vmatpush.msra.mxu0 %v1074
    %1155 = vmatpush.msra.mxu0 %v1073
    %1156 = vmatpush.msra.mxu0 %v1072
    %1157 = vmatpush.msra.mxu0 %v1071
    %1158 = vmatpush.msra.mxu0 %v1070
    %1159 = vmatpush.msra.mxu0 %v1069
    %1160 = vmatmul.f32.gmra.mxu0 %v1136
    %v1161 = vpop.f32.mrf.mxu0
    %v1162 = vadd.f32 0.0, %v1161
    %1163 = vdwg.mxu0
    %1164 = vmatpush.msra.mxu0 %v1100
    %1165 = vmatpush.msra.mxu0 %v1099
    %1166 = vmatpush.msra.mxu0 %v1098
    %1167 = vmatpush.msra.mxu0 %v1097
    %1168 = vmatpush.msra.mxu0 %v1096
    %1169 = vmatpush.msra.mxu0 %v1095
    %1170 = vmatpush.msra.mxu0 %v1094
    %1171 = vmatpush.msra.mxu0 %v1093
    %1172 = vmatpush.msra.mxu0 %v1092
    %1173 = vmatpush.msra.mxu0 %v1091
    %1174 = vmatpush.msra.mxu0 %v1090
    %1175 = vmatpush.msra.mxu0 %v1089
    %1176 = vmatpush.msra.mxu0 %v1088
    %1177 = vmatpush.msra.mxu0 %v1087
    %1178 = vmatpush.msra.mxu0 %v1086
    %1179 = vmatpush.msra.mxu0 %v1085
    %1180 = vmatmul.f32.gmra.mxu0 %v1137
    %v1181 = vpop.f32.mrf.mxu0
    %v1182 = vadd.f32 %v1162, %v1181
    %1183 = vdwg.mxu0
    %1184 = vmatpush.msra.mxu0 %v1116
    %1185 = vmatpush.msra.mxu0 %v1115
    %1186 = vmatpush.msra.mxu0 %v1114
    %1187 = vmatpush.msra.mxu0 %v1113
    %1188 = vmatpush.msra.mxu0 %v1112
    %1189 = vmatpush.msra.mxu0 %v1111
    %1190 = vmatpush.msra.mxu0 %v1110
    %1191 = vmatpush.msra.mxu0 %v1109
    %1192 = vmatpush.msra.mxu0 %v1108
    %1193 = vmatpush.msra.mxu0 %v1107
    %1194 = vmatpush.msra.mxu0 %v1106
    %1195 = vmatpush.msra.mxu0 %v1105
    %1196 = vmatpush.msra.mxu0 %v1104
    %1197 = vmatpush.msra.mxu0 %v1103
    %1198 = vmatpush.msra.mxu0 %v1102
    %1199 = vmatpush.msra.mxu0 %v1101
    %1200 = vmatmul.f32.gmra.mxu0 %v1138
    %v1201 = vpop.f32.mrf.mxu0
    %v1202 = vadd.f32 %v1182, %v1201
    %1203 = vdwg.mxu0
    %1204 = vmatpush.msra.mxu0 %v1132
    %1205 = vmatpush.msra.mxu0 %v1131
    %1206 = vmatpush.msra.mxu0 %v1130
    %1207 = vmatpush.msra.mxu0 %v1129
    %1208 = vmatpush.msra.mxu0 %v1128
    %1209 = vmatpush.msra.mxu0 %v1127
    %1210 = vmatpush.msra.mxu0 %v1126
    %1211 = vmatpush.msra.mxu0 %v1125
    %1212 = vmatpush.msra.mxu0 %v1124
    %1213 = vmatpush.msra.mxu0 %v1123
    %1214 = vmatpush.msra.mxu0 %v1122
    %1215 = vmatpush.msra.mxu0 %v1121
    %1216 = vmatpush.msra.mxu0 %v1120
    %1217 = vmatpush.msra.mxu0 %v1119
    %1218 = vmatpush.msra.mxu0 %v1118
    %1219 = vmatpush.msra.mxu0 %v1117
    %1220 = vmatmul.f32.gmra.mxu0 %v1139
    %v1221 = vpop.f32.mrf.mxu0
    %v1222 = vadd.f32 %v1202, %v1221
    %1223 = vdwg.mxu0
    %s1224 = scalar_lea.vmem [#allocation3], 20
    %v1225 = vld [vmem:[%s1224] sm:$0xf]
    %v1227 = vsel %vm459, %v1225, 0
    %v1230 = vsel %vm463, %v1222, 0
    %1232 = vmatpush.msra.mxu0 0.0
    %1233 = vmatpush.msra.mxu0 0.0
    %1234 = vmatpush.msra.mxu0 0.0
    %1235 = vmatpush.msra.mxu0 0.0
    %1236 = vmatpush.msra.mxu0 0.0
    %1237 = vmatpush.msra.mxu0 0.0
    %1238 = vmatpush.msra.mxu0 0.0
    %1239 = vmatpush.msra.mxu0 0.0
    %1240 = vmatpush.msra.mxu0 0.0
    %1241 = vmatpush.msra.mxu0 0.0
    %1242 = vmatpush.msra.mxu0 0.0
    %1243 = vmatpush.msra.mxu0 0.0
    %1244 = vmatpush.msra.mxu0 0.0
    %1245 = vmatpush.msra.mxu0 0.0
    %1246 = vmatpush.msra.mxu0 0.0
    %1247 = vmatpush.msra.mxu0 %v1230
    %1248 = vmatmul.f32.gmra.mxu0 %v1227
    %v1249 = vpop.f32.mrf.mxu0
    %v1250 = vadd.f32 0.0, %v1249
    %1251 = vdwg.mxu0
    %v1252 = vadd.f32 %v1067, %v1250
    %s1253 = scalar_lea.vmem [#allocation5], 3072
    %v1254 = vld [vmem:[%s1253] sm:$0xff]
    %v1255 = vld [vmem:[%s1253 + $0x8] sm:$0xff]
    %v1256 = vld [vmem:[%s1253 + $0x10] sm:$0xff]
    %v1257 = vld [vmem:[%s1253 + $0x18] sm:$0xff]
    %v1258 = vld [vmem:[%s1253 + $0x20] sm:$0xff]
    %v1259 = vld [vmem:[%s1253 + $0x28] sm:$0xff]
    %v1260 = vld [vmem:[%s1253 + $0x30] sm:$0xff]
    %v1261 = vld [vmem:[%s1253 + $0x38] sm:$0xff]
    %v1262 = vld [vmem:[%s1253 + $0x40] sm:$0xff]
    %v1263 = vld [vmem:[%s1253 + $0x48] sm:$0xff]
    %v1264 = vld [vmem:[%s1253 + $0x50] sm:$0xff]
    %v1265 = vld [vmem:[%s1253 + $0x58] sm:$0xff]
    %v1266 = vld [vmem:[%s1253 + $0x60] sm:$0xff]
    %v1267 = vld [vmem:[%s1253 + $0x68] sm:$0xff]
    %v1268 = vld [vmem:[%s1253 + $0x70] sm:$0xff]
    %v1269 = vld [vmem:[%s1253 + $0x78] sm:$0xff]
    %v1270 = vld [vmem:[%s1253 + $0x80] sm:$0xff]
    %v1271 = vld [vmem:[%s1253 + $0x88] sm:$0xff]
    %v1272 = vld [vmem:[%s1253 + $0x90] sm:$0xff]
    %v1273 = vld [vmem:[%s1253 + $0x98] sm:$0xff]
    %v1274 = vld [vmem:[%s1253 + $0xa0] sm:$0xff]
    %v1275 = vld [vmem:[%s1253 + $0xa8] sm:$0xff]
    %v1276 = vld [vmem:[%s1253 + $0xb0] sm:$0xff]
    %v1277 = vld [vmem:[%s1253 + $0xb8] sm:$0xff]
    %v1278 = vld [vmem:[%s1253 + $0xc0] sm:$0xff]
    %v1279 = vld [vmem:[%s1253 + $0xc8] sm:$0xff]
    %v1280 = vld [vmem:[%s1253 + $0xd0] sm:$0xff]
    %v1281 = vld [vmem:[%s1253 + $0xd8] sm:$0xff]
    %v1282 = vld [vmem:[%s1253 + $0xe0] sm:$0xff]
    %v1283 = vld [vmem:[%s1253 + $0xe8] sm:$0xff]
    %v1284 = vld [vmem:[%s1253 + $0xf0] sm:$0xff]
    %v1285 = vld [vmem:[%s1253 + $0xf8] sm:$0xff]
    %v1286 = vld [vmem:[%s1253 + $0x100] sm:$0xff]
    %v1287 = vld [vmem:[%s1253 + $0x108] sm:$0xff]
    %v1288 = vld [vmem:[%s1253 + $0x110] sm:$0xff]
    %v1289 = vld [vmem:[%s1253 + $0x118] sm:$0xff]
    %v1290 = vld [vmem:[%s1253 + $0x120] sm:$0xff]
    %v1291 = vld [vmem:[%s1253 + $0x128] sm:$0xff]
    %v1292 = vld [vmem:[%s1253 + $0x130] sm:$0xff]
    %v1293 = vld [vmem:[%s1253 + $0x138] sm:$0xff]
    %v1294 = vld [vmem:[%s1253 + $0x140] sm:$0xff]
    %v1295 = vld [vmem:[%s1253 + $0x148] sm:$0xff]
    %v1296 = vld [vmem:[%s1253 + $0x150] sm:$0xff]
    %v1297 = vld [vmem:[%s1253 + $0x158] sm:$0xff]
    %v1298 = vld [vmem:[%s1253 + $0x160] sm:$0xff]
    %v1299 = vld [vmem:[%s1253 + $0x168] sm:$0xff]
    %v1300 = vld [vmem:[%s1253 + $0x170] sm:$0xff]
    %v1301 = vld [vmem:[%s1253 + $0x178] sm:$0xff]
    %v1302 = vld [vmem:[%s1253 + $0x180] sm:$0xff]
    %v1303 = vld [vmem:[%s1253 + $0x188] sm:$0xff]
    %v1304 = vld [vmem:[%s1253 + $0x190] sm:$0xff]
    %v1305 = vld [vmem:[%s1253 + $0x198] sm:$0xff]
    %v1306 = vld [vmem:[%s1253 + $0x1a0] sm:$0xff]
    %v1307 = vld [vmem:[%s1253 + $0x1a8] sm:$0xff]
    %v1308 = vld [vmem:[%s1253 + $0x1b0] sm:$0xff]
    %v1309 = vld [vmem:[%s1253 + $0x1b8] sm:$0xff]
    %v1310 = vld [vmem:[%s1253 + $0x1c0] sm:$0xff]
    %v1311 = vld [vmem:[%s1253 + $0x1c8] sm:$0xff]
    %v1312 = vld [vmem:[%s1253 + $0x1d0] sm:$0xff]
    %v1313 = vld [vmem:[%s1253 + $0x1d8] sm:$0xff]
    %v1314 = vld [vmem:[%s1253 + $0x1e0] sm:$0xff]
    %v1315 = vld [vmem:[%s1253 + $0x1e8] sm:$0xff]
    %v1316 = vld [vmem:[%s1253 + $0x1f0] sm:$0xff]
    %v1317 = vld [vmem:[%s1253 + $0x1f8] sm:$0xff]
    %1318 = vst [vmem:[#allocation1] ss:$2 sm:$0xff] %v141
    %s1319 = scalar_lea.vmem [#allocation1], 16
    %1320 = vst [vmem:[%s1319] ss:$2 sm:$0xff] %v142
    %v1321 = vld.sshfl [vmem:[#allocation1] sm:$0xff pattern:$0x75316420]
    %v1322 = vld.sshfl [vmem:[#allocation1 + $0x8] sm:$0xff pattern:$0x75316420]
    %v1323 = vld.sshfl [vmem:[#allocation1 + $0x10] sm:$0xff pattern:$0x75316420]
    %v1324 = vld.sshfl [vmem:[#allocation1 + $0x18] sm:$0xff pattern:$0x75316420]
    %1329 = vmatpush.msra.mxu0 %v1269
    %1330 = vmatpush.msra.mxu0 %v1268
    %1331 = vmatpush.msra.mxu0 %v1267
    %1332 = vmatpush.msra.mxu0 %v1266
    %1333 = vmatpush.msra.mxu0 %v1265
    %1334 = vmatpush.msra.mxu0 %v1264
    %1335 = vmatpush.msra.mxu0 %v1263
    %1336 = vmatpush.msra.mxu0 %v1262
    %1337 = vmatpush.msra.mxu0 %v1261
    %1338 = vmatpush.msra.mxu0 %v1260
    %1339 = vmatpush.msra.mxu0 %v1259
    %1340 = vmatpush.msra.mxu0 %v1258
    %1341 = vmatpush.msra.mxu0 %v1257
    %1342 = vmatpush.msra.mxu0 %v1256
    %1343 = vmatpush.msra.mxu0 %v1255
    %1344 = vmatpush.msra.mxu0 %v1254
    %1345 = vmatmul.f32.gmra.mxu0 %v1321
    %v1346 = vpop.f32.mrf.mxu0
    %v1347 = vadd.f32 0.0, %v1346
    %1348 = vdwg.mxu0
    %1349 = vmatpush.msra.mxu0 %v1285
    %1350 = vmatpush.msra.mxu0 %v1284
    %1351 = vmatpush.msra.mxu0 %v1283
    %1352 = vmatpush.msra.mxu0 %v1282
    %1353 = vmatpush.msra.mxu0 %v1281
    %1354 = vmatpush.msra.mxu0 %v1280
    %1355 = vmatpush.msra.mxu0 %v1279
    %1356 = vmatpush.msra.mxu0 %v1278
    %1357 = vmatpush.msra.mxu0 %v1277
    %1358 = vmatpush.msra.mxu0 %v1276
    %1359 = vmatpush.msra.mxu0 %v1275
    %1360 = vmatpush.msra.mxu0 %v1274
    %1361 = vmatpush.msra.mxu0 %v1273
    %1362 = vmatpush.msra.mxu0 %v1272
    %1363 = vmatpush.msra.mxu0 %v1271
    %1364 = vmatpush.msra.mxu0 %v1270
    %1365 = vmatmul.f32.gmra.mxu0 %v1322
    %v1366 = vpop.f32.mrf.mxu0
    %v1367 = vadd.f32 %v1347, %v1366
    %1368 = vdwg.mxu0
    %1369 = vmatpush.msra.mxu0 %v1301
    %1370 = vmatpush.msra.mxu0 %v1300
    %1371 = vmatpush.msra.mxu0 %v1299
    %1372 = vmatpush.msra.mxu0 %v1298
    %1373 = vmatpush.msra.mxu0 %v1297
    %1374 = vmatpush.msra.mxu0 %v1296
    %1375 = vmatpush.msra.mxu0 %v1295
    %1376 = vmatpush.msra.mxu0 %v1294
    %1377 = vmatpush.msra.mxu0 %v1293
    %1378 = vmatpush.msra.mxu0 %v1292
    %1379 = vmatpush.msra.mxu0 %v1291
    %1380 = vmatpush.msra.mxu0 %v1290
    %1381 = vmatpush.msra.mxu0 %v1289
    %1382 = vmatpush.msra.mxu0 %v1288
    %1383 = vmatpush.msra.mxu0 %v1287
    %1384 = vmatpush.msra.mxu0 %v1286
    %1385 = vmatmul.f32.gmra.mxu0 %v1323
    %v1386 = vpop.f32.mrf.mxu0
    %v1387 = vadd.f32 %v1367, %v1386
    %1388 = vdwg.mxu0
    %1389 = vmatpush.msra.mxu0 %v1317
    %1390 = vmatpush.msra.mxu0 %v1316
    %1391 = vmatpush.msra.mxu0 %v1315
    %1392 = vmatpush.msra.mxu0 %v1314
    %1393 = vmatpush.msra.mxu0 %v1313
    %1394 = vmatpush.msra.mxu0 %v1312
    %1395 = vmatpush.msra.mxu0 %v1311
    %1396 = vmatpush.msra.mxu0 %v1310
    %1397 = vmatpush.msra.mxu0 %v1309
    %1398 = vmatpush.msra.mxu0 %v1308
    %1399 = vmatpush.msra.mxu0 %v1307
    %1400 = vmatpush.msra.mxu0 %v1306
    %1401 = vmatpush.msra.mxu0 %v1305
    %1402 = vmatpush.msra.mxu0 %v1304
    %1403 = vmatpush.msra.mxu0 %v1303
    %1404 = vmatpush.msra.mxu0 %v1302
    %1405 = vmatmul.f32.gmra.mxu0 %v1324
    %v1406 = vpop.f32.mrf.mxu0
    %v1407 = vadd.f32 %v1387, %v1406
    %1408 = vdwg.mxu0
    %s1409 = scalar_lea.vmem [#allocation3], 24
    %v1410 = vld [vmem:[%s1409] sm:$0xf]
    %v1412 = vsel %vm459, %v1410, 0
    %v1415 = vsel %vm463, %v1407, 0
    %1417 = vmatpush.msra.mxu0 0.0
    %1418 = vmatpush.msra.mxu0 0.0
    %1419 = vmatpush.msra.mxu0 0.0
    %1420 = vmatpush.msra.mxu0 0.0
    %1421 = vmatpush.msra.mxu0 0.0
    %1422 = vmatpush.msra.mxu0 0.0
    %1423 = vmatpush.msra.mxu0 0.0
    %1424 = vmatpush.msra.mxu0 0.0
    %1425 = vmatpush.msra.mxu0 0.0
    %1426 = vmatpush.msra.mxu0 0.0
    %1427 = vmatpush.msra.mxu0 0.0
    %1428 = vmatpush.msra.mxu0 0.0
    %1429 = vmatpush.msra.mxu0 0.0
    %1430 = vmatpush.msra.mxu0 0.0
    %1431 = vmatpush.msra.mxu0 0.0
    %1432 = vmatpush.msra.mxu0 %v1415
    %1433 = vmatmul.f32.gmra.mxu0 %v1412
    %v1434 = vpop.f32.mrf.mxu0
    %v1435 = vadd.f32 0.0, %v1434
    %1436 = vdwg.mxu0
    %v1437 = vadd.f32 %v1252, %v1435
    %s1438 = scalar_lea.vmem [#allocation5], 3584
    %v1439 = vld [vmem:[%s1438] sm:$0xff]
    %v1440 = vld [vmem:[%s1438 + $0x8] sm:$0xff]
    %v1441 = vld [vmem:[%s1438 + $0x10] sm:$0xff]
    %v1442 = vld [vmem:[%s1438 + $0x18] sm:$0xff]
    %v1443 = vld [vmem:[%s1438 + $0x20] sm:$0xff]
    %v1444 = vld [vmem:[%s1438 + $0x28] sm:$0xff]
    %v1445 = vld [vmem:[%s1438 + $0x30] sm:$0xff]
    %v1446 = vld [vmem:[%s1438 + $0x38] sm:$0xff]
    %v1447 = vld [vmem:[%s1438 + $0x40] sm:$0xff]
    %v1448 = vld [vmem:[%s1438 + $0x48] sm:$0xff]
    %v1449 = vld [vmem:[%s1438 + $0x50] sm:$0xff]
    %v1450 = vld [vmem:[%s1438 + $0x58] sm:$0xff]
    %v1451 = vld [vmem:[%s1438 + $0x60] sm:$0xff]
    %v1452 = vld [vmem:[%s1438 + $0x68] sm:$0xff]
    %v1453 = vld [vmem:[%s1438 + $0x70] sm:$0xff]
    %v1454 = vld [vmem:[%s1438 + $0x78] sm:$0xff]
    %v1455 = vld [vmem:[%s1438 + $0x80] sm:$0xff]
    %v1456 = vld [vmem:[%s1438 + $0x88] sm:$0xff]
    %v1457 = vld [vmem:[%s1438 + $0x90] sm:$0xff]
    %v1458 = vld [vmem:[%s1438 + $0x98] sm:$0xff]
    %v1459 = vld [vmem:[%s1438 + $0xa0] sm:$0xff]
    %v1460 = vld [vmem:[%s1438 + $0xa8] sm:$0xff]
    %v1461 = vld [vmem:[%s1438 + $0xb0] sm:$0xff]
    %v1462 = vld [vmem:[%s1438 + $0xb8] sm:$0xff]
    %v1463 = vld [vmem:[%s1438 + $0xc0] sm:$0xff]
    %v1464 = vld [vmem:[%s1438 + $0xc8] sm:$0xff]
    %v1465 = vld [vmem:[%s1438 + $0xd0] sm:$0xff]
    %v1466 = vld [vmem:[%s1438 + $0xd8] sm:$0xff]
    %v1467 = vld [vmem:[%s1438 + $0xe0] sm:$0xff]
    %v1468 = vld [vmem:[%s1438 + $0xe8] sm:$0xff]
    %v1469 = vld [vmem:[%s1438 + $0xf0] sm:$0xff]
    %v1470 = vld [vmem:[%s1438 + $0xf8] sm:$0xff]
    %v1471 = vld [vmem:[%s1438 + $0x100] sm:$0xff]
    %v1472 = vld [vmem:[%s1438 + $0x108] sm:$0xff]
    %v1473 = vld [vmem:[%s1438 + $0x110] sm:$0xff]
    %v1474 = vld [vmem:[%s1438 + $0x118] sm:$0xff]
    %v1475 = vld [vmem:[%s1438 + $0x120] sm:$0xff]
    %v1476 = vld [vmem:[%s1438 + $0x128] sm:$0xff]
    %v1477 = vld [vmem:[%s1438 + $0x130] sm:$0xff]
    %v1478 = vld [vmem:[%s1438 + $0x138] sm:$0xff]
    %v1479 = vld [vmem:[%s1438 + $0x140] sm:$0xff]
    %v1480 = vld [vmem:[%s1438 + $0x148] sm:$0xff]
    %v1481 = vld [vmem:[%s1438 + $0x150] sm:$0xff]
    %v1482 = vld [vmem:[%s1438 + $0x158] sm:$0xff]
    %v1483 = vld [vmem:[%s1438 + $0x160] sm:$0xff]
    %v1484 = vld [vmem:[%s1438 + $0x168] sm:$0xff]
    %v1485 = vld [vmem:[%s1438 + $0x170] sm:$0xff]
    %v1486 = vld [vmem:[%s1438 + $0x178] sm:$0xff]
    %v1487 = vld [vmem:[%s1438 + $0x180] sm:$0xff]
    %v1488 = vld [vmem:[%s1438 + $0x188] sm:$0xff]
    %v1489 = vld [vmem:[%s1438 + $0x190] sm:$0xff]
    %v1490 = vld [vmem:[%s1438 + $0x198] sm:$0xff]
    %v1491 = vld [vmem:[%s1438 + $0x1a0] sm:$0xff]
    %v1492 = vld [vmem:[%s1438 + $0x1a8] sm:$0xff]
    %v1493 = vld [vmem:[%s1438 + $0x1b0] sm:$0xff]
    %v1494 = vld [vmem:[%s1438 + $0x1b8] sm:$0xff]
    %v1495 = vld [vmem:[%s1438 + $0x1c0] sm:$0xff]
    %v1496 = vld [vmem:[%s1438 + $0x1c8] sm:$0xff]
    %v1497 = vld [vmem:[%s1438 + $0x1d0] sm:$0xff]
    %v1498 = vld [vmem:[%s1438 + $0x1d8] sm:$0xff]
    %v1499 = vld [vmem:[%s1438 + $0x1e0] sm:$0xff]
    %v1500 = vld [vmem:[%s1438 + $0x1e8] sm:$0xff]
    %v1501 = vld [vmem:[%s1438 + $0x1f0] sm:$0xff]
    %v1502 = vld [vmem:[%s1438 + $0x1f8] sm:$0xff]
    %1503 = vst [vmem:[#allocation1] ss:$2 sm:$0xff] %v141
    %s1504 = scalar_lea.vmem [#allocation1], 16
    %1505 = vst [vmem:[%s1504] ss:$2 sm:$0xff] %v142
    %v1506 = vld.sshfl [vmem:[#allocation1] sm:$0xff pattern:$0x75316420]
    %v1507 = vld.sshfl [vmem:[#allocation1 + $0x8] sm:$0xff pattern:$0x75316420]
    %v1508 = vld.sshfl [vmem:[#allocation1 + $0x10] sm:$0xff pattern:$0x75316420]
    %v1509 = vld.sshfl [vmem:[#allocation1 + $0x18] sm:$0xff pattern:$0x75316420]
    %1514 = vmatpush.msra.mxu0 %v1454
    %1515 = vmatpush.msra.mxu0 %v1453
    %1516 = vmatpush.msra.mxu0 %v1452
    %1517 = vmatpush.msra.mxu0 %v1451
    %1518 = vmatpush.msra.mxu0 %v1450
    %1519 = vmatpush.msra.mxu0 %v1449
    %1520 = vmatpush.msra.mxu0 %v1448
    %1521 = vmatpush.msra.mxu0 %v1447
    %1522 = vmatpush.msra.mxu0 %v1446
    %1523 = vmatpush.msra.mxu0 %v1445
    %1524 = vmatpush.msra.mxu0 %v1444
    %1525 = vmatpush.msra.mxu0 %v1443
    %1526 = vmatpush.msra.mxu0 %v1442
    %1527 = vmatpush.msra.mxu0 %v1441
    %1528 = vmatpush.msra.mxu0 %v1440
    %1529 = vmatpush.msra.mxu0 %v1439
    %1530 = vmatmul.f32.gmra.mxu0 %v1506
    %v1531 = vpop.f32.mrf.mxu0
    %v1532 = vadd.f32 0.0, %v1531
    %1533 = vdwg.mxu0
    %1534 = vmatpush.msra.mxu0 %v1470
    %1535 = vmatpush.msra.mxu0 %v1469
    %1536 = vmatpush.msra.mxu0 %v1468
    %1537 = vmatpush.msra.mxu0 %v1467
    %1538 = vmatpush.msra.mxu0 %v1466
    %1539 = vmatpush.msra.mxu0 %v1465
    %1540 = vmatpush.msra.mxu0 %v1464
    %1541 = vmatpush.msra.mxu0 %v1463
    %1542 = vmatpush.msra.mxu0 %v1462
    %1543 = vmatpush.msra.mxu0 %v1461
    %1544 = vmatpush.msra.mxu0 %v1460
    %1545 = vmatpush.msra.mxu0 %v1459
    %1546 = vmatpush.msra.mxu0 %v1458
    %1547 = vmatpush.msra.mxu0 %v1457
    %1548 = vmatpush.msra.mxu0 %v1456
    %1549 = vmatpush.msra.mxu0 %v1455
    %1550 = vmatmul.f32.gmra.mxu0 %v1507
    %v1551 = vpop.f32.mrf.mxu0
    %v1552 = vadd.f32 %v1532, %v1551
    %1553 = vdwg.mxu0
    %1554 = vmatpush.msra.mxu0 %v1486
    %1555 = vmatpush.msra.mxu0 %v1485
    %1556 = vmatpush.msra.mxu0 %v1484
    %1557 = vmatpush.msra.mxu0 %v1483
    %1558 = vmatpush.msra.mxu0 %v1482
    %1559 = vmatpush.msra.mxu0 %v1481
    %1560 = vmatpush.msra.mxu0 %v1480
    %1561 = vmatpush.msra.mxu0 %v1479
    %1562 = vmatpush.msra.mxu0 %v1478
    %1563 = vmatpush.msra.mxu0 %v1477
    %1564 = vmatpush.msra.mxu0 %v1476
    %1565 = vmatpush.msra.mxu0 %v1475
    %1566 = vmatpush.msra.mxu0 %v1474
    %1567 = vmatpush.msra.mxu0 %v1473
    %1568 = vmatpush.msra.mxu0 %v1472
    %1569 = vmatpush.msra.mxu0 %v1471
    %1570 = vmatmul.f32.gmra.mxu0 %v1508
    %v1571 = vpop.f32.mrf.mxu0
    %v1572 = vadd.f32 %v1552, %v1571
    %1573 = vdwg.mxu0
    %1574 = vmatpush.msra.mxu0 %v1502
    %1575 = vmatpush.msra.mxu0 %v1501
    %1576 = vmatpush.msra.mxu0 %v1500
    %1577 = vmatpush.msra.mxu0 %v1499
    %1578 = vmatpush.msra.mxu0 %v1498
    %1579 = vmatpush.msra.mxu0 %v1497
    %1580 = vmatpush.msra.mxu0 %v1496
    %1581 = vmatpush.msra.mxu0 %v1495
    %1582 = vmatpush.msra.mxu0 %v1494
    %1583 = vmatpush.msra.mxu0 %v1493
    %1584 = vmatpush.msra.mxu0 %v1492
    %1585 = vmatpush.msra.mxu0 %v1491
    %1586 = vmatpush.msra.mxu0 %v1490
    %1587 = vmatpush.msra.mxu0 %v1489
    %1588 = vmatpush.msra.mxu0 %v1488
    %1589 = vmatpush.msra.mxu0 %v1487
    %1590 = vmatmul.f32.gmra.mxu0 %v1509
    %v1591 = vpop.f32.mrf.mxu0
    %v1592 = vadd.f32 %v1572, %v1591
    %1593 = vdwg.mxu0
    %s1594 = scalar_lea.vmem [#allocation3], 28
    %v1595 = vld [vmem:[%s1594] sm:$0xf]
    %v1597 = vsel %vm459, %v1595, 0
    %v1600 = vsel %vm463, %v1592, 0
    %1602 = vmatpush.msra.mxu0 0.0
    %1603 = vmatpush.msra.mxu0 0.0
    %1604 = vmatpush.msra.mxu0 0.0
    %1605 = vmatpush.msra.mxu0 0.0
    %1606 = vmatpush.msra.mxu0 0.0
    %1607 = vmatpush.msra.mxu0 0.0
    %1608 = vmatpush.msra.mxu0 0.0
    %1609 = vmatpush.msra.mxu0 0.0
    %1610 = vmatpush.msra.mxu0 0.0
    %1611 = vmatpush.msra.mxu0 0.0
    %1612 = vmatpush.msra.mxu0 0.0
    %1613 = vmatpush.msra.mxu0 0.0
    %1614 = vmatpush.msra.mxu0 0.0
    %1615 = vmatpush.msra.mxu0 0.0
    %1616 = vmatpush.msra.mxu0 0.0
    %1617 = vmatpush.msra.mxu0 %v1600
    %1618 = vmatmul.f32.gmra.mxu0 %v1597
    %v1619 = vpop.f32.mrf.mxu0
    %v1620 = vadd.f32 0.0, %v1619
    %1621 = vdwg.mxu0
    %v1622 = vadd.f32 %v1437, %v1620
    %s1623 = scalar_lea.vmem [#allocation5], 4096
    %v1624 = vld [vmem:[%s1623] sm:$0xff]
    %v1625 = vld [vmem:[%s1623 + $0x8] sm:$0xff]
    %v1626 = vld [vmem:[%s1623 + $0x10] sm:$0xff]
    %v1627 = vld [vmem:[%s1623 + $0x18] sm:$0xff]
    %v1628 = vld [vmem:[%s1623 + $0x20] sm:$0xff]
    %v1629 = vld [vmem:[%s1623 + $0x28] sm:$0xff]
    %v1630 = vld [vmem:[%s1623 + $0x30] sm:$0xff]
    %v1631 = vld [vmem:[%s1623 + $0x38] sm:$0xff]
    %v1632 = vld [vmem:[%s1623 + $0x40] sm:$0xff]
    %v1633 = vld [vmem:[%s1623 + $0x48] sm:$0xff]
    %v1634 = vld [vmem:[%s1623 + $0x50] sm:$0xff]
    %v1635 = vld [vmem:[%s1623 + $0x58] sm:$0xff]
    %v1636 = vld [vmem:[%s1623 + $0x60] sm:$0xff]
    %v1637 = vld [vmem:[%s1623 + $0x68] sm:$0xff]
    %v1638 = vld [vmem:[%s1623 + $0x70] sm:$0xff]
    %v1639 = vld [vmem:[%s1623 + $0x78] sm:$0xff]
    %v1640 = vld [vmem:[%s1623 + $0x80] sm:$0xff]
    %v1641 = vld [vmem:[%s1623 + $0x88] sm:$0xff]
    %v1642 = vld [vmem:[%s1623 + $0x90] sm:$0xff]
    %v1643 = vld [vmem:[%s1623 + $0x98] sm:$0xff]
    %v1644 = vld [vmem:[%s1623 + $0xa0] sm:$0xff]
    %v1645 = vld [vmem:[%s1623 + $0xa8] sm:$0xff]
    %v1646 = vld [vmem:[%s1623 + $0xb0] sm:$0xff]
    %v1647 = vld [vmem:[%s1623 + $0xb8] sm:$0xff]
    %v1648 = vld [vmem:[%s1623 + $0xc0] sm:$0xff]
    %v1649 = vld [vmem:[%s1623 + $0xc8] sm:$0xff]
    %v1650 = vld [vmem:[%s1623 + $0xd0] sm:$0xff]
    %v1651 = vld [vmem:[%s1623 + $0xd8] sm:$0xff]
    %v1652 = vld [vmem:[%s1623 + $0xe0] sm:$0xff]
    %v1653 = vld [vmem:[%s1623 + $0xe8] sm:$0xff]
    %v1654 = vld [vmem:[%s1623 + $0xf0] sm:$0xff]
    %v1655 = vld [vmem:[%s1623 + $0xf8] sm:$0xff]
    %v1656 = vld [vmem:[%s1623 + $0x100] sm:$0xff]
    %v1657 = vld [vmem:[%s1623 + $0x108] sm:$0xff]
    %v1658 = vld [vmem:[%s1623 + $0x110] sm:$0xff]
    %v1659 = vld [vmem:[%s1623 + $0x118] sm:$0xff]
    %v1660 = vld [vmem:[%s1623 + $0x120] sm:$0xff]
    %v1661 = vld [vmem:[%s1623 + $0x128] sm:$0xff]
    %v1662 = vld [vmem:[%s1623 + $0x130] sm:$0xff]
    %v1663 = vld [vmem:[%s1623 + $0x138] sm:$0xff]
    %v1664 = vld [vmem:[%s1623 + $0x140] sm:$0xff]
    %v1665 = vld [vmem:[%s1623 + $0x148] sm:$0xff]
    %v1666 = vld [vmem:[%s1623 + $0x150] sm:$0xff]
    %v1667 = vld [vmem:[%s1623 + $0x158] sm:$0xff]
    %v1668 = vld [vmem:[%s1623 + $0x160] sm:$0xff]
    %v1669 = vld [vmem:[%s1623 + $0x168] sm:$0xff]
    %v1670 = vld [vmem:[%s1623 + $0x170] sm:$0xff]
    %v1671 = vld [vmem:[%s1623 + $0x178] sm:$0xff]
    %v1672 = vld [vmem:[%s1623 + $0x180] sm:$0xff]
    %v1673 = vld [vmem:[%s1623 + $0x188] sm:$0xff]
    %v1674 = vld [vmem:[%s1623 + $0x190] sm:$0xff]
    %v1675 = vld [vmem:[%s1623 + $0x198] sm:$0xff]
    %v1676 = vld [vmem:[%s1623 + $0x1a0] sm:$0xff]
    %v1677 = vld [vmem:[%s1623 + $0x1a8] sm:$0xff]
    %v1678 = vld [vmem:[%s1623 + $0x1b0] sm:$0xff]
    %v1679 = vld [vmem:[%s1623 + $0x1b8] sm:$0xff]
    %v1680 = vld [vmem:[%s1623 + $0x1c0] sm:$0xff]
    %v1681 = vld [vmem:[%s1623 + $0x1c8] sm:$0xff]
    %v1682 = vld [vmem:[%s1623 + $0x1d0] sm:$0xff]
    %v1683 = vld [vmem:[%s1623 + $0x1d8] sm:$0xff]
    %v1684 = vld [vmem:[%s1623 + $0x1e0] sm:$0xff]
    %v1685 = vld [vmem:[%s1623 + $0x1e8] sm:$0xff]
    %v1686 = vld [vmem:[%s1623 + $0x1f0] sm:$0xff]
    %v1687 = vld [vmem:[%s1623 + $0x1f8] sm:$0xff]
    %1688 = vst [vmem:[#allocation1] ss:$2 sm:$0xff] %v141
    %s1689 = scalar_lea.vmem [#allocation1], 16
    %1690 = vst [vmem:[%s1689] ss:$2 sm:$0xff] %v142
    %v1691 = vld.sshfl [vmem:[#allocation1] sm:$0xff pattern:$0x75316420]
    %v1692 = vld.sshfl [vmem:[#allocation1 + $0x8] sm:$0xff pattern:$0x75316420]
    %v1693 = vld.sshfl [vmem:[#allocation1 + $0x10] sm:$0xff pattern:$0x75316420]
    %v1694 = vld.sshfl [vmem:[#allocation1 + $0x18] sm:$0xff pattern:$0x75316420]
    %1699 = vmatpush.msra.mxu0 %v1639
    %1700 = vmatpush.msra.mxu0 %v1638
    %1701 = vmatpush.msra.mxu0 %v1637
    %1702 = vmatpush.msra.mxu0 %v1636
    %1703 = vmatpush.msra.mxu0 %v1635
    %1704 = vmatpush.msra.mxu0 %v1634
    %1705 = vmatpush.msra.mxu0 %v1633
    %1706 = vmatpush.msra.mxu0 %v1632
    %1707 = vmatpush.msra.mxu0 %v1631
    %1708 = vmatpush.msra.mxu0 %v1630
    %1709 = vmatpush.msra.mxu0 %v1629
    %1710 = vmatpush.msra.mxu0 %v1628
    %1711 = vmatpush.msra.mxu0 %v1627
    %1712 = vmatpush.msra.mxu0 %v1626
    %1713 = vmatpush.msra.mxu0 %v1625
    %1714 = vmatpush.msra.mxu0 %v1624
    %1715 = vmatmul.f32.gmra.mxu0 %v1691
    %v1716 = vpop.f32.mrf.mxu0
    %v1717 = vadd.f32 0.0, %v1716
    %1718 = vdwg.mxu0
    %1719 = vmatpush.msra.mxu0 %v1655
    %1720 = vmatpush.msra.mxu0 %v1654
    %1721 = vmatpush.msra.mxu0 %v1653
    %1722 = vmatpush.msra.mxu0 %v1652
    %1723 = vmatpush.msra.mxu0 %v1651
    %1724 = vmatpush.msra.mxu0 %v1650
    %1725 = vmatpush.msra.mxu0 %v1649
    %1726 = vmatpush.msra.mxu0 %v1648
    %1727 = vmatpush.msra.mxu0 %v1647
    %1728 = vmatpush.msra.mxu0 %v1646
    %1729 = vmatpush.msra.mxu0 %v1645
    %1730 = vmatpush.msra.mxu0 %v1644
    %1731 = vmatpush.msra.mxu0 %v1643
    %1732 = vmatpush.msra.mxu0 %v1642
    %1733 = vmatpush.msra.mxu0 %v1641
    %1734 = vmatpush.msra.mxu0 %v1640
    %1735 = vmatmul.f32.gmra.mxu0 %v1692
    %v1736 = vpop.f32.mrf.mxu0
    %v1737 = vadd.f32 %v1717, %v1736
    %1738 = vdwg.mxu0
    %1739 = vmatpush.msra.mxu0 %v1671
    %1740 = vmatpush.msra.mxu0 %v1670
    %1741 = vmatpush.msra.mxu0 %v1669
    %1742 = vmatpush.msra.mxu0 %v1668
    %1743 = vmatpush.msra.mxu0 %v1667
    %1744 = vmatpush.msra.mxu0 %v1666
    %1745 = vmatpush.msra.mxu0 %v1665
    %1746 = vmatpush.msra.mxu0 %v1664
    %1747 = vmatpush.msra.mxu0 %v1663
    %1748 = vmatpush.msra.mxu0 %v1662
    %1749 = vmatpush.msra.mxu0 %v1661
    %1750 = vmatpush.msra.mxu0 %v1660
    %1751 = vmatpush.msra.mxu0 %v1659
    %1752 = vmatpush.msra.mxu0 %v1658
    %1753 = vmatpush.msra.mxu0 %v1657
    %1754 = vmatpush.msra.mxu0 %v1656
    %1755 = vmatmul.f32.gmra.mxu0 %v1693
    %v1756 = vpop.f32.mrf.mxu0
    %v1757 = vadd.f32 %v1737, %v1756
    %1758 = vdwg.mxu0
    %1759 = vmatpush.msra.mxu0 %v1687
    %1760 = vmatpush.msra.mxu0 %v1686
    %1761 = vmatpush.msra.mxu0 %v1685
    %1762 = vmatpush.msra.mxu0 %v1684
    %1763 = vmatpush.msra.mxu0 %v1683
    %1764 = vmatpush.msra.mxu0 %v1682
    %1765 = vmatpush.msra.mxu0 %v1681
    %1766 = vmatpush.msra.mxu0 %v1680
    %1767 = vmatpush.msra.mxu0 %v1679
    %1768 = vmatpush.msra.mxu0 %v1678
    %1769 = vmatpush.msra.mxu0 %v1677
    %1770 = vmatpush.msra.mxu0 %v1676
    %1771 = vmatpush.msra.mxu0 %v1675
    %1772 = vmatpush.msra.mxu0 %v1674
    %1773 = vmatpush.msra.mxu0 %v1673
    %1774 = vmatpush.msra.mxu0 %v1672
    %1775 = vmatmul.f32.gmra.mxu0 %v1694
    %v1776 = vpop.f32.mrf.mxu0
    %v1777 = vadd.f32 %v1757, %v1776
    %1778 = vdwg.mxu0
    %s1779 = scalar_lea.vmem [#allocation3], 32
    %v1780 = vld [vmem:[%s1779] sm:$0xf]
    %v1782 = vsel %vm459, %v1780, 0
    %v1785 = vsel %vm463, %v1777, 0
    %1787 = vmatpush.msra.mxu0 0.0
    %1788 = vmatpush.msra.mxu0 0.0
    %1789 = vmatpush.msra.mxu0 0.0
    %1790 = vmatpush.msra.mxu0 0.0
    %1791 = vmatpush.msra.mxu0 0.0
    %1792 = vmatpush.msra.mxu0 0.0
    %1793 = vmatpush.msra.mxu0 0.0
    %1794 = vmatpush.msra.mxu0 0.0
    %1795 = vmatpush.msra.mxu0 0.0
    %1796 = vmatpush.msra.mxu0 0.0
    %1797 = vmatpush.msra.mxu0 0.0
    %1798 = vmatpush.msra.mxu0 0.0
    %1799 = vmatpush.msra.mxu0 0.0
    %1800 = vmatpush.msra.mxu0 0.0
    %1801 = vmatpush.msra.mxu0 0.0
    %1802 = vmatpush.msra.mxu0 %v1785
    %1803 = vmatmul.f32.gmra.mxu0 %v1782
    %v1804 = vpop.f32.mrf.mxu0
    %v1805 = vadd.f32 0.0, %v1804
    %1806 = vdwg.mxu0
    %v1807 = vadd.f32 %v1622, %v1805
    %v1808 = vld [vmem:[%s3] sm:$0xf]
    %1810 = vset.pattern.permute.xlu0 0
    %1811 = vperm.xlu0 %1810, %v1808
    %v1812 = vpop.permute.xlu0 %1811
    %v1814 = vadd.f32 %v1807, %v1812
    %v1815 = vmax.f32 %v1814, 0.0
    %v1816 = vld [vmem:[#allocation7] sm:$0xff]
    %v1817 = vld [vmem:[#allocation7 + $0x8] sm:$0xff]
    %v1818 = vld [vmem:[#allocation7 + $0x10] sm:$0xff]
    %v1819 = vld [vmem:[#allocation7 + $0x18] sm:$0xff]
    %v1820 = vld [vmem:[#allocation7 + $0x20] sm:$0xff]
    %v1821 = vld [vmem:[#allocation7 + $0x28] sm:$0xff]
    %v1822 = vld [vmem:[#allocation7 + $0x30] sm:$0xff]
    %v1823 = vld [vmem:[#allocation7 + $0x38] sm:$0xff]
    %v1824 = vld [vmem:[#allocation7 + $0x40] sm:$0xff]
    %v1825 = vld [vmem:[#allocation7 + $0x48] sm:$0xff]
    %v1826 = vld [vmem:[#allocation7 + $0x50] sm:$0xff]
    %v1827 = vld [vmem:[#allocation7 + $0x58] sm:$0xff]
    %v1828 = vld [vmem:[#allocation7 + $0x60] sm:$0xff]
    %v1829 = vld [vmem:[#allocation7 + $0x68] sm:$0xff]
    %v1830 = vld [vmem:[#allocation7 + $0x70] sm:$0xff]
    %v1831 = vld [vmem:[#allocation7 + $0x78] sm:$0xff]
    %1832 = vmatpush.msra.mxu0 %v1831
    %1833 = vmatpush.msra.mxu0 %v1830
    %1834 = vmatpush.msra.mxu0 %v1829
    %1835 = vmatpush.msra.mxu0 %v1828
    %1836 = vmatpush.msra.mxu0 %v1827
    %1837 = vmatpush.msra.mxu0 %v1826
    %1838 = vmatpush.msra.mxu0 %v1825
    %1839 = vmatpush.msra.mxu0 %v1824
    %1840 = vmatpush.msra.mxu0 %v1823
    %1841 = vmatpush.msra.mxu0 %v1822
    %1842 = vmatpush.msra.mxu0 %v1821
    %1843 = vmatpush.msra.mxu0 %v1820
    %1844 = vmatpush.msra.mxu0 %v1819
    %1845 = vmatpush.msra.mxu0 %v1818
    %1846 = vmatpush.msra.mxu0 %v1817
    %1847 = vmatpush.msra.mxu0 %v1816
    %1848 = vmatmul.f32.gmra.mxu0 %v1815
    %v1849 = vpop.f32.mrf.mxu0
    %v1850 = vadd.f32 0.0, %v1849
    %1851 = vdwg.mxu0
    %v1852 = vld [vmem:[%s5] sm:$0xff]
    %s1853 = scalar_lea.vmem [#allocation7], 128
    %v1854 = vld [vmem:[%s1853] sm:$0xff]
    %v1855 = vld [vmem:[%s1853 + $0x8] sm:$0xff]
    %v1856 = vld [vmem:[%s1853 + $0x10] sm:$0xff]
    %v1857 = vld [vmem:[%s1853 + $0x18] sm:$0xff]
    %v1858 = vld [vmem:[%s1853 + $0x20] sm:$0xff]
    %v1859 = vld [vmem:[%s1853 + $0x28] sm:$0xff]
    %v1860 = vld [vmem:[%s1853 + $0x30] sm:$0xff]
    %v1861 = vld [vmem:[%s1853 + $0x38] sm:$0xff]
    %v1862 = vld [vmem:[%s1853 + $0x40] sm:$0xff]
    %v1863 = vld [vmem:[%s1853 + $0x48] sm:$0xff]
    %v1864 = vld [vmem:[%s1853 + $0x50] sm:$0xff]
    %v1865 = vld [vmem:[%s1853 + $0x58] sm:$0xff]
    %v1866 = vld [vmem:[%s1853 + $0x60] sm:$0xff]
    %v1867 = vld [vmem:[%s1853 + $0x68] sm:$0xff]
    %v1868 = vld [vmem:[%s1853 + $0x70] sm:$0xff]
    %v1869 = vld [vmem:[%s1853 + $0x78] sm:$0xff]
    %1870 = vmatpush.msra.mxu0 %v1869
    %1871 = vmatpush.msra.mxu0 %v1868
    %1872 = vmatpush.msra.mxu0 %v1867
    %1873 = vmatpush.msra.mxu0 %v1866
    %1874 = vmatpush.msra.mxu0 %v1865
    %1875 = vmatpush.msra.mxu0 %v1864
    %1876 = vmatpush.msra.mxu0 %v1863
    %1877 = vmatpush.msra.mxu0 %v1862
    %1878 = vmatpush.msra.mxu0 %v1861
    %1879 = vmatpush.msra.mxu0 %v1860
    %1880 = vmatpush.msra.mxu0 %v1859
    %1881 = vmatpush.msra.mxu0 %v1858
    %1882 = vmatpush.msra.mxu0 %v1857
    %1883 = vmatpush.msra.mxu0 %v1856
    %1884 = vmatpush.msra.mxu0 %v1855
    %1885 = vmatpush.msra.mxu0 %v1854
    %1886 = vmatmul.f32.gmra.mxu0 %v1815
    %v1887 = vpop.f32.mrf.mxu0
    %v1888 = vadd.f32 0.0, %v1887
    %1889 = vdwg.mxu0
    %s1890 = scalar_lea.vmem %s5, 8
    %v1891 = vld [vmem:[%s1890] sm:$0xff]
    %v1893 = vsel %vm459, %v1891, 0
    %v1896 = vsel %vm463, %v1888, 0
    %1898 = vmatpush.msra.mxu0 0.0
    %1899 = vmatpush.msra.mxu0 0.0
    %1900 = vmatpush.msra.mxu0 0.0
    %1901 = vmatpush.msra.mxu0 0.0
    %1902 = vmatpush.msra.mxu0 0.0
    %1903 = vmatpush.msra.mxu0 0.0
    %1904 = vmatpush.msra.mxu0 0.0
    %1905 = vmatpush.msra.mxu0 0.0
    %1906 = vmatpush.msra.mxu0 0.0
    %1907 = vmatpush.msra.mxu0 0.0
    %1908 = vmatpush.msra.mxu0 0.0
    %1909 = vmatpush.msra.mxu0 0.0
    %1910 = vmatpush.msra.mxu0 0.0
    %1911 = vmatpush.msra.mxu0 0.0
    %1912 = vmatpush.msra.mxu0 0.0
    %1913 = vmatpush.msra.mxu0 %v1896
    %1914 = vmatmul.f32.gmra.mxu0 %v1893
    %v1915 = vpop.f32.mrf.mxu0
    %v1916 = vadd.f32 0.0, %v1915
    %1917 = vdwg.mxu0
    %v1919 = vsel %vm459, %v1852, 0
    %v1922 = vsel %vm463, %v1850, 0
    %1924 = vmatpush.msra.mxu0 0.0
    %1925 = vmatpush.msra.mxu0 0.0
    %1926 = vmatpush.msra.mxu0 0.0
    %1927 = vmatpush.msra.mxu0 0.0
    %1928 = vmatpush.msra.mxu0 0.0
    %1929 = vmatpush.msra.mxu0 0.0
    %1930 = vmatpush.msra.mxu0 0.0
    %1931 = vmatpush.msra.mxu0 0.0
    %1932 = vmatpush.msra.mxu0 0.0
    %1933 = vmatpush.msra.mxu0 0.0
    %1934 = vmatpush.msra.mxu0 0.0
    %1935 = vmatpush.msra.mxu0 0.0
    %1936 = vmatpush.msra.mxu0 0.0
    %1937 = vmatpush.msra.mxu0 0.0
    %1938 = vmatpush.msra.mxu0 0.0
    %1939 = vmatpush.msra.mxu0 %v1922
    %1940 = vmatmul.f32.gmra.mxu0 %v1919
    %v1941 = vpop.f32.mrf.mxu0
    %v1942 = vadd.f32 %v1916, %v1941
    %1943 = vdwg.mxu0
    %s1944 = scalar_lea.vmem [#allocation7], 256
    %v1945 = vld [vmem:[%s1944] sm:$0xff]
    %v1946 = vld [vmem:[%s1944 + $0x8] sm:$0xff]
    %v1947 = vld [vmem:[%s1944 + $0x10] sm:$0xff]
    %v1948 = vld [vmem:[%s1944 + $0x18] sm:$0xff]
    %v1949 = vld [vmem:[%s1944 + $0x20] sm:$0xff]
    %v1950 = vld [vmem:[%s1944 + $0x28] sm:$0xff]
    %v1951 = vld [vmem:[%s1944 + $0x30] sm:$0xff]
    %v1952 = vld [vmem:[%s1944 + $0x38] sm:$0xff]
    %v1953 = vld [vmem:[%s1944 + $0x40] sm:$0xff]
    %v1954 = vld [vmem:[%s1944 + $0x48] sm:$0xff]
    %v1955 = vld [vmem:[%s1944 + $0x50] sm:$0xff]
    %v1956 = vld [vmem:[%s1944 + $0x58] sm:$0xff]
    %v1957 = vld [vmem:[%s1944 + $0x60] sm:$0xff]
    %v1958 = vld [vmem:[%s1944 + $0x68] sm:$0xff]
    %v1959 = vld [vmem:[%s1944 + $0x70] sm:$0xff]
    %v1960 = vld [vmem:[%s1944 + $0x78] sm:$0xff]
    %1961 = vmatpush.msra.mxu0 %v1960
    %1962 = vmatpush.msra.mxu0 %v1959
    %1963 = vmatpush.msra.mxu0 %v1958
    %1964 = vmatpush.msra.mxu0 %v1957
    %1965 = vmatpush.msra.mxu0 %v1956
    %1966 = vmatpush.msra.mxu0 %v1955
    %1967 = vmatpush.msra.mxu0 %v1954
    %1968 = vmatpush.msra.mxu0 %v1953
    %1969 = vmatpush.msra.mxu0 %v1952
    %1970 = vmatpush.msra.mxu0 %v1951
    %1971 = vmatpush.msra.mxu0 %v1950
    %1972 = vmatpush.msra.mxu0 %v1949
    %1973 = vmatpush.msra.mxu0 %v1948
    %1974 = vmatpush.msra.mxu0 %v1947
    %1975 = vmatpush.msra.mxu0 %v1946
    %1976 = vmatpush.msra.mxu0 %v1945
    %1977 = vmatmul.f32.gmra.mxu0 %v1815
    %v1978 = vpop.f32.mrf.mxu0
    %v1979 = vadd.f32 0.0, %v1978
    %1980 = vdwg.mxu0
    %s1981 = scalar_lea.vmem %s5, 16
    %v1982 = vld [vmem:[%s1981] sm:$0xff]
    %v1984 = vsel %vm459, %v1982, 0
    %v1987 = vsel %vm463, %v1979, 0
    %1989 = vmatpush.msra.mxu0 0.0
    %1990 = vmatpush.msra.mxu0 0.0
    %1991 = vmatpush.msra.mxu0 0.0
    %1992 = vmatpush.msra.mxu0 0.0
    %1993 = vmatpush.msra.mxu0 0.0
    %1994 = vmatpush.msra.mxu0 0.0
    %1995 = vmatpush.msra.mxu0 0.0
    %1996 = vmatpush.msra.mxu0 0.0
    %1997 = vmatpush.msra.mxu0 0.0
    %1998 = vmatpush.msra.mxu0 0.0
    %1999 = vmatpush.msra.mxu0 0.0
    %2000 = vmatpush.msra.mxu0 0.0
    %2001 = vmatpush.msra.mxu0 0.0
    %2002 = vmatpush.msra.mxu0 0.0
    %2003 = vmatpush.msra.mxu0 0.0
    %2004 = vmatpush.msra.mxu0 %v1987
    %2005 = vmatmul.f32.gmra.mxu0 %v1984
    %v2006 = vpop.f32.mrf.mxu0
    %v2007 = vadd.f32 0.0, %v2006
    %2008 = vdwg.mxu0
    %v2009 = vadd.f32 %v1942, %v2007
    %s2010 = scalar_lea.vmem [#allocation7], 384
    %v2011 = vld [vmem:[%s2010] sm:$0xff]
    %v2012 = vld [vmem:[%s2010 + $0x8] sm:$0xff]
    %v2013 = vld [vmem:[%s2010 + $0x10] sm:$0xff]
    %v2014 = vld [vmem:[%s2010 + $0x18] sm:$0xff]
    %v2015 = vld [vmem:[%s2010 + $0x20] sm:$0xff]
    %v2016 = vld [vmem:[%s2010 + $0x28] sm:$0xff]
    %v2017 = vld [vmem:[%s2010 + $0x30] sm:$0xff]
    %v2018 = vld [vmem:[%s2010 + $0x38] sm:$0xff]
    %v2019 = vld [vmem:[%s2010 + $0x40] sm:$0xff]
    %v2020 = vld [vmem:[%s2010 + $0x48] sm:$0xff]
    %v2021 = vld [vmem:[%s2010 + $0x50] sm:$0xff]
    %v2022 = vld [vmem:[%s2010 + $0x58] sm:$0xff]
    %v2023 = vld [vmem:[%s2010 + $0x60] sm:$0xff]
    %v2024 = vld [vmem:[%s2010 + $0x68] sm:$0xff]
    %v2025 = vld [vmem:[%s2010 + $0x70] sm:$0xff]
    %v2026 = vld [vmem:[%s2010 + $0x78] sm:$0xff]
    %2027 = vmatpush.msra.mxu0 %v2026
    %2028 = vmatpush.msra.mxu0 %v2025
    %2029 = vmatpush.msra.mxu0 %v2024
    %2030 = vmatpush.msra.mxu0 %v2023
    %2031 = vmatpush.msra.mxu0 %v2022
    %2032 = vmatpush.msra.mxu0 %v2021
    %2033 = vmatpush.msra.mxu0 %v2020
    %2034 = vmatpush.msra.mxu0 %v2019
    %2035 = vmatpush.msra.mxu0 %v2018
    %2036 = vmatpush.msra.mxu0 %v2017
    %2037 = vmatpush.msra.mxu0 %v2016
    %2038 = vmatpush.msra.mxu0 %v2015
    %2039 = vmatpush.msra.mxu0 %v2014
    %2040 = vmatpush.msra.mxu0 %v2013
    %2041 = vmatpush.msra.mxu0 %v2012
    %2042 = vmatpush.msra.mxu0 %v2011
    %2043 = vmatmul.f32.gmra.mxu0 %v1815
    %v2044 = vpop.f32.mrf.mxu0
    %v2045 = vadd.f32 0.0, %v2044
    %2046 = vdwg.mxu0
    %s2047 = scalar_lea.vmem %s5, 24
    %v2048 = vld [vmem:[%s2047] sm:$0xff]
    %v2050 = vsel %vm459, %v2048, 0
    %v2053 = vsel %vm463, %v2045, 0
    %2055 = vmatpush.msra.mxu0 0.0
    %2056 = vmatpush.msra.mxu0 0.0
    %2057 = vmatpush.msra.mxu0 0.0
    %2058 = vmatpush.msra.mxu0 0.0
    %2059 = vmatpush.msra.mxu0 0.0
    %2060 = vmatpush.msra.mxu0 0.0
    %2061 = vmatpush.msra.mxu0 0.0
    %2062 = vmatpush.msra.mxu0 0.0
    %2063 = vmatpush.msra.mxu0 0.0
    %2064 = vmatpush.msra.mxu0 0.0
    %2065 = vmatpush.msra.mxu0 0.0
    %2066 = vmatpush.msra.mxu0 0.0
    %2067 = vmatpush.msra.mxu0 0.0
    %2068 = vmatpush.msra.mxu0 0.0
    %2069 = vmatpush.msra.mxu0 0.0
    %2070 = vmatpush.msra.mxu0 %v2053
    %2071 = vmatmul.f32.gmra.mxu0 %v2050
    %v2072 = vpop.f32.mrf.mxu0
    %v2073 = vadd.f32 0.0, %v2072
    %2074 = vdwg.mxu0
    %v2075 = vadd.f32 %v2009, %v2073
    %s2076 = scalar_lea.vmem [#allocation7], 512
    %v2077 = vld [vmem:[%s2076] sm:$0xff]
    %v2078 = vld [vmem:[%s2076 + $0x8] sm:$0xff]
    %v2079 = vld [vmem:[%s2076 + $0x10] sm:$0xff]
    %v2080 = vld [vmem:[%s2076 + $0x18] sm:$0xff]
    %v2081 = vld [vmem:[%s2076 + $0x20] sm:$0xff]
    %v2082 = vld [vmem:[%s2076 + $0x28] sm:$0xff]
    %v2083 = vld [vmem:[%s2076 + $0x30] sm:$0xff]
    %v2084 = vld [vmem:[%s2076 + $0x38] sm:$0xff]
    %v2085 = vld [vmem:[%s2076 + $0x40] sm:$0xff]
    %v2086 = vld [vmem:[%s2076 + $0x48] sm:$0xff]
    %v2087 = vld [vmem:[%s2076 + $0x50] sm:$0xff]
    %v2088 = vld [vmem:[%s2076 + $0x58] sm:$0xff]
    %v2089 = vld [vmem:[%s2076 + $0x60] sm:$0xff]
    %v2090 = vld [vmem:[%s2076 + $0x68] sm:$0xff]
    %v2091 = vld [vmem:[%s2076 + $0x70] sm:$0xff]
    %v2092 = vld [vmem:[%s2076 + $0x78] sm:$0xff]
    %2093 = vmatpush.msra.mxu0 %v2092
    %2094 = vmatpush.msra.mxu0 %v2091
    %2095 = vmatpush.msra.mxu0 %v2090
    %2096 = vmatpush.msra.mxu0 %v2089
    %2097 = vmatpush.msra.mxu0 %v2088
    %2098 = vmatpush.msra.mxu0 %v2087
    %2099 = vmatpush.msra.mxu0 %v2086
    %2100 = vmatpush.msra.mxu0 %v2085
    %2101 = vmatpush.msra.mxu0 %v2084
    %2102 = vmatpush.msra.mxu0 %v2083
    %2103 = vmatpush.msra.mxu0 %v2082
    %2104 = vmatpush.msra.mxu0 %v2081
    %2105 = vmatpush.msra.mxu0 %v2080
    %2106 = vmatpush.msra.mxu0 %v2079
    %2107 = vmatpush.msra.mxu0 %v2078
    %2108 = vmatpush.msra.mxu0 %v2077
    %2109 = vmatmul.f32.gmra.mxu0 %v1815
    %v2110 = vpop.f32.mrf.mxu0
    %v2111 = vadd.f32 0.0, %v2110
    %2112 = vdwg.mxu0
    %s2113 = scalar_lea.vmem %s5, 32
    %v2114 = vld [vmem:[%s2113] sm:$0xff]
    %v2116 = vsel %vm459, %v2114, 0
    %v2119 = vsel %vm463, %v2111, 0
    %2121 = vmatpush.msra.mxu0 0.0
    %2122 = vmatpush.msra.mxu0 0.0
    %2123 = vmatpush.msra.mxu0 0.0
    %2124 = vmatpush.msra.mxu0 0.0
    %2125 = vmatpush.msra.mxu0 0.0
    %2126 = vmatpush.msra.mxu0 0.0
    %2127 = vmatpush.msra.mxu0 0.0
    %2128 = vmatpush.msra.mxu0 0.0
    %2129 = vmatpush.msra.mxu0 0.0
    %2130 = vmatpush.msra.mxu0 0.0
    %2131 = vmatpush.msra.mxu0 0.0
    %2132 = vmatpush.msra.mxu0 0.0
    %2133 = vmatpush.msra.mxu0 0.0
    %2134 = vmatpush.msra.mxu0 0.0
    %2135 = vmatpush.msra.mxu0 0.0
    %2136 = vmatpush.msra.mxu0 %v2119
    %2137 = vmatmul.f32.gmra.mxu0 %v2116
    %v2138 = vpop.f32.mrf.mxu0
    %v2139 = vadd.f32 0.0, %v2138
    %2140 = vdwg.mxu0
    %v2141 = vadd.f32 %v2075, %v2139
    %s2142 = scalar_lea.vmem [#allocation7], 640
    %v2143 = vld [vmem:[%s2142] sm:$0xff]
    %v2144 = vld [vmem:[%s2142 + $0x8] sm:$0xff]
    %v2145 = vld [vmem:[%s2142 + $0x10] sm:$0xff]
    %v2146 = vld [vmem:[%s2142 + $0x18] sm:$0xff]
    %v2147 = vld [vmem:[%s2142 + $0x20] sm:$0xff]
    %v2148 = vld [vmem:[%s2142 + $0x28] sm:$0xff]
    %v2149 = vld [vmem:[%s2142 + $0x30] sm:$0xff]
    %v2150 = vld [vmem:[%s2142 + $0x38] sm:$0xff]
    %v2151 = vld [vmem:[%s2142 + $0x40] sm:$0xff]
    %v2152 = vld [vmem:[%s2142 + $0x48] sm:$0xff]
    %v2153 = vld [vmem:[%s2142 + $0x50] sm:$0xff]
    %v2154 = vld [vmem:[%s2142 + $0x58] sm:$0xff]
    %v2155 = vld [vmem:[%s2142 + $0x60] sm:$0xff]
    %v2156 = vld [vmem:[%s2142 + $0x68] sm:$0xff]
    %v2157 = vld [vmem:[%s2142 + $0x70] sm:$0xff]
    %v2158 = vld [vmem:[%s2142 + $0x78] sm:$0xff]
    %2159 = vmatpush.msra.mxu0 %v2158
    %2160 = vmatpush.msra.mxu0 %v2157
    %2161 = vmatpush.msra.mxu0 %v2156
    %2162 = vmatpush.msra.mxu0 %v2155
    %2163 = vmatpush.msra.mxu0 %v2154
    %2164 = vmatpush.msra.mxu0 %v2153
    %2165 = vmatpush.msra.mxu0 %v2152
    %2166 = vmatpush.msra.mxu0 %v2151
    %2167 = vmatpush.msra.mxu0 %v2150
    %2168 = vmatpush.msra.mxu0 %v2149
    %2169 = vmatpush.msra.mxu0 %v2148
    %2170 = vmatpush.msra.mxu0 %v2147
    %2171 = vmatpush.msra.mxu0 %v2146
    %2172 = vmatpush.msra.mxu0 %v2145
    %2173 = vmatpush.msra.mxu0 %v2144
    %2174 = vmatpush.msra.mxu0 %v2143
    %2175 = vmatmul.f32.gmra.mxu0 %v1815
    %v2176 = vpop.f32.mrf.mxu0
    %v2177 = vadd.f32 0.0, %v2176
    %2178 = vdwg.mxu0
    %s2179 = scalar_lea.vmem %s5, 40
    %v2180 = vld [vmem:[%s2179] sm:$0xff]
    %v2182 = vsel %vm459, %v2180, 0
    %v2185 = vsel %vm463, %v2177, 0
    %2187 = vmatpush.msra.mxu0 0.0
    %2188 = vmatpush.msra.mxu0 0.0
    %2189 = vmatpush.msra.mxu0 0.0
    %2190 = vmatpush.msra.mxu0 0.0
    %2191 = vmatpush.msra.mxu0 0.0
    %2192 = vmatpush.msra.mxu0 0.0
    %2193 = vmatpush.msra.mxu0 0.0
    %2194 = vmatpush.msra.mxu0 0.0
    %2195 = vmatpush.msra.mxu0 0.0
    %2196 = vmatpush.msra.mxu0 0.0
    %2197 = vmatpush.msra.mxu0 0.0
    %2198 = vmatpush.msra.mxu0 0.0
    %2199 = vmatpush.msra.mxu0 0.0
    %2200 = vmatpush.msra.mxu0 0.0
    %2201 = vmatpush.msra.mxu0 0.0
    %2202 = vmatpush.msra.mxu0 %v2185
    %2203 = vmatmul.f32.gmra.mxu0 %v2182
    %v2204 = vpop.f32.mrf.mxu0
    %v2205 = vadd.f32 0.0, %v2204
    %2206 = vdwg.mxu0
    %v2207 = vadd.f32 %v2141, %v2205
    %s2208 = scalar_lea.vmem [#allocation7], 768
    %v2209 = vld [vmem:[%s2208] sm:$0xff]
    %v2210 = vld [vmem:[%s2208 + $0x8] sm:$0xff]
    %v2211 = vld [vmem:[%s2208 + $0x10] sm:$0xff]
    %v2212 = vld [vmem:[%s2208 + $0x18] sm:$0xff]
    %v2213 = vld [vmem:[%s2208 + $0x20] sm:$0xff]
    %v2214 = vld [vmem:[%s2208 + $0x28] sm:$0xff]
    %v2215 = vld [vmem:[%s2208 + $0x30] sm:$0xff]
    %v2216 = vld [vmem:[%s2208 + $0x38] sm:$0xff]
    %v2217 = vld [vmem:[%s2208 + $0x40] sm:$0xff]
    %v2218 = vld [vmem:[%s2208 + $0x48] sm:$0xff]
    %v2219 = vld [vmem:[%s2208 + $0x50] sm:$0xff]
    %v2220 = vld [vmem:[%s2208 + $0x58] sm:$0xff]
    %v2221 = vld [vmem:[%s2208 + $0x60] sm:$0xff]
    %v2222 = vld [vmem:[%s2208 + $0x68] sm:$0xff]
    %v2223 = vld [vmem:[%s2208 + $0x70] sm:$0xff]
    %v2224 = vld [vmem:[%s2208 + $0x78] sm:$0xff]
    %2225 = vmatpush.msra.mxu0 %v2224
    %2226 = vmatpush.msra.mxu0 %v2223
    %2227 = vmatpush.msra.mxu0 %v2222
    %2228 = vmatpush.msra.mxu0 %v2221
    %2229 = vmatpush.msra.mxu0 %v2220
    %2230 = vmatpush.msra.mxu0 %v2219
    %2231 = vmatpush.msra.mxu0 %v2218
    %2232 = vmatpush.msra.mxu0 %v2217
    %2233 = vmatpush.msra.mxu0 %v2216
    %2234 = vmatpush.msra.mxu0 %v2215
    %2235 = vmatpush.msra.mxu0 %v2214
    %2236 = vmatpush.msra.mxu0 %v2213
    %2237 = vmatpush.msra.mxu0 %v2212
    %2238 = vmatpush.msra.mxu0 %v2211
    %2239 = vmatpush.msra.mxu0 %v2210
    %2240 = vmatpush.msra.mxu0 %v2209
    %2241 = vmatmul.f32.gmra.mxu0 %v1815
    %v2242 = vpop.f32.mrf.mxu0
    %v2243 = vadd.f32 0.0, %v2242
    %2244 = vdwg.mxu0
    %s2245 = scalar_lea.vmem %s5, 48
    %v2246 = vld [vmem:[%s2245] sm:$0xff]
    %v2248 = vsel %vm459, %v2246, 0
    %v2251 = vsel %vm463, %v2243, 0
    %2253 = vmatpush.msra.mxu0 0.0
    %2254 = vmatpush.msra.mxu0 0.0
    %2255 = vmatpush.msra.mxu0 0.0
    %2256 = vmatpush.msra.mxu0 0.0
    %2257 = vmatpush.msra.mxu0 0.0
    %2258 = vmatpush.msra.mxu0 0.0
    %2259 = vmatpush.msra.mxu0 0.0
    %2260 = vmatpush.msra.mxu0 0.0
    %2261 = vmatpush.msra.mxu0 0.0
    %2262 = vmatpush.msra.mxu0 0.0
    %2263 = vmatpush.msra.mxu0 0.0
    %2264 = vmatpush.msra.mxu0 0.0
    %2265 = vmatpush.msra.mxu0 0.0
    %2266 = vmatpush.msra.mxu0 0.0
    %2267 = vmatpush.msra.mxu0 0.0
    %2268 = vmatpush.msra.mxu0 %v2251
    %2269 = vmatmul.f32.gmra.mxu0 %v2248
    %v2270 = vpop.f32.mrf.mxu0
    %v2271 = vadd.f32 0.0, %v2270
    %2272 = vdwg.mxu0
    %v2273 = vadd.f32 %v2207, %v2271
    %s2274 = scalar_lea.vmem [#allocation7], 896
    %v2275 = vld [vmem:[%s2274] sm:$0xff]
    %v2276 = vld [vmem:[%s2274 + $0x8] sm:$0xff]
    %v2277 = vld [vmem:[%s2274 + $0x10] sm:$0xff]
    %v2278 = vld [vmem:[%s2274 + $0x18] sm:$0xff]
    %v2279 = vld [vmem:[%s2274 + $0x20] sm:$0xff]
    %v2280 = vld [vmem:[%s2274 + $0x28] sm:$0xff]
    %v2281 = vld [vmem:[%s2274 + $0x30] sm:$0xff]
    %v2282 = vld [vmem:[%s2274 + $0x38] sm:$0xff]
    %v2283 = vld [vmem:[%s2274 + $0x40] sm:$0xff]
    %v2284 = vld [vmem:[%s2274 + $0x48] sm:$0xff]
    %v2285 = vld [vmem:[%s2274 + $0x50] sm:$0xff]
    %v2286 = vld [vmem:[%s2274 + $0x58] sm:$0xff]
    %v2287 = vld [vmem:[%s2274 + $0x60] sm:$0xff]
    %v2288 = vld [vmem:[%s2274 + $0x68] sm:$0xff]
    %v2289 = vld [vmem:[%s2274 + $0x70] sm:$0xff]
    %v2290 = vld [vmem:[%s2274 + $0x78] sm:$0xff]
    %2291 = vmatpush.msra.mxu0 %v2290
    %2292 = vmatpush.msra.mxu0 %v2289
    %2293 = vmatpush.msra.mxu0 %v2288
    %2294 = vmatpush.msra.mxu0 %v2287
    %2295 = vmatpush.msra.mxu0 %v2286
    %2296 = vmatpush.msra.mxu0 %v2285
    %2297 = vmatpush.msra.mxu0 %v2284
    %2298 = vmatpush.msra.mxu0 %v2283
    %2299 = vmatpush.msra.mxu0 %v2282
    %2300 = vmatpush.msra.mxu0 %v2281
    %2301 = vmatpush.msra.mxu0 %v2280
    %2302 = vmatpush.msra.mxu0 %v2279
    %2303 = vmatpush.msra.mxu0 %v2278
    %2304 = vmatpush.msra.mxu0 %v2277
    %2305 = vmatpush.msra.mxu0 %v2276
    %2306 = vmatpush.msra.mxu0 %v2275
    %2307 = vmatmul.f32.gmra.mxu0 %v1815
    %v2308 = vpop.f32.mrf.mxu0
    %v2309 = vadd.f32 0.0, %v2308
    %2310 = vdwg.mxu0
    %s2311 = scalar_lea.vmem %s5, 56
    %v2312 = vld [vmem:[%s2311] sm:$0xff]
    %v2314 = vsel %vm459, %v2312, 0
    %v2317 = vsel %vm463, %v2309, 0
    %2319 = vmatpush.msra.mxu0 0.0
    %2320 = vmatpush.msra.mxu0 0.0
    %2321 = vmatpush.msra.mxu0 0.0
    %2322 = vmatpush.msra.mxu0 0.0
    %2323 = vmatpush.msra.mxu0 0.0
    %2324 = vmatpush.msra.mxu0 0.0
    %2325 = vmatpush.msra.mxu0 0.0
    %2326 = vmatpush.msra.mxu0 0.0
    %2327 = vmatpush.msra.mxu0 0.0
    %2328 = vmatpush.msra.mxu0 0.0
    %2329 = vmatpush.msra.mxu0 0.0
    %2330 = vmatpush.msra.mxu0 0.0
    %2331 = vmatpush.msra.mxu0 0.0
    %2332 = vmatpush.msra.mxu0 0.0
    %2333 = vmatpush.msra.mxu0 0.0
    %2334 = vmatpush.msra.mxu0 %v2317
    %2335 = vmatmul.f32.gmra.mxu0 %v2314
    %v2336 = vpop.f32.mrf.mxu0
    %v2337 = vadd.f32 0.0, %v2336
    %2338 = vdwg.mxu0
    %v2339 = vadd.f32 %v2273, %v2337
    %s2340 = scalar_lea.vmem [#allocation7], 1024
    %v2341 = vld [vmem:[%s2340] sm:$0xff]
    %v2342 = vld [vmem:[%s2340 + $0x8] sm:$0xff]
    %v2343 = vld [vmem:[%s2340 + $0x10] sm:$0xff]
    %v2344 = vld [vmem:[%s2340 + $0x18] sm:$0xff]
    %v2345 = vld [vmem:[%s2340 + $0x20] sm:$0xff]
    %v2346 = vld [vmem:[%s2340 + $0x28] sm:$0xff]
    %v2347 = vld [vmem:[%s2340 + $0x30] sm:$0xff]
    %v2348 = vld [vmem:[%s2340 + $0x38] sm:$0xff]
    %v2349 = vld [vmem:[%s2340 + $0x40] sm:$0xff]
    %v2350 = vld [vmem:[%s2340 + $0x48] sm:$0xff]
    %v2351 = vld [vmem:[%s2340 + $0x50] sm:$0xff]
    %v2352 = vld [vmem:[%s2340 + $0x58] sm:$0xff]
    %v2353 = vld [vmem:[%s2340 + $0x60] sm:$0xff]
    %v2354 = vld [vmem:[%s2340 + $0x68] sm:$0xff]
    %v2355 = vld [vmem:[%s2340 + $0x70] sm:$0xff]
    %v2356 = vld [vmem:[%s2340 + $0x78] sm:$0xff]
    %2357 = vmatpush.msra.mxu0 %v2356
    %2358 = vmatpush.msra.mxu0 %v2355
    %2359 = vmatpush.msra.mxu0 %v2354
    %2360 = vmatpush.msra.mxu0 %v2353
    %2361 = vmatpush.msra.mxu0 %v2352
    %2362 = vmatpush.msra.mxu0 %v2351
    %2363 = vmatpush.msra.mxu0 %v2350
    %2364 = vmatpush.msra.mxu0 %v2349
    %2365 = vmatpush.msra.mxu0 %v2348
    %2366 = vmatpush.msra.mxu0 %v2347
    %2367 = vmatpush.msra.mxu0 %v2346
    %2368 = vmatpush.msra.mxu0 %v2345
    %2369 = vmatpush.msra.mxu0 %v2344
    %2370 = vmatpush.msra.mxu0 %v2343
    %2371 = vmatpush.msra.mxu0 %v2342
    %2372 = vmatpush.msra.mxu0 %v2341
    %2373 = vmatmul.f32.gmra.mxu0 %v1815
    %v2374 = vpop.f32.mrf.mxu0
    %v2375 = vadd.f32 0.0, %v2374
    %2376 = vdwg.mxu0
    %s2377 = scalar_lea.vmem %s5, 64
    %v2378 = vld [vmem:[%s2377] sm:$0xff]
    %v2380 = vsel %vm459, %v2378, 0
    %v2383 = vsel %vm463, %v2375, 0
    %2385 = vmatpush.msra.mxu0 0.0
    %2386 = vmatpush.msra.mxu0 0.0
    %2387 = vmatpush.msra.mxu0 0.0
    %2388 = vmatpush.msra.mxu0 0.0
    %2389 = vmatpush.msra.mxu0 0.0
    %2390 = vmatpush.msra.mxu0 0.0
    %2391 = vmatpush.msra.mxu0 0.0
    %2392 = vmatpush.msra.mxu0 0.0
    %2393 = vmatpush.msra.mxu0 0.0
    %2394 = vmatpush.msra.mxu0 0.0
    %2395 = vmatpush.msra.mxu0 0.0
    %2396 = vmatpush.msra.mxu0 0.0
    %2397 = vmatpush.msra.mxu0 0.0
    %2398 = vmatpush.msra.mxu0 0.0
    %2399 = vmatpush.msra.mxu0 0.0
    %2400 = vmatpush.msra.mxu0 %v2383
    %2401 = vmatmul.f32.gmra.mxu0 %v2380
    %v2402 = vpop.f32.mrf.mxu0
    %v2403 = vadd.f32 0.0, %v2402
    %2404 = vdwg.mxu0
    %v2405 = vadd.f32 %v2339, %v2403
    %v2406 = vld [vmem:[%s6] sm:$0xff]
    %2408 = vset.pattern.permute.xlu0 0
    %2409 = vperm.xlu0 %2408, %v2406
    %v2410 = vpop.permute.xlu0 %2409
    %v2412 = vadd.f32 %v2405, %v2410
    %v2413 = vmax.f32 %v2412, 0.0
    %v2414 = vld [vmem:[%s8] sm:$0xf]
    %vm2415 = vcmask 64512
    %v2417 = vsel %vm2415, %v2414, 0
    %2419 = vmatpush.msra.mxu0 0.0
    %2420 = vmatpush.msra.mxu0 0.0
    %2421 = vmatpush.msra.mxu0 0.0
    %2422 = vmatpush.msra.mxu0 0.0
    %2423 = vmatpush.msra.mxu0 0.0
    %2424 = vmatpush.msra.mxu0 0.0
    %2425 = vmatpush.msra.mxu0 0.0
    %2426 = vmatpush.msra.mxu0 0.0
    %2427 = vmatpush.msra.mxu0 0.0
    %2428 = vmatpush.msra.mxu0 0.0
    %2429 = vmatpush.msra.mxu0 0.0
    %2430 = vmatpush.msra.mxu0 0.0
    %2431 = vmatpush.msra.mxu0 0.0
    %2432 = vmatpush.msra.mxu0 0.0
    %2433 = vmatpush.msra.mxu0 0.0
    %2434 = vmatpush.msra.mxu0 %v2413
    %2435 = vmatmul.f32.gmra.mxu0 %v2417
    %v2436 = vpop.f32.mrf.mxu0
    %v2437 = vadd.f32 0.0, %v2436
    %2438 = vdwg.mxu0
    %v2439 = vld [vmem:[#allocation8] sm:$0xff]
    %v2440 = vld [vmem:[#allocation8 + $0x8] sm:$0xff]
    %v2441 = vld [vmem:[#allocation8 + $0x10] sm:$0xff]
    %v2442 = vld [vmem:[#allocation8 + $0x18] sm:$0xff]
    %s2443 = scalar_lea.vmem %s8, 4
    %v2444 = vld [vmem:[%s2443] sm:$0xf]
    %v2446 = vsel %vm2415, %v2444, 0
    %2448 = vmatpush.msra.mxu0 0.0
    %2449 = vmatpush.msra.mxu0 0.0
    %2450 = vmatpush.msra.mxu0 0.0
    %2451 = vmatpush.msra.mxu0 0.0
    %2452 = vmatpush.msra.mxu0 0.0
    %2453 = vmatpush.msra.mxu0 0.0
    %2454 = vmatpush.msra.mxu0 0.0
    %2455 = vmatpush.msra.mxu0 0.0
    %2456 = vmatpush.msra.mxu0 0.0
    %2457 = vmatpush.msra.mxu0 0.0
    %2458 = vmatpush.msra.mxu0 0.0
    %2459 = vmatpush.msra.mxu0 0.0
    %2460 = vmatpush.msra.mxu0 0.0
    %2461 = vmatpush.msra.mxu0 0.0
    %2462 = vmatpush.msra.mxu0 0.0
    %2463 = vmatpush.msra.mxu0 %v2413
    %2464 = vmatmul.f32.gmra.mxu0 %v2446
    %v2465 = vpop.f32.mrf.mxu0
    %v2466 = vadd.f32 0.0, %v2465
    %2467 = vdwg.mxu0
    %s2468 = scalar_lea.vmem [#allocation8], 32
    %v2469 = vld [vmem:[%s2468] sm:$0xff]
    %v2470 = vld [vmem:[%s2468 + $0x8] sm:$0xff]
    %v2471 = vld [vmem:[%s2468 + $0x10] sm:$0xff]
    %v2472 = vld [vmem:[%s2468 + $0x18] sm:$0xff]
    %vm2473 = vcmask 261120
    %v2475 = vsel %vm2473, %v2466, 0
    %2477 = vmatpush.msra.mxu0 0.0
    %2478 = vmatpush.msra.mxu0 0.0
    %2479 = vmatpush.msra.mxu0 0.0
    %2480 = vmatpush.msra.mxu0 0.0
    %2481 = vmatpush.msra.mxu0 0.0
    %2482 = vmatpush.msra.mxu0 0.0
    %2483 = vmatpush.msra.mxu0 0.0
    %2484 = vmatpush.msra.mxu0 0.0
    %2485 = vmatpush.msra.mxu0 0.0
    %2486 = vmatpush.msra.mxu0 0.0
    %2487 = vmatpush.msra.mxu0 0.0
    %2488 = vmatpush.msra.mxu0 0.0
    %2489 = vmatpush.msra.mxu0 %v2472
    %2490 = vmatpush.msra.mxu0 %v2471
    %2491 = vmatpush.msra.mxu0 %v2470
    %2492 = vmatpush.msra.mxu0 %v2469
    %2493 = vmatmul.f32.gmra.mxu0 %v2475
    %v2494 = vpop.f32.mrf.mxu0
    %v2495 = vadd.f32 0.0, %v2494
    %2496 = vdwg.mxu0
    %v2498 = vsel %vm2473, %v2437, 0
    %2500 = vmatpush.msra.mxu0 0.0
    %2501 = vmatpush.msra.mxu0 0.0
    %2502 = vmatpush.msra.mxu0 0.0
    %2503 = vmatpush.msra.mxu0 0.0
    %2504 = vmatpush.msra.mxu0 0.0
    %2505 = vmatpush.msra.mxu0 0.0
    %2506 = vmatpush.msra.mxu0 0.0
    %2507 = vmatpush.msra.mxu0 0.0
    %2508 = vmatpush.msra.mxu0 0.0
    %2509 = vmatpush.msra.mxu0 0.0
    %2510 = vmatpush.msra.mxu0 0.0
    %2511 = vmatpush.msra.mxu0 0.0
    %2512 = vmatpush.msra.mxu0 %v2442
    %2513 = vmatpush.msra.mxu0 %v2441
    %2514 = vmatpush.msra.mxu0 %v2440
    %2515 = vmatpush.msra.mxu0 %v2439
    %2516 = vmatmul.f32.gmra.mxu0 %v2498
    %v2517 = vpop.f32.mrf.mxu0
    %v2518 = vadd.f32 %v2495, %v2517
    %2519 = vdwg.mxu0
    %s2520 = scalar_lea.vmem %s8, 8
    %v2521 = vld [vmem:[%s2520] sm:$0xf]
    %v2523 = vsel %vm2415, %v2521, 0
    %2525 = vmatpush.msra.mxu0 0.0
    %2526 = vmatpush.msra.mxu0 0.0
    %2527 = vmatpush.msra.mxu0 0.0
    %2528 = vmatpush.msra.mxu0 0.0
    %2529 = vmatpush.msra.mxu0 0.0
    %2530 = vmatpush.msra.mxu0 0.0
    %2531 = vmatpush.msra.mxu0 0.0
    %2532 = vmatpush.msra.mxu0 0.0
    %2533 = vmatpush.msra.mxu0 0.0
    %2534 = vmatpush.msra.mxu0 0.0
    %2535 = vmatpush.msra.mxu0 0.0
    %2536 = vmatpush.msra.mxu0 0.0
    %2537 = vmatpush.msra.mxu0 0.0
    %2538 = vmatpush.msra.mxu0 0.0
    %2539 = vmatpush.msra.mxu0 0.0
    %2540 = vmatpush.msra.mxu0 %v2413
    %2541 = vmatmul.f32.gmra.mxu0 %v2523
    %v2542 = vpop.f32.mrf.mxu0
    %v2543 = vadd.f32 0.0, %v2542
    %2544 = vdwg.mxu0
    %s2545 = scalar_lea.vmem [#allocation8], 64
    %v2546 = vld [vmem:[%s2545] sm:$0xff]
    %v2547 = vld [vmem:[%s2545 + $0x8] sm:$0xff]
    %v2548 = vld [vmem:[%s2545 + $0x10] sm:$0xff]
    %v2549 = vld [vmem:[%s2545 + $0x18] sm:$0xff]
    %v2551 = vsel %vm2473, %v2543, 0
    %2553 = vmatpush.msra.mxu0 0.0
    %2554 = vmatpush.msra.mxu0 0.0
    %2555 = vmatpush.msra.mxu0 0.0
    %2556 = vmatpush.msra.mxu0 0.0
    %2557 = vmatpush.msra.mxu0 0.0
    %2558 = vmatpush.msra.mxu0 0.0
    %2559 = vmatpush.msra.mxu0 0.0
    %2560 = vmatpush.msra.mxu0 0.0
    %2561 = vmatpush.msra.mxu0 0.0
    %2562 = vmatpush.msra.mxu0 0.0
    %2563 = vmatpush.msra.mxu0 0.0
    %2564 = vmatpush.msra.mxu0 0.0
    %2565 = vmatpush.msra.mxu0 %v2549
    %2566 = vmatpush.msra.mxu0 %v2548
    %2567 = vmatpush.msra.mxu0 %v2547
    %2568 = vmatpush.msra.mxu0 %v2546
    %2569 = vmatmul.f32.gmra.mxu0 %v2551
    %v2570 = vpop.f32.mrf.mxu0
    %v2571 = vadd.f32 0.0, %v2570
    %2572 = vdwg.mxu0
    %v2573 = vadd.f32 %v2518, %v2571
    %s2574 = scalar_lea.vmem %s8, 12
    %v2575 = vld [vmem:[%s2574] sm:$0xf]
    %v2577 = vsel %vm2415, %v2575, 0
    %2579 = vmatpush.msra.mxu0 0.0
    %2580 = vmatpush.msra.mxu0 0.0
    %2581 = vmatpush.msra.mxu0 0.0
    %2582 = vmatpush.msra.mxu0 0.0
    %2583 = vmatpush.msra.mxu0 0.0
    %2584 = vmatpush.msra.mxu0 0.0
    %2585 = vmatpush.msra.mxu0 0.0
    %2586 = vmatpush.msra.mxu0 0.0
    %2587 = vmatpush.msra.mxu0 0.0
    %2588 = vmatpush.msra.mxu0 0.0
    %2589 = vmatpush.msra.mxu0 0.0
    %2590 = vmatpush.msra.mxu0 0.0
    %2591 = vmatpush.msra.mxu0 0.0
    %2592 = vmatpush.msra.mxu0 0.0
    %2593 = vmatpush.msra.mxu0 0.0
    %2594 = vmatpush.msra.mxu0 %v2413
    %2595 = vmatmul.f32.gmra.mxu0 %v2577
    %v2596 = vpop.f32.mrf.mxu0
    %v2597 = vadd.f32 0.0, %v2596
    %2598 = vdwg.mxu0
    %s2599 = scalar_lea.vmem [#allocation8], 96
    %v2600 = vld [vmem:[%s2599] sm:$0xff]
    %v2601 = vld [vmem:[%s2599 + $0x8] sm:$0xff]
    %v2602 = vld [vmem:[%s2599 + $0x10] sm:$0xff]
    %v2603 = vld [vmem:[%s2599 + $0x18] sm:$0xff]
    %v2605 = vsel %vm2473, %v2597, 0
    %2607 = vmatpush.msra.mxu0 0.0
    %2608 = vmatpush.msra.mxu0 0.0
    %2609 = vmatpush.msra.mxu0 0.0
    %2610 = vmatpush.msra.mxu0 0.0
    %2611 = vmatpush.msra.mxu0 0.0
    %2612 = vmatpush.msra.mxu0 0.0
    %2613 = vmatpush.msra.mxu0 0.0
    %2614 = vmatpush.msra.mxu0 0.0
    %2615 = vmatpush.msra.mxu0 0.0
    %2616 = vmatpush.msra.mxu0 0.0
    %2617 = vmatpush.msra.mxu0 0.0
    %2618 = vmatpush.msra.mxu0 0.0
    %2619 = vmatpush.msra.mxu0 %v2603
    %2620 = vmatpush.msra.mxu0 %v2602
    %2621 = vmatpush.msra.mxu0 %v2601
    %2622 = vmatpush.msra.mxu0 %v2600
    %2623 = vmatmul.f32.gmra.mxu0 %v2605
    %v2624 = vpop.f32.mrf.mxu0
    %v2625 = vadd.f32 0.0, %v2624
    %2626 = vdwg.mxu0
    %v2627 = vadd.f32 %v2573, %v2625
    %v2628 = vld [vmem:[%s9] sm:$0xf]
    %2630 = vset.pattern.permute.xlu0 0
    %2631 = vperm.xlu0 %2630, %v2628
    %v2632 = vpop.permute.xlu0 %2631
    %v2634 = vadd.f32 %v2627, %v2632
    %v2635 = vmax.f32 %v2634, 0.0
    %v2636 = vld [vmem:[%s11] sm:$0xff]
    %v2637 = vld [vmem:[%s11 + $0x8] sm:$0xff]
    %v2638 = vld [vmem:[%s11 + $0x10] sm:$0xff]
    %v2639 = vld [vmem:[%s11 + $0x18] sm:$0xff]
    %v2640 = vld [vmem:[%s11 + $0x20] sm:$0xff]
    %v2641 = vld [vmem:[%s11 + $0x28] sm:$0xff]
    %v2642 = vld [vmem:[%s11 + $0x30] sm:$0xff]
    %v2643 = vld [vmem:[%s11 + $0x38] sm:$0xff]
    %v2644 = vld [vmem:[%s11 + $0x40] sm:$0xff]
    %v2645 = vld [vmem:[%s11 + $0x48] sm:$0x7]
    %v2647 = vsel %vm459, %v2636, 0
    %v2650 = vsel %vm459, %v2637, 0
    %v2653 = vsel %vm459, %v2638, 0
    %v2656 = vsel %vm459, %v2639, 0
    %v2659 = vsel %vm459, %v2640, 0
    %v2662 = vsel %vm459, %v2641, 0
    %v2665 = vsel %vm459, %v2642, 0
    %v2668 = vsel %vm459, %v2643, 0
    %v2671 = vsel %vm459, %v2644, 0
    %v2674 = vsel %vm459, %v2645, 0
    %v2677 = vsel %vm463, %v2635, 0
    %2679 = vmatpush.msra.mxu0 0.0
    %2680 = vmatpush.msra.mxu0 0.0
    %2681 = vmatpush.msra.mxu0 0.0
    %2682 = vmatpush.msra.mxu0 0.0
    %2683 = vmatpush.msra.mxu0 0.0
    %2684 = vmatpush.msra.mxu0 0.0
    %2685 = vmatpush.msra.mxu0 0.0
    %2686 = vmatpush.msra.mxu0 0.0
    %2687 = vmatpush.msra.mxu0 0.0
    %2688 = vmatpush.msra.mxu0 0.0
    %2689 = vmatpush.msra.mxu0 0.0
    %2690 = vmatpush.msra.mxu0 0.0
    %2691 = vmatpush.msra.mxu0 0.0
    %2692 = vmatpush.msra.mxu0 0.0
    %2693 = vmatpush.msra.mxu0 0.0
    %2694 = vmatpush.msra.mxu0 %v2677
    %2695 = vmatmul.f32.gmra.mxu0 %v2647
    %v2696 = vpop.f32.mrf.mxu0
    %v2697 = vadd.f32 0.0, %v2696
    %2698 = vmatmul.f32.gmra.mxu0 %v2650
    %v2699 = vpop.f32.mrf.mxu0
    %v2700 = vadd.f32 0.0, %v2699
    %2701 = vmatmul.f32.gmra.mxu0 %v2653
    %v2702 = vpop.f32.mrf.mxu0
    %v2703 = vadd.f32 0.0, %v2702
    %2704 = vmatmul.f32.gmra.mxu0 %v2656
    %v2705 = vpop.f32.mrf.mxu0
    %v2706 = vadd.f32 0.0, %v2705
    %2707 = vmatmul.f32.gmra.mxu0 %v2659
    %v2708 = vpop.f32.mrf.mxu0
    %v2709 = vadd.f32 0.0, %v2708
    %2710 = vmatmul.f32.gmra.mxu0 %v2662
    %v2711 = vpop.f32.mrf.mxu0
    %v2712 = vadd.f32 0.0, %v2711
    %2713 = vmatmul.f32.gmra.mxu0 %v2665
    %v2714 = vpop.f32.mrf.mxu0
    %v2715 = vadd.f32 0.0, %v2714
    %2716 = vmatmul.f32.gmra.mxu0 %v2668
    %v2717 = vpop.f32.mrf.mxu0
    %v2718 = vadd.f32 0.0, %v2717
    %2719 = vmatmul.f32.gmra.mxu0 %v2671
    %v2720 = vpop.f32.mrf.mxu0
    %v2721 = vadd.f32 0.0, %v2720
    %2722 = vmatmul.f32.gmra.mxu0 %v2674
    %v2723 = vpop.f32.mrf.mxu0
    %v2724 = vadd.f32 0.0, %v2723
    %2725 = vdwg.mxu0
    %v2726 = vld [vmem:[#allocation10] sm:$0xff]
    %v2727 = vld [vmem:[#allocation10 + $0x8] sm:$0xff]
    %v2728 = vld [vmem:[#allocation10 + $0x10] sm:$0xff]
    %v2729 = vld [vmem:[#allocation10 + $0x18] sm:$0xff]
    %v2730 = vld [vmem:[#allocation10 + $0x20] sm:$0xff]
    %v2731 = vld [vmem:[#allocation10 + $0x28] sm:$0xff]
    %v2732 = vld [vmem:[#allocation10 + $0x30] sm:$0xff]
    %v2733 = vld [vmem:[#allocation10 + $0x38] sm:$0xff]
    %v2734 = vld [vmem:[#allocation10 + $0x40] sm:$0xff]
    %v2735 = vld [vmem:[#allocation10 + $0x48] sm:$0xff]
    %v2736 = vld [vmem:[#allocation10 + $0x50] sm:$0xff]
    %v2737 = vld [vmem:[#allocation10 + $0x58] sm:$0xff]
    %v2738 = vld [vmem:[#allocation10 + $0x60] sm:$0xff]
    %v2739 = vld [vmem:[#allocation10 + $0x68] sm:$0xff]
    %v2740 = vld [vmem:[#allocation10 + $0x70] sm:$0xff]
    %v2741 = vld [vmem:[#allocation10 + $0x78] sm:$0xff]
    %v2742 = vld [vmem:[#allocation10 + $0x80] sm:$0xff]
    %v2743 = vld [vmem:[#allocation10 + $0x88] sm:$0xff]
    %v2744 = vld [vmem:[#allocation10 + $0x90] sm:$0xff]
    %v2745 = vld [vmem:[#allocation10 + $0x98] sm:$0xff]
    %v2746 = vld [vmem:[#allocation10 + $0xa0] sm:$0xff]
    %v2747 = vld [vmem:[#allocation10 + $0xa8] sm:$0xff]
    %v2748 = vld [vmem:[#allocation10 + $0xb0] sm:$0xff]
    %v2749 = vld [vmem:[#allocation10 + $0xb8] sm:$0xff]
    %v2750 = vld [vmem:[#allocation10 + $0xc0] sm:$0xff]
    %v2751 = vld [vmem:[#allocation10 + $0xc8] sm:$0xff]
    %v2752 = vld [vmem:[#allocation10 + $0xd0] sm:$0xff]
    %v2753 = vld [vmem:[#allocation10 + $0xd8] sm:$0xff]
    %v2754 = vld [vmem:[#allocation10 + $0xe0] sm:$0xff]
    %v2755 = vld [vmem:[#allocation10 + $0xe8] sm:$0xff]
    %v2756 = vld [vmem:[#allocation10 + $0xf0] sm:$0xff]
    %v2757 = vld [vmem:[#allocation10 + $0xf8] sm:$0xff]
    %v2758 = vld [vmem:[#allocation10 + $0x100] sm:$0xff]
    %v2759 = vld [vmem:[#allocation10 + $0x108] sm:$0xff]
    %v2760 = vld [vmem:[#allocation10 + $0x110] sm:$0xff]
    %v2761 = vld [vmem:[#allocation10 + $0x118] sm:$0xff]
    %v2762 = vld [vmem:[#allocation10 + $0x120] sm:$0xff]
    %v2763 = vld [vmem:[#allocation10 + $0x128] sm:$0xff]
    %v2764 = vld [vmem:[#allocation10 + $0x130] sm:$0xff]
    %v2765 = vld [vmem:[#allocation10 + $0x138] sm:$0xff]
    %v2766 = vld [vmem:[#allocation10 + $0x140] sm:$0xff]
    %v2767 = vld [vmem:[#allocation10 + $0x148] sm:$0xff]
    %v2768 = vld [vmem:[#allocation10 + $0x150] sm:$0xff]
    %v2769 = vld [vmem:[#allocation10 + $0x158] sm:$0xff]
    %v2770 = vld [vmem:[#allocation10 + $0x160] sm:$0xff]
    %v2771 = vld [vmem:[#allocation10 + $0x168] sm:$0xff]
    %v2772 = vld [vmem:[#allocation10 + $0x170] sm:$0xff]
    %v2773 = vld [vmem:[#allocation10 + $0x178] sm:$0xff]
    %v2774 = vld [vmem:[#allocation10 + $0x180] sm:$0xff]
    %v2775 = vld [vmem:[#allocation10 + $0x188] sm:$0xff]
    %v2776 = vld [vmem:[#allocation10 + $0x190] sm:$0xff]
    %v2777 = vld [vmem:[#allocation10 + $0x198] sm:$0xff]
    %v2778 = vld [vmem:[#allocation10 + $0x1a0] sm:$0xff]
    %v2779 = vld [vmem:[#allocation10 + $0x1a8] sm:$0xff]
    %v2780 = vld [vmem:[#allocation10 + $0x1b0] sm:$0xff]
    %v2781 = vld [vmem:[#allocation10 + $0x1b8] sm:$0xff]
    %v2782 = vld [vmem:[#allocation10 + $0x1c0] sm:$0xff]
    %v2783 = vld [vmem:[#allocation10 + $0x1c8] sm:$0xff]
    %v2784 = vld [vmem:[#allocation10 + $0x1d0] sm:$0xff]
    %v2785 = vld [vmem:[#allocation10 + $0x1d8] sm:$0xff]
    %v2786 = vld [vmem:[#allocation10 + $0x1e0] sm:$0xff]
    %v2787 = vld [vmem:[#allocation10 + $0x1e8] sm:$0xff]
    %v2788 = vld [vmem:[#allocation10 + $0x1f0] sm:$0xff]
    %v2789 = vld [vmem:[#allocation10 + $0x1f8] sm:$0xff]
    %s2790 = scalar_lea.vmem %s11, 80
    %v2791 = vld [vmem:[%s2790] sm:$0xff]
    %v2792 = vld [vmem:[%s2790 + $0x8] sm:$0xff]
    %v2793 = vld [vmem:[%s2790 + $0x10] sm:$0xff]
    %v2794 = vld [vmem:[%s2790 + $0x18] sm:$0xff]
    %v2795 = vld [vmem:[%s2790 + $0x20] sm:$0xff]
    %v2796 = vld [vmem:[%s2790 + $0x28] sm:$0xff]
    %v2797 = vld [vmem:[%s2790 + $0x30] sm:$0xff]
    %v2798 = vld [vmem:[%s2790 + $0x38] sm:$0xff]
    %v2799 = vld [vmem:[%s2790 + $0x40] sm:$0xff]
    %v2800 = vld [vmem:[%s2790 + $0x48] sm:$0x7]
    %v2802 = vsel %vm459, %v2791, 0
    %v2805 = vsel %vm459, %v2792, 0
    %v2808 = vsel %vm459, %v2793, 0
    %v2811 = vsel %vm459, %v2794, 0
    %v2814 = vsel %vm459, %v2795, 0
    %v2817 = vsel %vm459, %v2796, 0
    %v2820 = vsel %vm459, %v2797, 0
    %v2823 = vsel %vm459, %v2798, 0
    %v2826 = vsel %vm459, %v2799, 0
    %v2829 = vsel %vm459, %v2800, 0
    %2831 = vmatpush.msra.mxu0 0.0
    %2832 = vmatpush.msra.mxu0 0.0
    %2833 = vmatpush.msra.mxu0 0.0
    %2834 = vmatpush.msra.mxu0 0.0
    %2835 = vmatpush.msra.mxu0 0.0
    %2836 = vmatpush.msra.mxu0 0.0
    %2837 = vmatpush.msra.mxu0 0.0
    %2838 = vmatpush.msra.mxu0 0.0
    %2839 = vmatpush.msra.mxu0 0.0
    %2840 = vmatpush.msra.mxu0 0.0
    %2841 = vmatpush.msra.mxu0 0.0
    %2842 = vmatpush.msra.mxu0 0.0
    %2843 = vmatpush.msra.mxu0 0.0
    %2844 = vmatpush.msra.mxu0 0.0
    %2845 = vmatpush.msra.mxu0 0.0
    %2846 = vmatpush.msra.mxu0 %v2677
    %2847 = vmatmul.f32.gmra.mxu0 %v2802
    %v2848 = vpop.f32.mrf.mxu0
    %v2849 = vadd.f32 0.0, %v2848
    %2850 = vmatmul.f32.gmra.mxu0 %v2805
    %v2851 = vpop.f32.mrf.mxu0
    %v2852 = vadd.f32 0.0, %v2851
    %2853 = vmatmul.f32.gmra.mxu0 %v2808
    %v2854 = vpop.f32.mrf.mxu0
    %v2855 = vadd.f32 0.0, %v2854
    %2856 = vmatmul.f32.gmra.mxu0 %v2811
    %v2857 = vpop.f32.mrf.mxu0
    %v2858 = vadd.f32 0.0, %v2857
    %2859 = vmatmul.f32.gmra.mxu0 %v2814
    %v2860 = vpop.f32.mrf.mxu0
    %v2861 = vadd.f32 0.0, %v2860
    %2862 = vmatmul.f32.gmra.mxu0 %v2817
    %v2863 = vpop.f32.mrf.mxu0
    %v2864 = vadd.f32 0.0, %v2863
    %2865 = vmatmul.f32.gmra.mxu0 %v2820
    %v2866 = vpop.f32.mrf.mxu0
    %v2867 = vadd.f32 0.0, %v2866
    %2868 = vmatmul.f32.gmra.mxu0 %v2823
    %v2869 = vpop.f32.mrf.mxu0
    %v2870 = vadd.f32 0.0, %v2869
    %2871 = vmatmul.f32.gmra.mxu0 %v2826
    %v2872 = vpop.f32.mrf.mxu0
    %v2873 = vadd.f32 0.0, %v2872
    %2874 = vmatmul.f32.gmra.mxu0 %v2829
    %v2875 = vpop.f32.mrf.mxu0
    %v2876 = vadd.f32 0.0, %v2875
    %2877 = vdwg.mxu0
    %s2878 = scalar_lea.vmem [#allocation10], 512
    %v2879 = vld [vmem:[%s2878] sm:$0xff]
    %v2880 = vld [vmem:[%s2878 + $0x8] sm:$0xff]
    %v2881 = vld [vmem:[%s2878 + $0x10] sm:$0xff]
    %v2882 = vld [vmem:[%s2878 + $0x18] sm:$0xff]
    %v2883 = vld [vmem:[%s2878 + $0x20] sm:$0xff]
    %v2884 = vld [vmem:[%s2878 + $0x28] sm:$0xff]
    %v2885 = vld [vmem:[%s2878 + $0x30] sm:$0xff]
    %v2886 = vld [vmem:[%s2878 + $0x38] sm:$0xff]
    %v2887 = vld [vmem:[%s2878 + $0x40] sm:$0xff]
    %v2888 = vld [vmem:[%s2878 + $0x48] sm:$0xff]
    %v2889 = vld [vmem:[%s2878 + $0x50] sm:$0xff]
    %v2890 = vld [vmem:[%s2878 + $0x58] sm:$0xff]
    %v2891 = vld [vmem:[%s2878 + $0x60] sm:$0xff]
    %v2892 = vld [vmem:[%s2878 + $0x68] sm:$0xff]
    %v2893 = vld [vmem:[%s2878 + $0x70] sm:$0xff]
    %v2894 = vld [vmem:[%s2878 + $0x78] sm:$0xff]
    %v2895 = vld [vmem:[%s2878 + $0x80] sm:$0xff]
    %v2896 = vld [vmem:[%s2878 + $0x88] sm:$0xff]
    %v2897 = vld [vmem:[%s2878 + $0x90] sm:$0xff]
    %v2898 = vld [vmem:[%s2878 + $0x98] sm:$0xff]
    %v2899 = vld [vmem:[%s2878 + $0xa0] sm:$0xff]
    %v2900 = vld [vmem:[%s2878 + $0xa8] sm:$0xff]
    %v2901 = vld [vmem:[%s2878 + $0xb0] sm:$0xff]
    %v2902 = vld [vmem:[%s2878 + $0xb8] sm:$0xff]
    %v2903 = vld [vmem:[%s2878 + $0xc0] sm:$0xff]
    %v2904 = vld [vmem:[%s2878 + $0xc8] sm:$0xff]
    %v2905 = vld [vmem:[%s2878 + $0xd0] sm:$0xff]
    %v2906 = vld [vmem:[%s2878 + $0xd8] sm:$0xff]
    %v2907 = vld [vmem:[%s2878 + $0xe0] sm:$0xff]
    %v2908 = vld [vmem:[%s2878 + $0xe8] sm:$0xff]
    %v2909 = vld [vmem:[%s2878 + $0xf0] sm:$0xff]
    %v2910 = vld [vmem:[%s2878 + $0xf8] sm:$0xff]
    %v2911 = vld [vmem:[%s2878 + $0x100] sm:$0xff]
    %v2912 = vld [vmem:[%s2878 + $0x108] sm:$0xff]
    %v2913 = vld [vmem:[%s2878 + $0x110] sm:$0xff]
    %v2914 = vld [vmem:[%s2878 + $0x118] sm:$0xff]
    %v2915 = vld [vmem:[%s2878 + $0x120] sm:$0xff]
    %v2916 = vld [vmem:[%s2878 + $0x128] sm:$0xff]
    %v2917 = vld [vmem:[%s2878 + $0x130] sm:$0xff]
    %v2918 = vld [vmem:[%s2878 + $0x138] sm:$0xff]
    %v2919 = vld [vmem:[%s2878 + $0x140] sm:$0xff]
    %v2920 = vld [vmem:[%s2878 + $0x148] sm:$0xff]
    %v2921 = vld [vmem:[%s2878 + $0x150] sm:$0xff]
    %v2922 = vld [vmem:[%s2878 + $0x158] sm:$0xff]
    %v2923 = vld [vmem:[%s2878 + $0x160] sm:$0xff]
    %v2924 = vld [vmem:[%s2878 + $0x168] sm:$0xff]
    %v2925 = vld [vmem:[%s2878 + $0x170] sm:$0xff]
    %v2926 = vld [vmem:[%s2878 + $0x178] sm:$0xff]
    %v2927 = vld [vmem:[%s2878 + $0x180] sm:$0xff]
    %v2928 = vld [vmem:[%s2878 + $0x188] sm:$0xff]
    %v2929 = vld [vmem:[%s2878 + $0x190] sm:$0xff]
    %v2930 = vld [vmem:[%s2878 + $0x198] sm:$0xff]
    %v2931 = vld [vmem:[%s2878 + $0x1a0] sm:$0xff]
    %v2932 = vld [vmem:[%s2878 + $0x1a8] sm:$0xff]
    %v2933 = vld [vmem:[%s2878 + $0x1b0] sm:$0xff]
    %v2934 = vld [vmem:[%s2878 + $0x1b8] sm:$0xff]
    %v2935 = vld [vmem:[%s2878 + $0x1c0] sm:$0xff]
    %v2936 = vld [vmem:[%s2878 + $0x1c8] sm:$0xff]
    %v2937 = vld [vmem:[%s2878 + $0x1d0] sm:$0xff]
    %v2938 = vld [vmem:[%s2878 + $0x1d8] sm:$0xff]
    %v2939 = vld [vmem:[%s2878 + $0x1e0] sm:$0xff]
    %v2940 = vld [vmem:[%s2878 + $0x1e8] sm:$0xff]
    %v2941 = vld [vmem:[%s2878 + $0x1f0] sm:$0xff]
    %v2942 = vld [vmem:[%s2878 + $0x1f8] sm:$0xff]
    %2943 = vmatpush.msra.mxu0 %v2939
    %2944 = vmatpush.msra.mxu0 %v2935
    %2945 = vmatpush.msra.mxu0 %v2931
    %2946 = vmatpush.msra.mxu0 %v2927
    %2947 = vmatpush.msra.mxu0 %v2923
    %2948 = vmatpush.msra.mxu0 %v2919
    %2949 = vmatpush.msra.mxu0 %v2915
    %2950 = vmatpush.msra.mxu0 %v2911
    %2951 = vmatpush.msra.mxu0 %v2907
    %2952 = vmatpush.msra.mxu0 %v2903
    %2953 = vmatpush.msra.mxu0 %v2899
    %2954 = vmatpush.msra.mxu0 %v2895
    %2955 = vmatpush.msra.mxu0 %v2891
    %2956 = vmatpush.msra.mxu0 %v2887
    %2957 = vmatpush.msra.mxu0 %v2883
    %2958 = vmatpush.msra.mxu0 %v2879
    %2959 = vmatmul.f32.gmra.mxu0 %v2849
    %v2960 = vpop.f32.mrf.mxu0
    %v2961 = vadd.f32 0.0, %v2960
    %2962 = vmatmul.f32.gmra.mxu0 %v2852
    %v2963 = vpop.f32.mrf.mxu0
    %v2964 = vadd.f32 0.0, %v2963
    %2965 = vmatmul.f32.gmra.mxu0 %v2855
    %v2966 = vpop.f32.mrf.mxu0
    %v2967 = vadd.f32 0.0, %v2966
    %2968 = vmatmul.f32.gmra.mxu0 %v2858
    %v2969 = vpop.f32.mrf.mxu0
    %v2970 = vadd.f32 0.0, %v2969
    %2971 = vmatmul.f32.gmra.mxu0 %v2861
    %v2972 = vpop.f32.mrf.mxu0
    %v2973 = vadd.f32 0.0, %v2972
    %2974 = vmatmul.f32.gmra.mxu0 %v2864
    %v2975 = vpop.f32.mrf.mxu0
    %v2976 = vadd.f32 0.0, %v2975
    %2977 = vmatmul.f32.gmra.mxu0 %v2867
    %v2978 = vpop.f32.mrf.mxu0
    %v2979 = vadd.f32 0.0, %v2978
    %2980 = vmatmul.f32.gmra.mxu0 %v2870
    %v2981 = vpop.f32.mrf.mxu0
    %v2982 = vadd.f32 0.0, %v2981
    %2983 = vmatmul.f32.gmra.mxu0 %v2873
    %v2984 = vpop.f32.mrf.mxu0
    %v2985 = vadd.f32 0.0, %v2984
    %2986 = vmatmul.f32.gmra.mxu0 %v2876
    %v2987 = vpop.f32.mrf.mxu0
    %v2988 = vadd.f32 0.0, %v2987
    %2989 = vdwg.mxu0
    %2990 = vmatpush.msra.mxu0 %v2940
    %2991 = vmatpush.msra.mxu0 %v2936
    %2992 = vmatpush.msra.mxu0 %v2932
    %2993 = vmatpush.msra.mxu0 %v2928
    %2994 = vmatpush.msra.mxu0 %v2924
    %2995 = vmatpush.msra.mxu0 %v2920
    %2996 = vmatpush.msra.mxu0 %v2916
    %2997 = vmatpush.msra.mxu0 %v2912
    %2998 = vmatpush.msra.mxu0 %v2908
    %2999 = vmatpush.msra.mxu0 %v2904
    %3000 = vmatpush.msra.mxu0 %v2900
    %3001 = vmatpush.msra.mxu0 %v2896
    %3002 = vmatpush.msra.mxu0 %v2892
    %3003 = vmatpush.msra.mxu0 %v2888
    %3004 = vmatpush.msra.mxu0 %v2884
    %3005 = vmatpush.msra.mxu0 %v2880
    %3006 = vmatmul.f32.gmra.mxu0 %v2849
    %v3007 = vpop.f32.mrf.mxu0
    %v3008 = vadd.f32 0.0, %v3007
    %3009 = vmatmul.f32.gmra.mxu0 %v2852
    %v3010 = vpop.f32.mrf.mxu0
    %v3011 = vadd.f32 0.0, %v3010
    %3012 = vmatmul.f32.gmra.mxu0 %v2855
    %v3013 = vpop.f32.mrf.mxu0
    %v3014 = vadd.f32 0.0, %v3013
    %3015 = vmatmul.f32.gmra.mxu0 %v2858
    %v3016 = vpop.f32.mrf.mxu0
    %v3017 = vadd.f32 0.0, %v3016
    %3018 = vmatmul.f32.gmra.mxu0 %v2861
    %v3019 = vpop.f32.mrf.mxu0
    %v3020 = vadd.f32 0.0, %v3019
    %3021 = vmatmul.f32.gmra.mxu0 %v2864
    %v3022 = vpop.f32.mrf.mxu0
    %v3023 = vadd.f32 0.0, %v3022
    %3024 = vmatmul.f32.gmra.mxu0 %v2867
    %v3025 = vpop.f32.mrf.mxu0
    %v3026 = vadd.f32 0.0, %v3025
    %3027 = vmatmul.f32.gmra.mxu0 %v2870
    %v3028 = vpop.f32.mrf.mxu0
    %v3029 = vadd.f32 0.0, %v3028
    %3030 = vmatmul.f32.gmra.mxu0 %v2873
    %v3031 = vpop.f32.mrf.mxu0
    %v3032 = vadd.f32 0.0, %v3031
    %3033 = vmatmul.f32.gmra.mxu0 %v2876
    %v3034 = vpop.f32.mrf.mxu0
    %v3035 = vadd.f32 0.0, %v3034
    %3036 = vdwg.mxu0
    %3037 = vmatpush.msra.mxu0 %v2941
    %3038 = vmatpush.msra.mxu0 %v2937
    %3039 = vmatpush.msra.mxu0 %v2933
    %3040 = vmatpush.msra.mxu0 %v2929
    %3041 = vmatpush.msra.mxu0 %v2925
    %3042 = vmatpush.msra.mxu0 %v2921
    %3043 = vmatpush.msra.mxu0 %v2917
    %3044 = vmatpush.msra.mxu0 %v2913
    %3045 = vmatpush.msra.mxu0 %v2909
    %3046 = vmatpush.msra.mxu0 %v2905
    %3047 = vmatpush.msra.mxu0 %v2901
    %3048 = vmatpush.msra.mxu0 %v2897
    %3049 = vmatpush.msra.mxu0 %v2893
    %3050 = vmatpush.msra.mxu0 %v2889
    %3051 = vmatpush.msra.mxu0 %v2885
    %3052 = vmatpush.msra.mxu0 %v2881
    %3053 = vmatmul.f32.gmra.mxu0 %v2849
    %v3054 = vpop.f32.mrf.mxu0
    %v3055 = vadd.f32 0.0, %v3054
    %3056 = vmatmul.f32.gmra.mxu0 %v2852
    %v3057 = vpop.f32.mrf.mxu0
    %v3058 = vadd.f32 0.0, %v3057
    %3059 = vmatmul.f32.gmra.mxu0 %v2855
    %v3060 = vpop.f32.mrf.mxu0
    %v3061 = vadd.f32 0.0, %v3060
    %3062 = vmatmul.f32.gmra.mxu0 %v2858
    %v3063 = vpop.f32.mrf.mxu0
    %v3064 = vadd.f32 0.0, %v3063
    %3065 = vmatmul.f32.gmra.mxu0 %v2861
    %v3066 = vpop.f32.mrf.mxu0
    %v3067 = vadd.f32 0.0, %v3066
    %3068 = vmatmul.f32.gmra.mxu0 %v2864
    %v3069 = vpop.f32.mrf.mxu0
    %v3070 = vadd.f32 0.0, %v3069
    %3071 = vmatmul.f32.gmra.mxu0 %v2867
    %v3072 = vpop.f32.mrf.mxu0
    %v3073 = vadd.f32 0.0, %v3072
    %3074 = vmatmul.f32.gmra.mxu0 %v2870
    %v3075 = vpop.f32.mrf.mxu0
    %v3076 = vadd.f32 0.0, %v3075
    %3077 = vmatmul.f32.gmra.mxu0 %v2873
    %v3078 = vpop.f32.mrf.mxu0
    %v3079 = vadd.f32 0.0, %v3078
    %3080 = vmatmul.f32.gmra.mxu0 %v2876
    %v3081 = vpop.f32.mrf.mxu0
    %v3082 = vadd.f32 0.0, %v3081
    %3083 = vdwg.mxu0
    %3084 = vmatpush.msra.mxu0 %v2942
    %3085 = vmatpush.msra.mxu0 %v2938
    %3086 = vmatpush.msra.mxu0 %v2934
    %3087 = vmatpush.msra.mxu0 %v2930
    %3088 = vmatpush.msra.mxu0 %v2926
    %3089 = vmatpush.msra.mxu0 %v2922
    %3090 = vmatpush.msra.mxu0 %v2918
    %3091 = vmatpush.msra.mxu0 %v2914
    %3092 = vmatpush.msra.mxu0 %v2910
    %3093 = vmatpush.msra.mxu0 %v2906
    %3094 = vmatpush.msra.mxu0 %v2902
    %3095 = vmatpush.msra.mxu0 %v2898
    %3096 = vmatpush.msra.mxu0 %v2894
    %3097 = vmatpush.msra.mxu0 %v2890
    %3098 = vmatpush.msra.mxu0 %v2886
    %3099 = vmatpush.msra.mxu0 %v2882
    %3100 = vmatmul.f32.gmra.mxu0 %v2849
    %v3101 = vpop.f32.mrf.mxu0
    %v3102 = vadd.f32 0.0, %v3101
    %3103 = vmatmul.f32.gmra.mxu0 %v2852
    %v3104 = vpop.f32.mrf.mxu0
    %v3105 = vadd.f32 0.0, %v3104
    %3106 = vmatmul.f32.gmra.mxu0 %v2855
    %v3107 = vpop.f32.mrf.mxu0
    %v3108 = vadd.f32 0.0, %v3107
    %3109 = vmatmul.f32.gmra.mxu0 %v2858
    %v3110 = vpop.f32.mrf.mxu0
    %v3111 = vadd.f32 0.0, %v3110
    %3112 = vmatmul.f32.gmra.mxu0 %v2861
    %v3113 = vpop.f32.mrf.mxu0
    %v3114 = vadd.f32 0.0, %v3113
    %3115 = vmatmul.f32.gmra.mxu0 %v2864
    %v3116 = vpop.f32.mrf.mxu0
    %v3117 = vadd.f32 0.0, %v3116
    %3118 = vmatmul.f32.gmra.mxu0 %v2867
    %v3119 = vpop.f32.mrf.mxu0
    %v3120 = vadd.f32 0.0, %v3119
    %3121 = vmatmul.f32.gmra.mxu0 %v2870
    %v3122 = vpop.f32.mrf.mxu0
    %v3123 = vadd.f32 0.0, %v3122
    %3124 = vmatmul.f32.gmra.mxu0 %v2873
    %v3125 = vpop.f32.mrf.mxu0
    %v3126 = vadd.f32 0.0, %v3125
    %3127 = vmatmul.f32.gmra.mxu0 %v2876
    %v3128 = vpop.f32.mrf.mxu0
    %v3129 = vadd.f32 0.0, %v3128
    %3130 = vdwg.mxu0
    %3131 = vmatpush.msra.mxu0 %v2786
    %3132 = vmatpush.msra.mxu0 %v2782
    %3133 = vmatpush.msra.mxu0 %v2778
    %3134 = vmatpush.msra.mxu0 %v2774
    %3135 = vmatpush.msra.mxu0 %v2770
    %3136 = vmatpush.msra.mxu0 %v2766
    %3137 = vmatpush.msra.mxu0 %v2762
    %3138 = vmatpush.msra.mxu0 %v2758
    %3139 = vmatpush.msra.mxu0 %v2754
    %3140 = vmatpush.msra.mxu0 %v2750
    %3141 = vmatpush.msra.mxu0 %v2746
    %3142 = vmatpush.msra.mxu0 %v2742
    %3143 = vmatpush.msra.mxu0 %v2738
    %3144 = vmatpush.msra.mxu0 %v2734
    %3145 = vmatpush.msra.mxu0 %v2730
    %3146 = vmatpush.msra.mxu0 %v2726
    %3147 = vmatmul.f32.gmra.mxu0 %v2697
    %v3148 = vpop.f32.mrf.mxu0
    %v3149 = vadd.f32 %v2961, %v3148
    %3150 = vmatmul.f32.gmra.mxu0 %v2700
    %v3151 = vpop.f32.mrf.mxu0
    %v3152 = vadd.f32 %v2964, %v3151
    %3153 = vmatmul.f32.gmra.mxu0 %v2703
    %v3154 = vpop.f32.mrf.mxu0
    %v3155 = vadd.f32 %v2967, %v3154
    %3156 = vmatmul.f32.gmra.mxu0 %v2706
    %v3157 = vpop.f32.mrf.mxu0
    %v3158 = vadd.f32 %v2970, %v3157
    %3159 = vmatmul.f32.gmra.mxu0 %v2709
    %v3160 = vpop.f32.mrf.mxu0
    %v3161 = vadd.f32 %v2973, %v3160
    %3162 = vmatmul.f32.gmra.mxu0 %v2712
    %v3163 = vpop.f32.mrf.mxu0
    %v3164 = vadd.f32 %v2976, %v3163
    %3165 = vmatmul.f32.gmra.mxu0 %v2715
    %v3166 = vpop.f32.mrf.mxu0
    %v3167 = vadd.f32 %v2979, %v3166
    %3168 = vmatmul.f32.gmra.mxu0 %v2718
    %v3169 = vpop.f32.mrf.mxu0
    %v3170 = vadd.f32 %v2982, %v3169
    %3171 = vmatmul.f32.gmra.mxu0 %v2721
    %v3172 = vpop.f32.mrf.mxu0
    %v3173 = vadd.f32 %v2985, %v3172
    %3174 = vmatmul.f32.gmra.mxu0 %v2724
    %v3175 = vpop.f32.mrf.mxu0
    %v3176 = vadd.f32 %v2988, %v3175
    %3177 = vdwg.mxu0
    %3178 = vmatpush.msra.mxu0 %v2787
    %3179 = vmatpush.msra.mxu0 %v2783
    %3180 = vmatpush.msra.mxu0 %v2779
    %3181 = vmatpush.msra.mxu0 %v2775
    %3182 = vmatpush.msra.mxu0 %v2771
    %3183 = vmatpush.msra.mxu0 %v2767
    %3184 = vmatpush.msra.mxu0 %v2763
    %3185 = vmatpush.msra.mxu0 %v2759
    %3186 = vmatpush.msra.mxu0 %v2755
    %3187 = vmatpush.msra.mxu0 %v2751
    %3188 = vmatpush.msra.mxu0 %v2747
    %3189 = vmatpush.msra.mxu0 %v2743
    %3190 = vmatpush.msra.mxu0 %v2739
    %3191 = vmatpush.msra.mxu0 %v2735
    %3192 = vmatpush.msra.mxu0 %v2731
    %3193 = vmatpush.msra.mxu0 %v2727
    %3194 = vmatmul.f32.gmra.mxu0 %v2697
    %v3195 = vpop.f32.mrf.mxu0
    %v3196 = vadd.f32 %v3008, %v3195
    %3197 = vmatmul.f32.gmra.mxu0 %v2700
    %v3198 = vpop.f32.mrf.mxu0
    %v3199 = vadd.f32 %v3011, %v3198
    %3200 = vmatmul.f32.gmra.mxu0 %v2703
    %v3201 = vpop.f32.mrf.mxu0
    %v3202 = vadd.f32 %v3014, %v3201
    %3203 = vmatmul.f32.gmra.mxu0 %v2706
    %v3204 = vpop.f32.mrf.mxu0
    %v3205 = vadd.f32 %v3017, %v3204
    %3206 = vmatmul.f32.gmra.mxu0 %v2709
    %v3207 = vpop.f32.mrf.mxu0
    %v3208 = vadd.f32 %v3020, %v3207
    %3209 = vmatmul.f32.gmra.mxu0 %v2712
    %v3210 = vpop.f32.mrf.mxu0
    %v3211 = vadd.f32 %v3023, %v3210
    %3212 = vmatmul.f32.gmra.mxu0 %v2715
    %v3213 = vpop.f32.mrf.mxu0
    %v3214 = vadd.f32 %v3026, %v3213
    %3215 = vmatmul.f32.gmra.mxu0 %v2718
    %v3216 = vpop.f32.mrf.mxu0
    %v3217 = vadd.f32 %v3029, %v3216
    %3218 = vmatmul.f32.gmra.mxu0 %v2721
    %v3219 = vpop.f32.mrf.mxu0
    %v3220 = vadd.f32 %v3032, %v3219
    %3221 = vmatmul.f32.gmra.mxu0 %v2724
    %v3222 = vpop.f32.mrf.mxu0
    %v3223 = vadd.f32 %v3035, %v3222
    %3224 = vdwg.mxu0
    %3225 = vmatpush.msra.mxu0 %v2788
    %3226 = vmatpush.msra.mxu0 %v2784
    %3227 = vmatpush.msra.mxu0 %v2780
    %3228 = vmatpush.msra.mxu0 %v2776
    %3229 = vmatpush.msra.mxu0 %v2772
    %3230 = vmatpush.msra.mxu0 %v2768
    %3231 = vmatpush.msra.mxu0 %v2764
    %3232 = vmatpush.msra.mxu0 %v2760
    %3233 = vmatpush.msra.mxu0 %v2756
    %3234 = vmatpush.msra.mxu0 %v2752
    %3235 = vmatpush.msra.mxu0 %v2748
    %3236 = vmatpush.msra.mxu0 %v2744
    %3237 = vmatpush.msra.mxu0 %v2740
    %3238 = vmatpush.msra.mxu0 %v2736
    %3239 = vmatpush.msra.mxu0 %v2732
    %3240 = vmatpush.msra.mxu0 %v2728
    %3241 = vmatmul.f32.gmra.mxu0 %v2697
    %v3242 = vpop.f32.mrf.mxu0
    %v3243 = vadd.f32 %v3055, %v3242
    %3244 = vmatmul.f32.gmra.mxu0 %v2700
    %v3245 = vpop.f32.mrf.mxu0
    %v3246 = vadd.f32 %v3058, %v3245
    %3247 = vmatmul.f32.gmra.mxu0 %v2703
    %v3248 = vpop.f32.mrf.mxu0
    %v3249 = vadd.f32 %v3061, %v3248
    %3250 = vmatmul.f32.gmra.mxu0 %v2706
    %v3251 = vpop.f32.mrf.mxu0
    %v3252 = vadd.f32 %v3064, %v3251
    %3253 = vmatmul.f32.gmra.mxu0 %v2709
    %v3254 = vpop.f32.mrf.mxu0
    %v3255 = vadd.f32 %v3067, %v3254
    %3256 = vmatmul.f32.gmra.mxu0 %v2712
    %v3257 = vpop.f32.mrf.mxu0
    %v3258 = vadd.f32 %v3070, %v3257
    %3259 = vmatmul.f32.gmra.mxu0 %v2715
    %v3260 = vpop.f32.mrf.mxu0
    %v3261 = vadd.f32 %v3073, %v3260
    %3262 = vmatmul.f32.gmra.mxu0 %v2718
    %v3263 = vpop.f32.mrf.mxu0
    %v3264 = vadd.f32 %v3076, %v3263
    %3265 = vmatmul.f32.gmra.mxu0 %v2721
    %v3266 = vpop.f32.mrf.mxu0
    %v3267 = vadd.f32 %v3079, %v3266
    %3268 = vmatmul.f32.gmra.mxu0 %v2724
    %v3269 = vpop.f32.mrf.mxu0
    %v3270 = vadd.f32 %v3082, %v3269
    %3271 = vdwg.mxu0
    %3272 = vmatpush.msra.mxu0 %v2789
    %3273 = vmatpush.msra.mxu0 %v2785
    %3274 = vmatpush.msra.mxu0 %v2781
    %3275 = vmatpush.msra.mxu0 %v2777
    %3276 = vmatpush.msra.mxu0 %v2773
    %3277 = vmatpush.msra.mxu0 %v2769
    %3278 = vmatpush.msra.mxu0 %v2765
    %3279 = vmatpush.msra.mxu0 %v2761
    %3280 = vmatpush.msra.mxu0 %v2757
    %3281 = vmatpush.msra.mxu0 %v2753
    %3282 = vmatpush.msra.mxu0 %v2749
    %3283 = vmatpush.msra.mxu0 %v2745
    %3284 = vmatpush.msra.mxu0 %v2741
    %3285 = vmatpush.msra.mxu0 %v2737
    %3286 = vmatpush.msra.mxu0 %v2733
    %3287 = vmatpush.msra.mxu0 %v2729
    %3288 = vmatmul.f32.gmra.mxu0 %v2697
    %v3289 = vpop.f32.mrf.mxu0
    %v3290 = vadd.f32 %v3102, %v3289
    %3291 = vmatmul.f32.gmra.mxu0 %v2700
    %v3292 = vpop.f32.mrf.mxu0
    %v3293 = vadd.f32 %v3105, %v3292
    %3294 = vmatmul.f32.gmra.mxu0 %v2703
    %v3295 = vpop.f32.mrf.mxu0
    %v3296 = vadd.f32 %v3108, %v3295
    %3297 = vmatmul.f32.gmra.mxu0 %v2706
    %v3298 = vpop.f32.mrf.mxu0
    %v3299 = vadd.f32 %v3111, %v3298
    %3300 = vmatmul.f32.gmra.mxu0 %v2709
    %v3301 = vpop.f32.mrf.mxu0
    %v3302 = vadd.f32 %v3114, %v3301
    %3303 = vmatmul.f32.gmra.mxu0 %v2712
    %v3304 = vpop.f32.mrf.mxu0
    %v3305 = vadd.f32 %v3117, %v3304
    %3306 = vmatmul.f32.gmra.mxu0 %v2715
    %v3307 = vpop.f32.mrf.mxu0
    %v3308 = vadd.f32 %v3120, %v3307
    %3309 = vmatmul.f32.gmra.mxu0 %v2718
    %v3310 = vpop.f32.mrf.mxu0
    %v3311 = vadd.f32 %v3123, %v3310
    %3312 = vmatmul.f32.gmra.mxu0 %v2721
    %v3313 = vpop.f32.mrf.mxu0
    %v3314 = vadd.f32 %v3126, %v3313
    %3315 = vmatmul.f32.gmra.mxu0 %v2724
    %v3316 = vpop.f32.mrf.mxu0
    %v3317 = vadd.f32 %v3129, %v3316
    %3318 = vdwg.mxu0
    %s3319 = scalar_lea.vmem %s11, 160
    %v3320 = vld [vmem:[%s3319] sm:$0xff]
    %v3321 = vld [vmem:[%s3319 + $0x8] sm:$0xff]
    %v3322 = vld [vmem:[%s3319 + $0x10] sm:$0xff]
    %v3323 = vld [vmem:[%s3319 + $0x18] sm:$0xff]
    %v3324 = vld [vmem:[%s3319 + $0x20] sm:$0xff]
    %v3325 = vld [vmem:[%s3319 + $0x28] sm:$0xff]
    %v3326 = vld [vmem:[%s3319 + $0x30] sm:$0xff]
    %v3327 = vld [vmem:[%s3319 + $0x38] sm:$0xff]
    %v3328 = vld [vmem:[%s3319 + $0x40] sm:$0xff]
    %v3329 = vld [vmem:[%s3319 + $0x48] sm:$0x7]
    %v3331 = vsel %vm459, %v3320, 0
    %v3334 = vsel %vm459, %v3321, 0
    %v3337 = vsel %vm459, %v3322, 0
    %v3340 = vsel %vm459, %v3323, 0
    %v3343 = vsel %vm459, %v3324, 0
    %v3346 = vsel %vm459, %v3325, 0
    %v3349 = vsel %vm459, %v3326, 0
    %v3352 = vsel %vm459, %v3327, 0
    %v3355 = vsel %vm459, %v3328, 0
    %v3358 = vsel %vm459, %v3329, 0
    %3360 = vmatpush.msra.mxu0 0.0
    %3361 = vmatpush.msra.mxu0 0.0
    %3362 = vmatpush.msra.mxu0 0.0
    %3363 = vmatpush.msra.mxu0 0.0
    %3364 = vmatpush.msra.mxu0 0.0
    %3365 = vmatpush.msra.mxu0 0.0
    %3366 = vmatpush.msra.mxu0 0.0
    %3367 = vmatpush.msra.mxu0 0.0
    %3368 = vmatpush.msra.mxu0 0.0
    %3369 = vmatpush.msra.mxu0 0.0
    %3370 = vmatpush.msra.mxu0 0.0
    %3371 = vmatpush.msra.mxu0 0.0
    %3372 = vmatpush.msra.mxu0 0.0
    %3373 = vmatpush.msra.mxu0 0.0
    %3374 = vmatpush.msra.mxu0 0.0
    %3375 = vmatpush.msra.mxu0 %v2677
    %3376 = vmatmul.f32.gmra.mxu0 %v3331
    %v3377 = vpop.f32.mrf.mxu0
    %v3378 = vadd.f32 0.0, %v3377
    %3379 = vmatmul.f32.gmra.mxu0 %v3334
    %v3380 = vpop.f32.mrf.mxu0
    %v3381 = vadd.f32 0.0, %v3380
    %3382 = vmatmul.f32.gmra.mxu0 %v3337
    %v3383 = vpop.f32.mrf.mxu0
    %v3384 = vadd.f32 0.0, %v3383
    %3385 = vmatmul.f32.gmra.mxu0 %v3340
    %v3386 = vpop.f32.mrf.mxu0
    %v3387 = vadd.f32 0.0, %v3386
    %3388 = vmatmul.f32.gmra.mxu0 %v3343
    %v3389 = vpop.f32.mrf.mxu0
    %v3390 = vadd.f32 0.0, %v3389
    %3391 = vmatmul.f32.gmra.mxu0 %v3346
    %v3392 = vpop.f32.mrf.mxu0
    %v3393 = vadd.f32 0.0, %v3392
    %3394 = vmatmul.f32.gmra.mxu0 %v3349
    %v3395 = vpop.f32.mrf.mxu0
    %v3396 = vadd.f32 0.0, %v3395
    %3397 = vmatmul.f32.gmra.mxu0 %v3352
    %v3398 = vpop.f32.mrf.mxu0
    %v3399 = vadd.f32 0.0, %v3398
    %3400 = vmatmul.f32.gmra.mxu0 %v3355
    %v3401 = vpop.f32.mrf.mxu0
    %v3402 = vadd.f32 0.0, %v3401
    %3403 = vmatmul.f32.gmra.mxu0 %v3358
    %v3404 = vpop.f32.mrf.mxu0
    %v3405 = vadd.f32 0.0, %v3404
    %3406 = vdwg.mxu0
    %s3407 = scalar_lea.vmem [#allocation10], 1024
    %v3408 = vld [vmem:[%s3407] sm:$0xff]
    %v3409 = vld [vmem:[%s3407 + $0x8] sm:$0xff]
    %v3410 = vld [vmem:[%s3407 + $0x10] sm:$0xff]
    %v3411 = vld [vmem:[%s3407 + $0x18] sm:$0xff]
    %v3412 = vld [vmem:[%s3407 + $0x20] sm:$0xff]
    %v3413 = vld [vmem:[%s3407 + $0x28] sm:$0xff]
    %v3414 = vld [vmem:[%s3407 + $0x30] sm:$0xff]
    %v3415 = vld [vmem:[%s3407 + $0x38] sm:$0xff]
    %v3416 = vld [vmem:[%s3407 + $0x40] sm:$0xff]
    %v3417 = vld [vmem:[%s3407 + $0x48] sm:$0xff]
    %v3418 = vld [vmem:[%s3407 + $0x50] sm:$0xff]
    %v3419 = vld [vmem:[%s3407 + $0x58] sm:$0xff]
    %v3420 = vld [vmem:[%s3407 + $0x60] sm:$0xff]
    %v3421 = vld [vmem:[%s3407 + $0x68] sm:$0xff]
    %v3422 = vld [vmem:[%s3407 + $0x70] sm:$0xff]
    %v3423 = vld [vmem:[%s3407 + $0x78] sm:$0xff]
    %v3424 = vld [vmem:[%s3407 + $0x80] sm:$0xff]
    %v3425 = vld [vmem:[%s3407 + $0x88] sm:$0xff]
    %v3426 = vld [vmem:[%s3407 + $0x90] sm:$0xff]
    %v3427 = vld [vmem:[%s3407 + $0x98] sm:$0xff]
    %v3428 = vld [vmem:[%s3407 + $0xa0] sm:$0xff]
    %v3429 = vld [vmem:[%s3407 + $0xa8] sm:$0xff]
    %v3430 = vld [vmem:[%s3407 + $0xb0] sm:$0xff]
    %v3431 = vld [vmem:[%s3407 + $0xb8] sm:$0xff]
    %v3432 = vld [vmem:[%s3407 + $0xc0] sm:$0xff]
    %v3433 = vld [vmem:[%s3407 + $0xc8] sm:$0xff]
    %v3434 = vld [vmem:[%s3407 + $0xd0] sm:$0xff]
    %v3435 = vld [vmem:[%s3407 + $0xd8] sm:$0xff]
    %v3436 = vld [vmem:[%s3407 + $0xe0] sm:$0xff]
    %v3437 = vld [vmem:[%s3407 + $0xe8] sm:$0xff]
    %v3438 = vld [vmem:[%s3407 + $0xf0] sm:$0xff]
    %v3439 = vld [vmem:[%s3407 + $0xf8] sm:$0xff]
    %v3440 = vld [vmem:[%s3407 + $0x100] sm:$0xff]
    %v3441 = vld [vmem:[%s3407 + $0x108] sm:$0xff]
    %v3442 = vld [vmem:[%s3407 + $0x110] sm:$0xff]
    %v3443 = vld [vmem:[%s3407 + $0x118] sm:$0xff]
    %v3444 = vld [vmem:[%s3407 + $0x120] sm:$0xff]
    %v3445 = vld [vmem:[%s3407 + $0x128] sm:$0xff]
    %v3446 = vld [vmem:[%s3407 + $0x130] sm:$0xff]
    %v3447 = vld [vmem:[%s3407 + $0x138] sm:$0xff]
    %v3448 = vld [vmem:[%s3407 + $0x140] sm:$0xff]
    %v3449 = vld [vmem:[%s3407 + $0x148] sm:$0xff]
    %v3450 = vld [vmem:[%s3407 + $0x150] sm:$0xff]
    %v3451 = vld [vmem:[%s3407 + $0x158] sm:$0xff]
    %v3452 = vld [vmem:[%s3407 + $0x160] sm:$0xff]
    %v3453 = vld [vmem:[%s3407 + $0x168] sm:$0xff]
    %v3454 = vld [vmem:[%s3407 + $0x170] sm:$0xff]
    %v3455 = vld [vmem:[%s3407 + $0x178] sm:$0xff]
    %v3456 = vld [vmem:[%s3407 + $0x180] sm:$0xff]
    %v3457 = vld [vmem:[%s3407 + $0x188] sm:$0xff]
    %v3458 = vld [vmem:[%s3407 + $0x190] sm:$0xff]
    %v3459 = vld [vmem:[%s3407 + $0x198] sm:$0xff]
    %v3460 = vld [vmem:[%s3407 + $0x1a0] sm:$0xff]
    %v3461 = vld [vmem:[%s3407 + $0x1a8] sm:$0xff]
    %v3462 = vld [vmem:[%s3407 + $0x1b0] sm:$0xff]
    %v3463 = vld [vmem:[%s3407 + $0x1b8] sm:$0xff]
    %v3464 = vld [vmem:[%s3407 + $0x1c0] sm:$0xff]
    %v3465 = vld [vmem:[%s3407 + $0x1c8] sm:$0xff]
    %v3466 = vld [vmem:[%s3407 + $0x1d0] sm:$0xff]
    %v3467 = vld [vmem:[%s3407 + $0x1d8] sm:$0xff]
    %v3468 = vld [vmem:[%s3407 + $0x1e0] sm:$0xff]
    %v3469 = vld [vmem:[%s3407 + $0x1e8] sm:$0xff]
    %v3470 = vld [vmem:[%s3407 + $0x1f0] sm:$0xff]
    %v3471 = vld [vmem:[%s3407 + $0x1f8] sm:$0xff]
    %3472 = vmatpush.msra.mxu0 %v3468
    %3473 = vmatpush.msra.mxu0 %v3464
    %3474 = vmatpush.msra.mxu0 %v3460
    %3475 = vmatpush.msra.mxu0 %v3456
    %3476 = vmatpush.msra.mxu0 %v3452
    %3477 = vmatpush.msra.mxu0 %v3448
    %3478 = vmatpush.msra.mxu0 %v3444
    %3479 = vmatpush.msra.mxu0 %v3440
    %3480 = vmatpush.msra.mxu0 %v3436
    %3481 = vmatpush.msra.mxu0 %v3432
    %3482 = vmatpush.msra.mxu0 %v3428
    %3483 = vmatpush.msra.mxu0 %v3424
    %3484 = vmatpush.msra.mxu0 %v3420
    %3485 = vmatpush.msra.mxu0 %v3416
    %3486 = vmatpush.msra.mxu0 %v3412
    %3487 = vmatpush.msra.mxu0 %v3408
    %3488 = vmatmul.f32.gmra.mxu0 %v3378
    %v3489 = vpop.f32.mrf.mxu0
    %v3490 = vadd.f32 0.0, %v3489
    %3491 = vmatmul.f32.gmra.mxu0 %v3381
    %v3492 = vpop.f32.mrf.mxu0
    %v3493 = vadd.f32 0.0, %v3492
    %3494 = vmatmul.f32.gmra.mxu0 %v3384
    %v3495 = vpop.f32.mrf.mxu0
    %v3496 = vadd.f32 0.0, %v3495
    %3497 = vmatmul.f32.gmra.mxu0 %v3387
    %v3498 = vpop.f32.mrf.mxu0
    %v3499 = vadd.f32 0.0, %v3498
    %3500 = vmatmul.f32.gmra.mxu0 %v3390
    %v3501 = vpop.f32.mrf.mxu0
    %v3502 = vadd.f32 0.0, %v3501
    %3503 = vmatmul.f32.gmra.mxu0 %v3393
    %v3504 = vpop.f32.mrf.mxu0
    %v3505 = vadd.f32 0.0, %v3504
    %3506 = vmatmul.f32.gmra.mxu0 %v3396
    %v3507 = vpop.f32.mrf.mxu0
    %v3508 = vadd.f32 0.0, %v3507
    %3509 = vmatmul.f32.gmra.mxu0 %v3399
    %v3510 = vpop.f32.mrf.mxu0
    %v3511 = vadd.f32 0.0, %v3510
    %3512 = vmatmul.f32.gmra.mxu0 %v3402
    %v3513 = vpop.f32.mrf.mxu0
    %v3514 = vadd.f32 0.0, %v3513
    %3515 = vmatmul.f32.gmra.mxu0 %v3405
    %v3516 = vpop.f32.mrf.mxu0
    %v3517 = vadd.f32 0.0, %v3516
    %3518 = vdwg.mxu0
    %3519 = vmatpush.msra.mxu0 %v3469
    %3520 = vmatpush.msra.mxu0 %v3465
    %3521 = vmatpush.msra.mxu0 %v3461
    %3522 = vmatpush.msra.mxu0 %v3457
    %3523 = vmatpush.msra.mxu0 %v3453
    %3524 = vmatpush.msra.mxu0 %v3449
    %3525 = vmatpush.msra.mxu0 %v3445
    %3526 = vmatpush.msra.mxu0 %v3441
    %3527 = vmatpush.msra.mxu0 %v3437
    %3528 = vmatpush.msra.mxu0 %v3433
    %3529 = vmatpush.msra.mxu0 %v3429
    %3530 = vmatpush.msra.mxu0 %v3425
    %3531 = vmatpush.msra.mxu0 %v3421
    %3532 = vmatpush.msra.mxu0 %v3417
    %3533 = vmatpush.msra.mxu0 %v3413
    %3534 = vmatpush.msra.mxu0 %v3409
    %3535 = vmatmul.f32.gmra.mxu0 %v3378
    %v3536 = vpop.f32.mrf.mxu0
    %v3537 = vadd.f32 0.0, %v3536
    %3538 = vmatmul.f32.gmra.mxu0 %v3381
    %v3539 = vpop.f32.mrf.mxu0
    %v3540 = vadd.f32 0.0, %v3539
    %3541 = vmatmul.f32.gmra.mxu0 %v3384
    %v3542 = vpop.f32.mrf.mxu0
    %v3543 = vadd.f32 0.0, %v3542
    %3544 = vmatmul.f32.gmra.mxu0 %v3387
    %v3545 = vpop.f32.mrf.mxu0
    %v3546 = vadd.f32 0.0, %v3545
    %3547 = vmatmul.f32.gmra.mxu0 %v3390
    %v3548 = vpop.f32.mrf.mxu0
    %v3549 = vadd.f32 0.0, %v3548
    %3550 = vmatmul.f32.gmra.mxu0 %v3393
    %v3551 = vpop.f32.mrf.mxu0
    %v3552 = vadd.f32 0.0, %v3551
    %3553 = vmatmul.f32.gmra.mxu0 %v3396
    %v3554 = vpop.f32.mrf.mxu0
    %v3555 = vadd.f32 0.0, %v3554
    %3556 = vmatmul.f32.gmra.mxu0 %v3399
    %v3557 = vpop.f32.mrf.mxu0
    %v3558 = vadd.f32 0.0, %v3557
    %3559 = vmatmul.f32.gmra.mxu0 %v3402
    %v3560 = vpop.f32.mrf.mxu0
    %v3561 = vadd.f32 0.0, %v3560
    %3562 = vmatmul.f32.gmra.mxu0 %v3405
    %v3563 = vpop.f32.mrf.mxu0
    %v3564 = vadd.f32 0.0, %v3563
    %3565 = vdwg.mxu0
    %3566 = vmatpush.msra.mxu0 %v3470
    %3567 = vmatpush.msra.mxu0 %v3466
    %3568 = vmatpush.msra.mxu0 %v3462
    %3569 = vmatpush.msra.mxu0 %v3458
    %3570 = vmatpush.msra.mxu0 %v3454
    %3571 = vmatpush.msra.mxu0 %v3450
    %3572 = vmatpush.msra.mxu0 %v3446
    %3573 = vmatpush.msra.mxu0 %v3442
    %3574 = vmatpush.msra.mxu0 %v3438
    %3575 = vmatpush.msra.mxu0 %v3434
    %3576 = vmatpush.msra.mxu0 %v3430
    %3577 = vmatpush.msra.mxu0 %v3426
    %3578 = vmatpush.msra.mxu0 %v3422
    %3579 = vmatpush.msra.mxu0 %v3418
    %3580 = vmatpush.msra.mxu0 %v3414
    %3581 = vmatpush.msra.mxu0 %v3410
    %3582 = vmatmul.f32.gmra.mxu0 %v3378
    %v3583 = vpop.f32.mrf.mxu0
    %v3584 = vadd.f32 0.0, %v3583
    %3585 = vmatmul.f32.gmra.mxu0 %v3381
    %v3586 = vpop.f32.mrf.mxu0
    %v3587 = vadd.f32 0.0, %v3586
    %3588 = vmatmul.f32.gmra.mxu0 %v3384
    %v3589 = vpop.f32.mrf.mxu0
    %v3590 = vadd.f32 0.0, %v3589
    %3591 = vmatmul.f32.gmra.mxu0 %v3387
    %v3592 = vpop.f32.mrf.mxu0
    %v3593 = vadd.f32 0.0, %v3592
    %3594 = vmatmul.f32.gmra.mxu0 %v3390
    %v3595 = vpop.f32.mrf.mxu0
    %v3596 = vadd.f32 0.0, %v3595
    %3597 = vmatmul.f32.gmra.mxu0 %v3393
    %v3598 = vpop.f32.mrf.mxu0
    %v3599 = vadd.f32 0.0, %v3598
    %3600 = vmatmul.f32.gmra.mxu0 %v3396
    %v3601 = vpop.f32.mrf.mxu0
    %v3602 = vadd.f32 0.0, %v3601
    %3603 = vmatmul.f32.gmra.mxu0 %v3399
    %v3604 = vpop.f32.mrf.mxu0
    %v3605 = vadd.f32 0.0, %v3604
    %3606 = vmatmul.f32.gmra.mxu0 %v3402
    %v3607 = vpop.f32.mrf.mxu0
    %v3608 = vadd.f32 0.0, %v3607
    %3609 = vmatmul.f32.gmra.mxu0 %v3405
    %v3610 = vpop.f32.mrf.mxu0
    %v3611 = vadd.f32 0.0, %v3610
    %3612 = vdwg.mxu0
    %3613 = vmatpush.msra.mxu0 %v3471
    %3614 = vmatpush.msra.mxu0 %v3467
    %3615 = vmatpush.msra.mxu0 %v3463
    %3616 = vmatpush.msra.mxu0 %v3459
    %3617 = vmatpush.msra.mxu0 %v3455
    %3618 = vmatpush.msra.mxu0 %v3451
    %3619 = vmatpush.msra.mxu0 %v3447
    %3620 = vmatpush.msra.mxu0 %v3443
    %3621 = vmatpush.msra.mxu0 %v3439
    %3622 = vmatpush.msra.mxu0 %v3435
    %3623 = vmatpush.msra.mxu0 %v3431
    %3624 = vmatpush.msra.mxu0 %v3427
    %3625 = vmatpush.msra.mxu0 %v3423
    %3626 = vmatpush.msra.mxu0 %v3419
    %3627 = vmatpush.msra.mxu0 %v3415
    %3628 = vmatpush.msra.mxu0 %v3411
    %3629 = vmatmul.f32.gmra.mxu0 %v3378
    %v3630 = vpop.f32.mrf.mxu0
    %v3631 = vadd.f32 0.0, %v3630
    %3632 = vmatmul.f32.gmra.mxu0 %v3381
    %v3633 = vpop.f32.mrf.mxu0
    %v3634 = vadd.f32 0.0, %v3633
    %3635 = vmatmul.f32.gmra.mxu0 %v3384
    %v3636 = vpop.f32.mrf.mxu0
    %v3637 = vadd.f32 0.0, %v3636
    %3638 = vmatmul.f32.gmra.mxu0 %v3387
    %v3639 = vpop.f32.mrf.mxu0
    %v3640 = vadd.f32 0.0, %v3639
    %3641 = vmatmul.f32.gmra.mxu0 %v3390
    %v3642 = vpop.f32.mrf.mxu0
    %v3643 = vadd.f32 0.0, %v3642
    %3644 = vmatmul.f32.gmra.mxu0 %v3393
    %v3645 = vpop.f32.mrf.mxu0
    %v3646 = vadd.f32 0.0, %v3645
    %3647 = vmatmul.f32.gmra.mxu0 %v3396
    %v3648 = vpop.f32.mrf.mxu0
    %v3649 = vadd.f32 0.0, %v3648
    %3650 = vmatmul.f32.gmra.mxu0 %v3399
    %v3651 = vpop.f32.mrf.mxu0
    %v3652 = vadd.f32 0.0, %v3651
    %3653 = vmatmul.f32.gmra.mxu0 %v3402
    %v3654 = vpop.f32.mrf.mxu0
    %v3655 = vadd.f32 0.0, %v3654
    %3656 = vmatmul.f32.gmra.mxu0 %v3405
    %v3657 = vpop.f32.mrf.mxu0
    %v3658 = vadd.f32 0.0, %v3657
    %3659 = vdwg.mxu0
    %v3660 = vadd.f32 %v3149, %v3490
    %v3661 = vadd.f32 %v3196, %v3537
    %v3662 = vadd.f32 %v3243, %v3584
    %v3663 = vadd.f32 %v3290, %v3631
    %v3664 = vadd.f32 %v3152, %v3493
    %v3665 = vadd.f32 %v3199, %v3540
    %v3666 = vadd.f32 %v3246, %v3587
    %v3667 = vadd.f32 %v3293, %v3634
    %v3668 = vadd.f32 %v3155, %v3496
    %v3669 = vadd.f32 %v3202, %v3543
    %v3670 = vadd.f32 %v3249, %v3590
    %v3671 = vadd.f32 %v3296, %v3637
    %v3672 = vadd.f32 %v3158, %v3499
    %v3673 = vadd.f32 %v3205, %v3546
    %v3674 = vadd.f32 %v3252, %v3593
    %v3675 = vadd.f32 %v3299, %v3640
    %v3676 = vadd.f32 %v3161, %v3502
    %v3677 = vadd.f32 %v3208, %v3549
    %v3678 = vadd.f32 %v3255, %v3596
    %v3679 = vadd.f32 %v3302, %v3643
    %v3680 = vadd.f32 %v3164, %v3505
    %v3681 = vadd.f32 %v3211, %v3552
    %v3682 = vadd.f32 %v3258, %v3599
    %v3683 = vadd.f32 %v3305, %v3646
    %v3684 = vadd.f32 %v3167, %v3508
    %v3685 = vadd.f32 %v3214, %v3555
    %v3686 = vadd.f32 %v3261, %v3602
    %v3687 = vadd.f32 %v3308, %v3649
    %v3688 = vadd.f32 %v3170, %v3511
    %v3689 = vadd.f32 %v3217, %v3558
    %v3690 = vadd.f32 %v3264, %v3605
    %v3691 = vadd.f32 %v3311, %v3652
    %v3692 = vadd.f32 %v3173, %v3514
    %v3693 = vadd.f32 %v3220, %v3561
    %v3694 = vadd.f32 %v3267, %v3608
    %v3695 = vadd.f32 %v3314, %v3655
    %v3696 = vadd.f32 %v3176, %v3517
    %v3697 = vadd.f32 %v3223, %v3564
    %v3698 = vadd.f32 %v3270, %v3611
    %v3699 = vadd.f32 %v3317, %v3658
    %s3700 = scalar_lea.vmem %s11, 240
    %v3701 = vld [vmem:[%s3700] sm:$0xff]
    %v3702 = vld [vmem:[%s3700 + $0x8] sm:$0xff]
    %v3703 = vld [vmem:[%s3700 + $0x10] sm:$0xff]
    %v3704 = vld [vmem:[%s3700 + $0x18] sm:$0xff]
    %v3705 = vld [vmem:[%s3700 + $0x20] sm:$0xff]
    %v3706 = vld [vmem:[%s3700 + $0x28] sm:$0xff]
    %v3707 = vld [vmem:[%s3700 + $0x30] sm:$0xff]
    %v3708 = vld [vmem:[%s3700 + $0x38] sm:$0xff]
    %v3709 = vld [vmem:[%s3700 + $0x40] sm:$0xff]
    %v3710 = vld [vmem:[%s3700 + $0x48] sm:$0x7]
    %v3712 = vsel %vm459, %v3701, 0
    %v3715 = vsel %vm459, %v3702, 0
    %v3718 = vsel %vm459, %v3703, 0
    %v3721 = vsel %vm459, %v3704, 0
    %v3724 = vsel %vm459, %v3705, 0
    %v3727 = vsel %vm459, %v3706, 0
    %v3730 = vsel %vm459, %v3707, 0
    %v3733 = vsel %vm459, %v3708, 0
    %v3736 = vsel %vm459, %v3709, 0
    %v3739 = vsel %vm459, %v3710, 0
    %3741 = vmatpush.msra.mxu0 0.0
    %3742 = vmatpush.msra.mxu0 0.0
    %3743 = vmatpush.msra.mxu0 0.0
    %3744 = vmatpush.msra.mxu0 0.0
    %3745 = vmatpush.msra.mxu0 0.0
    %3746 = vmatpush.msra.mxu0 0.0
    %3747 = vmatpush.msra.mxu0 0.0
    %3748 = vmatpush.msra.mxu0 0.0
    %3749 = vmatpush.msra.mxu0 0.0
    %3750 = vmatpush.msra.mxu0 0.0
    %3751 = vmatpush.msra.mxu0 0.0
    %3752 = vmatpush.msra.mxu0 0.0
    %3753 = vmatpush.msra.mxu0 0.0
    %3754 = vmatpush.msra.mxu0 0.0
    %3755 = vmatpush.msra.mxu0 0.0
    %3756 = vmatpush.msra.mxu0 %v2677
    %3757 = vmatmul.f32.gmra.mxu0 %v3712
    %v3758 = vpop.f32.mrf.mxu0
    %v3759 = vadd.f32 0.0, %v3758
    %3760 = vmatmul.f32.gmra.mxu0 %v3715
    %v3761 = vpop.f32.mrf.mxu0
    %v3762 = vadd.f32 0.0, %v3761
    %3763 = vmatmul.f32.gmra.mxu0 %v3718
    %v3764 = vpop.f32.mrf.mxu0
    %v3765 = vadd.f32 0.0, %v3764
    %3766 = vmatmul.f32.gmra.mxu0 %v3721
    %v3767 = vpop.f32.mrf.mxu0
    %v3768 = vadd.f32 0.0, %v3767
    %3769 = vmatmul.f32.gmra.mxu0 %v3724
    %v3770 = vpop.f32.mrf.mxu0
    %v3771 = vadd.f32 0.0, %v3770
    %3772 = vmatmul.f32.gmra.mxu0 %v3727
    %v3773 = vpop.f32.mrf.mxu0
    %v3774 = vadd.f32 0.0, %v3773
    %3775 = vmatmul.f32.gmra.mxu0 %v3730
    %v3776 = vpop.f32.mrf.mxu0
    %v3777 = vadd.f32 0.0, %v3776
    %3778 = vmatmul.f32.gmra.mxu0 %v3733
    %v3779 = vpop.f32.mrf.mxu0
    %v3780 = vadd.f32 0.0, %v3779
    %3781 = vmatmul.f32.gmra.mxu0 %v3736
    %v3782 = vpop.f32.mrf.mxu0
    %v3783 = vadd.f32 0.0, %v3782
    %3784 = vmatmul.f32.gmra.mxu0 %v3739
    %v3785 = vpop.f32.mrf.mxu0
    %v3786 = vadd.f32 0.0, %v3785
    %3787 = vdwg.mxu0
    %s3788 = scalar_lea.vmem [#allocation10], 1536
    %v3789 = vld [vmem:[%s3788] sm:$0xff]
    %v3790 = vld [vmem:[%s3788 + $0x8] sm:$0xff]
    %v3791 = vld [vmem:[%s3788 + $0x10] sm:$0xff]
    %v3792 = vld [vmem:[%s3788 + $0x18] sm:$0xff]
    %v3793 = vld [vmem:[%s3788 + $0x20] sm:$0xff]
    %v3794 = vld [vmem:[%s3788 + $0x28] sm:$0xff]
    %v3795 = vld [vmem:[%s3788 + $0x30] sm:$0xff]
    %v3796 = vld [vmem:[%s3788 + $0x38] sm:$0xff]
    %v3797 = vld [vmem:[%s3788 + $0x40] sm:$0xff]
    %v3798 = vld [vmem:[%s3788 + $0x48] sm:$0xff]
    %v3799 = vld [vmem:[%s3788 + $0x50] sm:$0xff]
    %v3800 = vld [vmem:[%s3788 + $0x58] sm:$0xff]
    %v3801 = vld [vmem:[%s3788 + $0x60] sm:$0xff]
    %v3802 = vld [vmem:[%s3788 + $0x68] sm:$0xff]
    %v3803 = vld [vmem:[%s3788 + $0x70] sm:$0xff]
    %v3804 = vld [vmem:[%s3788 + $0x78] sm:$0xff]
    %v3805 = vld [vmem:[%s3788 + $0x80] sm:$0xff]
    %v3806 = vld [vmem:[%s3788 + $0x88] sm:$0xff]
    %v3807 = vld [vmem:[%s3788 + $0x90] sm:$0xff]
    %v3808 = vld [vmem:[%s3788 + $0x98] sm:$0xff]
    %v3809 = vld [vmem:[%s3788 + $0xa0] sm:$0xff]
    %v3810 = vld [vmem:[%s3788 + $0xa8] sm:$0xff]
    %v3811 = vld [vmem:[%s3788 + $0xb0] sm:$0xff]
    %v3812 = vld [vmem:[%s3788 + $0xb8] sm:$0xff]
    %v3813 = vld [vmem:[%s3788 + $0xc0] sm:$0xff]
    %v3814 = vld [vmem:[%s3788 + $0xc8] sm:$0xff]
    %v3815 = vld [vmem:[%s3788 + $0xd0] sm:$0xff]
    %v3816 = vld [vmem:[%s3788 + $0xd8] sm:$0xff]
    %v3817 = vld [vmem:[%s3788 + $0xe0] sm:$0xff]
    %v3818 = vld [vmem:[%s3788 + $0xe8] sm:$0xff]
    %v3819 = vld [vmem:[%s3788 + $0xf0] sm:$0xff]
    %v3820 = vld [vmem:[%s3788 + $0xf8] sm:$0xff]
    %v3821 = vld [vmem:[%s3788 + $0x100] sm:$0xff]
    %v3822 = vld [vmem:[%s3788 + $0x108] sm:$0xff]
    %v3823 = vld [vmem:[%s3788 + $0x110] sm:$0xff]
    %v3824 = vld [vmem:[%s3788 + $0x118] sm:$0xff]
    %v3825 = vld [vmem:[%s3788 + $0x120] sm:$0xff]
    %v3826 = vld [vmem:[%s3788 + $0x128] sm:$0xff]
    %v3827 = vld [vmem:[%s3788 + $0x130] sm:$0xff]
    %v3828 = vld [vmem:[%s3788 + $0x138] sm:$0xff]
    %v3829 = vld [vmem:[%s3788 + $0x140] sm:$0xff]
    %v3830 = vld [vmem:[%s3788 + $0x148] sm:$0xff]
    %v3831 = vld [vmem:[%s3788 + $0x150] sm:$0xff]
    %v3832 = vld [vmem:[%s3788 + $0x158] sm:$0xff]
    %v3833 = vld [vmem:[%s3788 + $0x160] sm:$0xff]
    %v3834 = vld [vmem:[%s3788 + $0x168] sm:$0xff]
    %v3835 = vld [vmem:[%s3788 + $0x170] sm:$0xff]
    %v3836 = vld [vmem:[%s3788 + $0x178] sm:$0xff]
    %v3837 = vld [vmem:[%s3788 + $0x180] sm:$0xff]
    %v3838 = vld [vmem:[%s3788 + $0x188] sm:$0xff]
    %v3839 = vld [vmem:[%s3788 + $0x190] sm:$0xff]
    %v3840 = vld [vmem:[%s3788 + $0x198] sm:$0xff]
    %v3841 = vld [vmem:[%s3788 + $0x1a0] sm:$0xff]
    %v3842 = vld [vmem:[%s3788 + $0x1a8] sm:$0xff]
    %v3843 = vld [vmem:[%s3788 + $0x1b0] sm:$0xff]
    %v3844 = vld [vmem:[%s3788 + $0x1b8] sm:$0xff]
    %v3845 = vld [vmem:[%s3788 + $0x1c0] sm:$0xff]
    %v3846 = vld [vmem:[%s3788 + $0x1c8] sm:$0xff]
    %v3847 = vld [vmem:[%s3788 + $0x1d0] sm:$0xff]
    %v3848 = vld [vmem:[%s3788 + $0x1d8] sm:$0xff]
    %v3849 = vld [vmem:[%s3788 + $0x1e0] sm:$0xff]
    %v3850 = vld [vmem:[%s3788 + $0x1e8] sm:$0xff]
    %v3851 = vld [vmem:[%s3788 + $0x1f0] sm:$0xff]
    %v3852 = vld [vmem:[%s3788 + $0x1f8] sm:$0xff]
    %3853 = vmatpush.msra.mxu0 %v3849
    %3854 = vmatpush.msra.mxu0 %v3845
    %3855 = vmatpush.msra.mxu0 %v3841
    %3856 = vmatpush.msra.mxu0 %v3837
    %3857 = vmatpush.msra.mxu0 %v3833
    %3858 = vmatpush.msra.mxu0 %v3829
    %3859 = vmatpush.msra.mxu0 %v3825
    %3860 = vmatpush.msra.mxu0 %v3821
    %3861 = vmatpush.msra.mxu0 %v3817
    %3862 = vmatpush.msra.mxu0 %v3813
    %3863 = vmatpush.msra.mxu0 %v3809
    %3864 = vmatpush.msra.mxu0 %v3805
    %3865 = vmatpush.msra.mxu0 %v3801
    %3866 = vmatpush.msra.mxu0 %v3797
    %3867 = vmatpush.msra.mxu0 %v3793
    %3868 = vmatpush.msra.mxu0 %v3789
    %3869 = vmatmul.f32.gmra.mxu0 %v3759
    %v3870 = vpop.f32.mrf.mxu0
    %v3871 = vadd.f32 0.0, %v3870
    %3872 = vmatmul.f32.gmra.mxu0 %v3762
    %v3873 = vpop.f32.mrf.mxu0
    %v3874 = vadd.f32 0.0, %v3873
    %3875 = vmatmul.f32.gmra.mxu0 %v3765
    %v3876 = vpop.f32.mrf.mxu0
    %v3877 = vadd.f32 0.0, %v3876
    %3878 = vmatmul.f32.gmra.mxu0 %v3768
    %v3879 = vpop.f32.mrf.mxu0
    %v3880 = vadd.f32 0.0, %v3879
    %3881 = vmatmul.f32.gmra.mxu0 %v3771
    %v3882 = vpop.f32.mrf.mxu0
    %v3883 = vadd.f32 0.0, %v3882
    %3884 = vmatmul.f32.gmra.mxu0 %v3774
    %v3885 = vpop.f32.mrf.mxu0
    %v3886 = vadd.f32 0.0, %v3885
    %3887 = vmatmul.f32.gmra.mxu0 %v3777
    %v3888 = vpop.f32.mrf.mxu0
    %v3889 = vadd.f32 0.0, %v3888
    %3890 = vmatmul.f32.gmra.mxu0 %v3780
    %v3891 = vpop.f32.mrf.mxu0
    %v3892 = vadd.f32 0.0, %v3891
    %3893 = vmatmul.f32.gmra.mxu0 %v3783
    %v3894 = vpop.f32.mrf.mxu0
    %v3895 = vadd.f32 0.0, %v3894
    %3896 = vmatmul.f32.gmra.mxu0 %v3786
    %v3897 = vpop.f32.mrf.mxu0
    %v3898 = vadd.f32 0.0, %v3897
    %3899 = vdwg.mxu0
    %3900 = vmatpush.msra.mxu0 %v3850
    %3901 = vmatpush.msra.mxu0 %v3846
    %3902 = vmatpush.msra.mxu0 %v3842
    %3903 = vmatpush.msra.mxu0 %v3838
    %3904 = vmatpush.msra.mxu0 %v3834
    %3905 = vmatpush.msra.mxu0 %v3830
    %3906 = vmatpush.msra.mxu0 %v3826
    %3907 = vmatpush.msra.mxu0 %v3822
    %3908 = vmatpush.msra.mxu0 %v3818
    %3909 = vmatpush.msra.mxu0 %v3814
    %3910 = vmatpush.msra.mxu0 %v3810
    %3911 = vmatpush.msra.mxu0 %v3806
    %3912 = vmatpush.msra.mxu0 %v3802
    %3913 = vmatpush.msra.mxu0 %v3798
    %3914 = vmatpush.msra.mxu0 %v3794
    %3915 = vmatpush.msra.mxu0 %v3790
    %3916 = vmatmul.f32.gmra.mxu0 %v3759
    %v3917 = vpop.f32.mrf.mxu0
    %v3918 = vadd.f32 0.0, %v3917
    %3919 = vmatmul.f32.gmra.mxu0 %v3762
    %v3920 = vpop.f32.mrf.mxu0
    %v3921 = vadd.f32 0.0, %v3920
    %3922 = vmatmul.f32.gmra.mxu0 %v3765
    %v3923 = vpop.f32.mrf.mxu0
    %v3924 = vadd.f32 0.0, %v3923
    %3925 = vmatmul.f32.gmra.mxu0 %v3768
    %v3926 = vpop.f32.mrf.mxu0
    %v3927 = vadd.f32 0.0, %v3926
    %3928 = vmatmul.f32.gmra.mxu0 %v3771
    %v3929 = vpop.f32.mrf.mxu0
    %v3930 = vadd.f32 0.0, %v3929
    %3931 = vmatmul.f32.gmra.mxu0 %v3774
    %v3932 = vpop.f32.mrf.mxu0
    %v3933 = vadd.f32 0.0, %v3932
    %3934 = vmatmul.f32.gmra.mxu0 %v3777
    %v3935 = vpop.f32.mrf.mxu0
    %v3936 = vadd.f32 0.0, %v3935
    %3937 = vmatmul.f32.gmra.mxu0 %v3780
    %v3938 = vpop.f32.mrf.mxu0
    %v3939 = vadd.f32 0.0, %v3938
    %3940 = vmatmul.f32.gmra.mxu0 %v3783
    %v3941 = vpop.f32.mrf.mxu0
    %v3942 = vadd.f32 0.0, %v3941
    %3943 = vmatmul.f32.gmra.mxu0 %v3786
    %v3944 = vpop.f32.mrf.mxu0
    %v3945 = vadd.f32 0.0, %v3944
    %3946 = vdwg.mxu0
    %3947 = vmatpush.msra.mxu0 %v3851
    %3948 = vmatpush.msra.mxu0 %v3847
    %3949 = vmatpush.msra.mxu0 %v3843
    %3950 = vmatpush.msra.mxu0 %v3839
    %3951 = vmatpush.msra.mxu0 %v3835
    %3952 = vmatpush.msra.mxu0 %v3831
    %3953 = vmatpush.msra.mxu0 %v3827
    %3954 = vmatpush.msra.mxu0 %v3823
    %3955 = vmatpush.msra.mxu0 %v3819
    %3956 = vmatpush.msra.mxu0 %v3815
    %3957 = vmatpush.msra.mxu0 %v3811
    %3958 = vmatpush.msra.mxu0 %v3807
    %3959 = vmatpush.msra.mxu0 %v3803
    %3960 = vmatpush.msra.mxu0 %v3799
    %3961 = vmatpush.msra.mxu0 %v3795
    %3962 = vmatpush.msra.mxu0 %v3791
    %3963 = vmatmul.f32.gmra.mxu0 %v3759
    %v3964 = vpop.f32.mrf.mxu0
    %v3965 = vadd.f32 0.0, %v3964
    %3966 = vmatmul.f32.gmra.mxu0 %v3762
    %v3967 = vpop.f32.mrf.mxu0
    %v3968 = vadd.f32 0.0, %v3967
    %3969 = vmatmul.f32.gmra.mxu0 %v3765
    %v3970 = vpop.f32.mrf.mxu0
    %v3971 = vadd.f32 0.0, %v3970
    %3972 = vmatmul.f32.gmra.mxu0 %v3768
    %v3973 = vpop.f32.mrf.mxu0
    %v3974 = vadd.f32 0.0, %v3973
    %3975 = vmatmul.f32.gmra.mxu0 %v3771
    %v3976 = vpop.f32.mrf.mxu0
    %v3977 = vadd.f32 0.0, %v3976
    %3978 = vmatmul.f32.gmra.mxu0 %v3774
    %v3979 = vpop.f32.mrf.mxu0
    %v3980 = vadd.f32 0.0, %v3979
    %3981 = vmatmul.f32.gmra.mxu0 %v3777
    %v3982 = vpop.f32.mrf.mxu0
    %v3983 = vadd.f32 0.0, %v3982
    %3984 = vmatmul.f32.gmra.mxu0 %v3780
    %v3985 = vpop.f32.mrf.mxu0
    %v3986 = vadd.f32 0.0, %v3985
    %3987 = vmatmul.f32.gmra.mxu0 %v3783
    %v3988 = vpop.f32.mrf.mxu0
    %v3989 = vadd.f32 0.0, %v3988
    %3990 = vmatmul.f32.gmra.mxu0 %v3786
    %v3991 = vpop.f32.mrf.mxu0
    %v3992 = vadd.f32 0.0, %v3991
    %3993 = vdwg.mxu0
    %3994 = vmatpush.msra.mxu0 %v3852
    %3995 = vmatpush.msra.mxu0 %v3848
    %3996 = vmatpush.msra.mxu0 %v3844
    %3997 = vmatpush.msra.mxu0 %v3840
    %3998 = vmatpush.msra.mxu0 %v3836
    %3999 = vmatpush.msra.mxu0 %v3832
    %4000 = vmatpush.msra.mxu0 %v3828
    %4001 = vmatpush.msra.mxu0 %v3824
    %4002 = vmatpush.msra.mxu0 %v3820
    %4003 = vmatpush.msra.mxu0 %v3816
    %4004 = vmatpush.msra.mxu0 %v3812
    %4005 = vmatpush.msra.mxu0 %v3808
    %4006 = vmatpush.msra.mxu0 %v3804
    %4007 = vmatpush.msra.mxu0 %v3800
    %4008 = vmatpush.msra.mxu0 %v3796
    %4009 = vmatpush.msra.mxu0 %v3792
    %4010 = vmatmul.f32.gmra.mxu0 %v3759
    %v4011 = vpop.f32.mrf.mxu0
    %v4012 = vadd.f32 0.0, %v4011
    %4013 = vmatmul.f32.gmra.mxu0 %v3762
    %v4014 = vpop.f32.mrf.mxu0
    %v4015 = vadd.f32 0.0, %v4014
    %4016 = vmatmul.f32.gmra.mxu0 %v3765
    %v4017 = vpop.f32.mrf.mxu0
    %v4018 = vadd.f32 0.0, %v4017
    %4019 = vmatmul.f32.gmra.mxu0 %v3768
    %v4020 = vpop.f32.mrf.mxu0
    %v4021 = vadd.f32 0.0, %v4020
    %4022 = vmatmul.f32.gmra.mxu0 %v3771
    %v4023 = vpop.f32.mrf.mxu0
    %v4024 = vadd.f32 0.0, %v4023
    %4025 = vmatmul.f32.gmra.mxu0 %v3774
    %v4026 = vpop.f32.mrf.mxu0
    %v4027 = vadd.f32 0.0, %v4026
    %4028 = vmatmul.f32.gmra.mxu0 %v3777
    %v4029 = vpop.f32.mrf.mxu0
    %v4030 = vadd.f32 0.0, %v4029
    %4031 = vmatmul.f32.gmra.mxu0 %v3780
    %v4032 = vpop.f32.mrf.mxu0
    %v4033 = vadd.f32 0.0, %v4032
    %4034 = vmatmul.f32.gmra.mxu0 %v3783
    %v4035 = vpop.f32.mrf.mxu0
    %v4036 = vadd.f32 0.0, %v4035
    %4037 = vmatmul.f32.gmra.mxu0 %v3786
    %v4038 = vpop.f32.mrf.mxu0
    %v4039 = vadd.f32 0.0, %v4038
    %4040 = vdwg.mxu0
    %v4041 = vadd.f32 %v3660, %v3871
    %v4042 = vadd.f32 %v3661, %v3918
    %v4043 = vadd.f32 %v3662, %v3965
    %v4044 = vadd.f32 %v3663, %v4012
    %v4045 = vadd.f32 %v3664, %v3874
    %v4046 = vadd.f32 %v3665, %v3921
    %v4047 = vadd.f32 %v3666, %v3968
    %v4048 = vadd.f32 %v3667, %v4015
    %v4049 = vadd.f32 %v3668, %v3877
    %v4050 = vadd.f32 %v3669, %v3924
    %v4051 = vadd.f32 %v3670, %v3971
    %v4052 = vadd.f32 %v3671, %v4018
    %v4053 = vadd.f32 %v3672, %v3880
    %v4054 = vadd.f32 %v3673, %v3927
    %v4055 = vadd.f32 %v3674, %v3974
    %v4056 = vadd.f32 %v3675, %v4021
    %v4057 = vadd.f32 %v3676, %v3883
    %v4058 = vadd.f32 %v3677, %v3930
    %v4059 = vadd.f32 %v3678, %v3977
    %v4060 = vadd.f32 %v3679, %v4024
    %v4061 = vadd.f32 %v3680, %v3886
    %v4062 = vadd.f32 %v3681, %v3933
    %v4063 = vadd.f32 %v3682, %v3980
    %v4064 = vadd.f32 %v3683, %v4027
    %v4065 = vadd.f32 %v3684, %v3889
    %v4066 = vadd.f32 %v3685, %v3936
    %v4067 = vadd.f32 %v3686, %v3983
    %v4068 = vadd.f32 %v3687, %v4030
    %v4069 = vadd.f32 %v3688, %v3892
    %v4070 = vadd.f32 %v3689, %v3939
    %v4071 = vadd.f32 %v3690, %v3986
    %v4072 = vadd.f32 %v3691, %v4033
    %v4073 = vadd.f32 %v3692, %v3895
    %v4074 = vadd.f32 %v3693, %v3942
    %v4075 = vadd.f32 %v3694, %v3989
    %v4076 = vadd.f32 %v3695, %v4036
    %v4077 = vadd.f32 %v3696, %v3898
    %v4078 = vadd.f32 %v3697, %v3945
    %v4079 = vadd.f32 %v3698, %v3992
    %v4080 = vadd.f32 %v3699, %v4039
    %v4081 = vld [vmem:[%s12] sm:$0xff]
    %v4082 = vld [vmem:[%s12 + $0x8] sm:$0xff]
    %v4083 = vld [vmem:[%s12 + $0x10] sm:$0xff]
    %v4084 = vld [vmem:[%s12 + $0x18] sm:$0xff]
    %v4085 = vld [vmem:[%s12 + $0x20] sm:$0xff]
    %v4086 = vld [vmem:[%s12 + $0x28] sm:$0xff]
    %v4087 = vld [vmem:[%s12 + $0x30] sm:$0xff]
    %v4088 = vld [vmem:[%s12 + $0x38] sm:$0xff]
    %v4089 = vld [vmem:[%s12 + $0x40] sm:$0xff]
    %v4090 = vld [vmem:[%s12 + $0x48] sm:$0x7]
    %4092 = vset.pattern.permute.xlu0 0
    %4093 = vperm.xlu0 %4092, %v4081
    %v4094 = vpop.permute.xlu0 %4093
    %4097 = vset.pattern.permute.xlu0 0
    %4098 = vperm.xlu0 %4097, %v4082
    %v4099 = vpop.permute.xlu0 %4098
    %4102 = vset.pattern.permute.xlu0 0
    %4103 = vperm.xlu0 %4102, %v4083
    %v4104 = vpop.permute.xlu0 %4103
    %4107 = vset.pattern.permute.xlu0 0
    %4108 = vperm.xlu0 %4107, %v4084
    %v4109 = vpop.permute.xlu0 %4108
    %4112 = vset.pattern.permute.xlu0 0
    %4113 = vperm.xlu0 %4112, %v4085
    %v4114 = vpop.permute.xlu0 %4113
    %4117 = vset.pattern.permute.xlu0 0
    %4118 = vperm.xlu0 %4117, %v4086
    %v4119 = vpop.permute.xlu0 %4118
    %4122 = vset.pattern.permute.xlu0 0
    %4123 = vperm.xlu0 %4122, %v4087
    %v4124 = vpop.permute.xlu0 %4123
    %4127 = vset.pattern.permute.xlu0 0
    %4128 = vperm.xlu0 %4127, %v4088
    %v4129 = vpop.permute.xlu0 %4128
    %4132 = vset.pattern.permute.xlu0 0
    %4133 = vperm.xlu0 %4132, %v4089
    %v4134 = vpop.permute.xlu0 %4133
    %4137 = vset.pattern.permute.xlu0 0
    %4138 = vperm.xlu0 %4137, %v4090
    %v4139 = vpop.permute.xlu0 %4138
    %v4141 = vadd.f32 %v4041, %v4094
    %v4142 = vadd.f32 %v4042, %v4094
    %v4143 = vadd.f32 %v4043, %v4094
    %v4144 = vadd.f32 %v4044, %v4094
    %v4145 = vadd.f32 %v4045, %v4099
    %v4146 = vadd.f32 %v4046, %v4099
    %v4147 = vadd.f32 %v4047, %v4099
    %v4148 = vadd.f32 %v4048, %v4099
    %v4149 = vadd.f32 %v4049, %v4104
    %v4150 = vadd.f32 %v4050, %v4104
    %v4151 = vadd.f32 %v4051, %v4104
    %v4152 = vadd.f32 %v4052, %v4104
    %v4153 = vadd.f32 %v4053, %v4109
    %v4154 = vadd.f32 %v4054, %v4109
    %v4155 = vadd.f32 %v4055, %v4109
    %v4156 = vadd.f32 %v4056, %v4109
    %v4157 = vadd.f32 %v4057, %v4114
    %v4158 = vadd.f32 %v4058, %v4114
    %v4159 = vadd.f32 %v4059, %v4114
    %v4160 = vadd.f32 %v4060, %v4114
    %v4161 = vadd.f32 %v4061, %v4119
    %v4162 = vadd.f32 %v4062, %v4119
    %v4163 = vadd.f32 %v4063, %v4119
    %v4164 = vadd.f32 %v4064, %v4119
    %v4165 = vadd.f32 %v4065, %v4124
    %v4166 = vadd.f32 %v4066, %v4124
    %v4167 = vadd.f32 %v4067, %v4124
    %v4168 = vadd.f32 %v4068, %v4124
    %v4169 = vadd.f32 %v4069, %v4129
    %v4170 = vadd.f32 %v4070, %v4129
    %v4171 = vadd.f32 %v4071, %v4129
    %v4172 = vadd.f32 %v4072, %v4129
    %v4173 = vadd.f32 %v4073, %v4134
    %v4174 = vadd.f32 %v4074, %v4134
    %v4175 = vadd.f32 %v4075, %v4134
    %v4176 = vadd.f32 %v4076, %v4134
    %v4177 = vadd.f32 %v4077, %v4139
    %v4178 = vadd.f32 %v4078, %v4139
    %v4179 = vadd.f32 %v4079, %v4139
    %v4180 = vadd.f32 %v4080, %v4139
    %v4181 = vmax.f32 %v4141, 0.0
    %v4182 = vmax.f32 %v4142, 0.0
    %v4183 = vmax.f32 %v4143, 0.0
    %v4184 = vmax.f32 %v4144, 0.0
    %v4185 = vmax.f32 %v4145, 0.0
    %v4186 = vmax.f32 %v4146, 0.0
    %v4187 = vmax.f32 %v4147, 0.0
    %v4188 = vmax.f32 %v4148, 0.0
    %v4189 = vmax.f32 %v4149, 0.0
    %v4190 = vmax.f32 %v4150, 0.0
    %v4191 = vmax.f32 %v4151, 0.0
    %v4192 = vmax.f32 %v4152, 0.0
    %v4193 = vmax.f32 %v4153, 0.0
    %v4194 = vmax.f32 %v4154, 0.0
    %v4195 = vmax.f32 %v4155, 0.0
    %v4196 = vmax.f32 %v4156, 0.0
    %v4197 = vmax.f32 %v4157, 0.0
    %v4198 = vmax.f32 %v4158, 0.0
    %v4199 = vmax.f32 %v4159, 0.0
    %v4200 = vmax.f32 %v4160, 0.0
    %v4201 = vmax.f32 %v4161, 0.0
    %v4202 = vmax.f32 %v4162, 0.0
    %v4203 = vmax.f32 %v4163, 0.0
    %v4204 = vmax.f32 %v4164, 0.0
    %v4205 = vmax.f32 %v4165, 0.0
    %v4206 = vmax.f32 %v4166, 0.0
    %v4207 = vmax.f32 %v4167, 0.0
    %v4208 = vmax.f32 %v4168, 0.0
    %v4209 = vmax.f32 %v4169, 0.0
    %v4210 = vmax.f32 %v4170, 0.0
    %v4211 = vmax.f32 %v4171, 0.0
    %v4212 = vmax.f32 %v4172, 0.0
    %v4213 = vmax.f32 %v4173, 0.0
    %v4214 = vmax.f32 %v4174, 0.0
    %v4215 = vmax.f32 %v4175, 0.0
    %v4216 = vmax.f32 %v4176, 0.0
    %v4217 = vmax.f32 %v4177, 0.0
    %v4218 = vmax.f32 %v4178, 0.0
    %v4219 = vmax.f32 %v4179, 0.0
    %v4220 = vmax.f32 %v4180, 0.0
    %4221 = vst [vmem:[%s14] sm:$0xff] %v4181
    %4222 = vst [vmem:[%s14 + $0x8] sm:$0xff] %v4182
    %4223 = vst [vmem:[%s14 + $0x10] sm:$0xff] %v4185
    %4224 = vst [vmem:[%s14 + $0x18] sm:$0xff] %v4186
    %4225 = vst [vmem:[%s14 + $0x20] sm:$0xff] %v4189
    %4226 = vst [vmem:[%s14 + $0x28] sm:$0xff] %v4190
    %4227 = vst [vmem:[%s14 + $0x30] sm:$0xff] %v4193
    %4228 = vst [vmem:[%s14 + $0x38] sm:$0xff] %v4194
    %4229 = vst [vmem:[%s14 + $0x40] sm:$0xff] %v4197
    %4230 = vst [vmem:[%s14 + $0x48] sm:$0xff] %v4198
    %4231 = vst [vmem:[%s14 + $0x50] sm:$0xff] %v4201
    %4232 = vst [vmem:[%s14 + $0x58] sm:$0xff] %v4202
    %4233 = vst [vmem:[%s14 + $0x60] sm:$0xff] %v4205
    %4234 = vst [vmem:[%s14 + $0x68] sm:$0xff] %v4206
    %4235 = vst [vmem:[%s14 + $0x70] sm:$0xff] %v4209
    %4236 = vst [vmem:[%s14 + $0x78] sm:$0xff] %v4210
    %4237 = vst [vmem:[%s14 + $0x80] sm:$0xff] %v4213
    %4238 = vst [vmem:[%s14 + $0x88] sm:$0xff] %v4214
    %4239 = vst [vmem:[%s14 + $0x90] sm:$0x7] %v4217
    %4240 = vst [vmem:[%s14 + $0x98] sm:$0x7] %v4218
    %s4241 = scalar_lea.vmem %s14, 160
    %4242 = vst [vmem:[%s4241] sm:$0xff] %v4183
    %4243 = vst [vmem:[%s4241 + $0x8] sm:$0xff] %v4184
    %4244 = vst [vmem:[%s4241 + $0x10] sm:$0xff] %v4187
    %4245 = vst [vmem:[%s4241 + $0x18] sm:$0xff] %v4188
    %4246 = vst [vmem:[%s4241 + $0x20] sm:$0xff] %v4191
    %4247 = vst [vmem:[%s4241 + $0x28] sm:$0xff] %v4192
    %4248 = vst [vmem:[%s4241 + $0x30] sm:$0xff] %v4195
    %4249 = vst [vmem:[%s4241 + $0x38] sm:$0xff] %v4196
    %4250 = vst [vmem:[%s4241 + $0x40] sm:$0xff] %v4199
    %4251 = vst [vmem:[%s4241 + $0x48] sm:$0xff] %v4200
    %4252 = vst [vmem:[%s4241 + $0x50] sm:$0xff] %v4203
    %4253 = vst [vmem:[%s4241 + $0x58] sm:$0xff] %v4204
    %4254 = vst [vmem:[%s4241 + $0x60] sm:$0xff] %v4207
    %4255 = vst [vmem:[%s4241 + $0x68] sm:$0xff] %v4208
    %4256 = vst [vmem:[%s4241 + $0x70] sm:$0xff] %v4211
    %4257 = vst [vmem:[%s4241 + $0x78] sm:$0xff] %v4212
    %4258 = vst [vmem:[%s4241 + $0x80] sm:$0xff] %v4215
    %4259 = vst [vmem:[%s4241 + $0x88] sm:$0xff] %v4216
    %4260 = vst [vmem:[%s4241 + $0x90] sm:$0x7] %v4219
    %4261 = vst [vmem:[%s4241 + $0x98] sm:$0x7] %v4220
    // Predicated region
    $region78: #{simple_forward.1} parent=1 // pred_check
      _
    $region79: #{simple_forward.1} parent=1 // pred_check_branch
      %4263 = sbr.rel (0) target = $region81
    $region80: #{simple_forward.1} parent=1 // pred_region
      _
    $region81: #{simple_forward.1} parent=1 // pred_fallthru
      _
    // Predicated region
    $region82: #{simple_forward.1} parent=1 // pred_check
      _
    $region83: #{simple_forward.1} parent=1 // pred_check_branch
      %4265 = sbr.rel (0) target = $region85
    $region84: #{simple_forward.1} parent=1 // pred_region
      _
    $region85: #{simple_forward.1} parent=1 // pred_fallthru
      _
    %4266 = vsyncpa [#allocation4], 1
    %4267 = vsyncpa [#allocation6], 1
    %4268 = vsyncpa [#allocation9], 1

</llo_original>
